<compile_context>
chip_gen: v7x
topology: tpu7x:2x2x1
jax: 0.10.0
libtpu: 0.0.40
codegen_flags: <defaults>
</compile_context>

<pallas_src>
import jax
import jax.numpy as jnp
from jax.experimental import pallas as pl
from jax.experimental.pallas import tpu as pltpu

EMB, EMB_PAD = 300, 384      # embedding dim, padded to a multiple of 128 (lanes)
HID, HID_PAD = 100, 128      # LSTM hidden size, padded gate slot width
NCLS, NCLS_PAD = 3, 128      # classes, padded for a lane-dense output store
B_PAD = 8                    # full sublane count for (B, ...) intermediates


def _full_spec(shape):
    nd = len(shape)
    return pl.BlockSpec(shape, lambda i, _nd=nd: (0,) * _nd)


# --------------------------------------------------------------- fused kernel
def fused_lstm_head_kernel(gates_in_ref, whh_ref,
                           w1_ref, b1_ref, w2_ref, b2_ref, w3_ref, b3_ref,
                           out_ref):
    # gates_in_ref: (T, B_PAD, 4*HID_PAD) f32  -- x @ W_ih + b, precomputed for all t
    # whh_ref:      (HID_PAD, 4*HID_PAD) bf16  -- recurrent weights, gate order (i,f,o,g)
    # w1/w2/w3:     bf16 head weights, biases f32 (all zero-padded to lane multiples)
    # out_ref:      (B_PAD, NCLS_PAD) f32 padded logits (lane-dense, unmasked store)
    T, Bp, _ = gates_in_ref.shape
    H = whh_ref.shape[0]                      # 128 (lane-aligned gate slots)

    whh = whh_ref[...]                        # hoist weight load out of the loop
    h = jnp.zeros((Bp, H), jnp.float32)
    c = jnp.zeros((Bp, H), jnp.float32)

    # T is small & static -> full unroll: per step only the tiny (Bp,H)x(H,4H) dot
    # sits on the serial critical path; gate slices are 128-lane aligned.
    # Padded gate columns are zero => sigmoid(0)=0.5, tanh(0)=0, so padded lanes of
    # c/h stay exactly 0 for all timesteps.
    for t in range(T):
        gates = gates_in_ref[t] + jnp.dot(
            h.astype(jnp.bfloat16), whh, preferred_element_type=jnp.float32)
        # gate layout: [ i | f | o | g ] -> one contiguous sigmoid, one tanh
        sig = jax.nn.sigmoid(gates[:, :3 * H])
        i = sig[:, 0 * H:1 * H]
        f = sig[:, 1 * H:2 * H]
        o = sig[:, 2 * H:3 * H]
        g = jnp.tanh(gates[:, 3 * H:4 * H])
        c = f * c + i * g
        h = o * jnp.tanh(c)

    # MLP head fused in the same kernel (lin_dropout is identity in eval mode).
    z1 = jnp.dot(h.astype(jnp.bfloat16), w1_ref[...],
                 preferred_element_type=jnp.float32) + b1_ref[...]
    z1 = jnp.maximum(z1, 0.0)
    z2 = jnp.dot(z1.astype(jnp.bfloat16), w2_ref[...],
                 preferred_element_type=jnp.float32) + b2_ref[...]
    z2 = jnp.maximum(z2, 0.0)
    out_ref[...] = jnp.dot(z2.astype(jnp.bfloat16), w3_ref[...],
                           preferred_element_type=jnp.float32) + b3_ref[...]


def fused_lstm_head(gates_in, w_hh, w1, b1, w2, b2, w3, b3):
    operands = (gates_in, w_hh, w1, b1, w2, b2, w3, b3)
    return pl.pallas_call(
        fused_lstm_head_kernel,
        out_shape=jax.ShapeDtypeStruct((B_PAD, NCLS_PAD), jnp.float32),
        grid=(1,),
        in_specs=[_full_spec(x.shape) for x in operands],
        out_specs=_full_spec((B_PAD, NCLS_PAD)),
        compiler_params=pltpu.CompilerParams(
            dimension_semantics=("arbitrary",)),
    )(*operands)


# --------------------------------------------------------------- parameters
def _pad_gate_cols(w):
    # (in, 4*HID) in PyTorch gate order (i, f, g, o) -> (in, 4*HID_PAD) in kernel
    # gate order (i, f, o, g): each gate's HID columns land in its own lane-aligned
    # 128-wide slot; padded columns are exactly zero.
    i, f, g, o = (w[:, k * HID:(k + 1) * HID] for k in range(4))
    parts = [jnp.pad(x, ((0, 0), (0, HID_PAD - HID))) for x in (i, f, o, g)]
    return jnp.concatenate(parts, axis=1)


def init_params(key, tokenize_vocab_count):
    ks = jax.random.split(key, 10)
    s = 0.05
    embd = jax.random.normal(ks[0], (tokenize_vocab_count + 1, EMB), jnp.float32) * s
    w_ih = jax.random.normal(ks[1], (EMB, 4 * HID), jnp.float32) * s
    w_hh = jax.random.normal(ks[2], (HID, 4 * HID), jnp.float32) * s
    b_lstm = (jax.random.normal(ks[3], (1, 4 * HID), jnp.float32) * s
              + jax.random.normal(ks[4], (1, 4 * HID), jnp.float32) * s)
    w1 = jax.random.normal(ks[5], (HID, 1024), jnp.float32) * s
    b1 = jax.random.normal(ks[6], (1, 1024), jnp.float32) * s
    w2 = jax.random.normal(ks[7], (1024, 512), jnp.float32) * s
    b2 = jax.random.normal(ks[8], (1, 512), jnp.float32) * s
    w3 = jax.random.normal(ks[9], (512, NCLS), jnp.float32) * s
    b3 = jnp.zeros((1, NCLS), jnp.float32)

    return {
        # zero-padded, lane-aligned parameters (stored transposed vs PyTorch: (in, out))
        "embd":   jnp.pad(embd, ((0, 0), (0, EMB_PAD - EMB))),                      # (V+1, 384) f32
        "w_ih":   jnp.pad(_pad_gate_cols(w_ih), ((0, EMB_PAD - EMB), (0, 0))),      # (384, 512) f32
        "w_hh":   jnp.pad(_pad_gate_cols(w_hh),
                          ((0, HID_PAD - HID), (0, 0))).astype(jnp.bfloat16),       # (128, 512) bf16
        "b_lstm": _pad_gate_cols(b_lstm),                                           # (1, 512)   f32
        "w1":     jnp.pad(w1, ((0, HID_PAD - HID), (0, 0))).astype(jnp.bfloat16),   # (128, 1024) bf16
        "b1":     b1,                                                               # (1, 1024)  f32
        "w2":     w2.astype(jnp.bfloat16),                                          # (1024, 512) bf16
        "b2":     b2,                                                               # (1, 512)   f32
        "w3":     jnp.pad(w3, ((0, 0), (0, NCLS_PAD - NCLS))).astype(jnp.bfloat16), # (512, 128) bf16
        "b3":     jnp.pad(b3, ((0, 0), (0, NCLS_PAD - NCLS))),                      # (1, 128)   f32
    }


# --------------------------------------------------------------- model glue
# TODO(synk): embedding gather stays in plain JAX — a Pallas gather kernel buys
# nothing at this vocab/batch size.
@jax.jit
def model_forward(tokens, params):
    B, T = tokens.shape
    # Embedding lookup + embd_dropout (identity in eval mode).
    emb = params["embd"][tokens]                                              # (B, T, 384) f32
    # Hoisted input projection: ONE matmul for all T steps, emitted time-major
    # with the LSTM bias folded in (no separate transpose op, no per-step x@W_ih).
    gates_in = jnp.einsum("btd,dg->tbg", emb, params["w_ih"]) + params["b_lstm"]  # (T, B, 512)
    # Pad batch to the full sublane count; padded rows are all-zero gates, so their
    # h/c stay benign and are simply dropped after the kernel.
    gates_in = jnp.pad(gates_in, ((0, 0), (0, B_PAD - B), (0, 0)))
    logits_pad = fused_lstm_head(gates_in, params["w_hh"],
                                 params["w1"], params["b1"],
                                 params["w2"], params["b2"],
                                 params["w3"], params["b3"])                  # (8, 128)
    logits = logits_pad[:B, :NCLS][None, :, :]                                # (1, B, 3)
    # F.softmax with no dim on a 3-D tensor picks dim=0 (size 1) -> all ones;
    # reproduce that PyTorch behavior exactly.
    return jax.nn.softmax(logits, axis=0)


if __name__ == "__main__":
    key = jax.random.PRNGKey(0)
    k_tok, k_par = jax.random.split(key)

    tokenize_vocab_count = 50
    B, T = 2, 8
    tokens = jax.random.randint(k_tok, (B, T), 0, tokenize_vocab_count + 1, dtype=jnp.int32)
    params = init_params(k_par, tokenize_vocab_count)

    out = model_forward(tokens, params)
    out = jax.block_until_ready(out)

    assert out.shape == (1, B, 3), out.shape
    assert out.dtype == jnp.float32
    # softmax over the size-1 num_layers axis -> identically 1.0 (matches PyTorch).
    assert bool(jnp.allclose(out, 1.0)), out
    print("KERNEL_OK")
</pallas_src>

<mosaic_0001>
module attributes {stable_mosaic.version = 11 : i64} {
  func.func @fused_lstm_head_kernel(%arg0: i32, %arg1: memref<8x8x512xf32, #tpu.memory_space<vmem>>, %arg2: memref<128x512xbf16, #tpu.memory_space<vmem>>, %arg3: memref<128x1024xbf16, #tpu.memory_space<vmem>>, %arg4: memref<1x1024xf32, #tpu.memory_space<vmem>>, %arg5: memref<1024x512xbf16, #tpu.memory_space<vmem>>, %arg6: memref<1x512xf32, #tpu.memory_space<vmem>>, %arg7: memref<512x128xbf16, #tpu.memory_space<vmem>>, %arg8: memref<1x128xf32, #tpu.memory_space<vmem>>, %arg9: memref<8x128xf32, #tpu.memory_space<vmem>>) attributes {dimension_semantics = [#tpu.dimension_semantics<arbitrary>], iteration_bounds = array<i64: 1>, scalar_prefetch = 0 : i64, scratch_operands = 0 : i64, tpu.core_type = #tpu.core_type<tc>, window_params = [{pipeline_mode = #tpu.pipeline_mode<synchronous>, transform_indices = @transform_0, window_bounds = array<i64: 8, 8, 512>}, {pipeline_mode = #tpu.pipeline_mode<synchronous>, transform_indices = @transform_1, window_bounds = array<i64: 128, 512>}, {pipeline_mode = #tpu.pipeline_mode<synchronous>, transform_indices = @transform_2, window_bounds = array<i64: 128, 1024>}, {pipeline_mode = #tpu.pipeline_mode<synchronous>, transform_indices = @transform_3, window_bounds = array<i64: 1, 1024>}, {pipeline_mode = #tpu.pipeline_mode<synchronous>, transform_indices = @transform_4, window_bounds = array<i64: 1024, 512>}, {pipeline_mode = #tpu.pipeline_mode<synchronous>, transform_indices = @transform_5, window_bounds = array<i64: 1, 512>}, {pipeline_mode = #tpu.pipeline_mode<synchronous>, transform_indices = @transform_6, window_bounds = array<i64: 512, 128>}, {pipeline_mode = #tpu.pipeline_mode<synchronous>, transform_indices = @transform_7, window_bounds = array<i64: 1, 128>}, {pipeline_mode = #tpu.pipeline_mode<synchronous>, transform_indices = @transform_8, window_bounds = array<i64: 8, 128>}]} {
    %c0 = arith.constant 0 : index
    %c0_0 = arith.constant 0 : index
    %0 = vector.load %arg2[%c0, %c0_0] : memref<128x512xbf16, #tpu.memory_space<vmem>>, vector<128x512xbf16>
    %cst = arith.constant 0.000000e+00 : f32
    %1 = vector.broadcast %cst : f32 to vector<8x128xf32>
    %cst_1 = arith.constant 0.000000e+00 : f32
    %2 = vector.broadcast %cst_1 : f32 to vector<8x128xf32>
    %c0_2 = arith.constant 0 : index
    %c0_3 = arith.constant 0 : index
    %c0_4 = arith.constant 0 : index
    %3 = vector.load %arg1[%c0_2, %c0_3, %c0_4] : memref<8x8x512xf32, #tpu.memory_space<vmem>>, vector<1x8x512xf32>
    %4 = vector.shape_cast %3 : vector<1x8x512xf32> to vector<8x512xf32>
    %5 = arith.truncf %1 : vector<8x128xf32> to vector<8x128xbf16>
    %cst_5 = arith.constant dense<0.000000e+00> : vector<8x512xf32>
    %6 = tpu.matmul %5, %0, %cst_5 {dimension_numbers = #tpu.dot_dimension_numbers<[1], [0], [0], [1], [0, 0, 1, 1], [], []>} : vector<8x128xbf16>, vector<128x512xbf16>, vector<8x512xf32> -> vector<8x512xf32>
    %7 = arith.addf %4, %6 : vector<8x512xf32>
    %8 = vector.extract_strided_slice %7 {offsets = [0, 0], sizes = [8, 384], strides = [1, 1]} : vector<8x512xf32> to vector<8x384xf32>
    %9 = arith.negf %8 : vector<8x384xf32>
    %10 = math.exp %9 : vector<8x384xf32>
    %cst_6 = arith.constant 1.000000e+00 : f32
    %11 = vector.broadcast %cst_6 : f32 to vector<8x384xf32>
    %12 = arith.addf %11, %10 : vector<8x384xf32>
    %13 = arith.divf %11, %12 : vector<8x384xf32>
    %14 = vector.extract_strided_slice %13 {offsets = [0, 0], sizes = [8, 128], strides = [1, 1]} : vector<8x384xf32> to vector<8x128xf32>
    %15 = vector.extract_strided_slice %13 {offsets = [0, 128], sizes = [8, 128], strides = [1, 1]} : vector<8x384xf32> to vector<8x128xf32>
    %16 = vector.extract_strided_slice %13 {offsets = [0, 256], sizes = [8, 128], strides = [1, 1]} : vector<8x384xf32> to vector<8x128xf32>
    %17 = vector.extract_strided_slice %7 {offsets = [0, 384], sizes = [8, 128], strides = [1, 1]} : vector<8x512xf32> to vector<8x128xf32>
    %18 = math.tanh %17 : vector<8x128xf32>
    %19 = arith.mulf %15, %2 : vector<8x128xf32>
    %20 = arith.mulf %14, %18 : vector<8x128xf32>
    %21 = arith.addf %19, %20 : vector<8x128xf32>
    %22 = math.tanh %21 : vector<8x128xf32>
    %23 = arith.mulf %16, %22 : vector<8x128xf32>
    %c1 = arith.constant 1 : index
    %c0_7 = arith.constant 0 : index
    %c0_8 = arith.constant 0 : index
    %24 = vector.load %arg1[%c1, %c0_7, %c0_8] : memref<8x8x512xf32, #tpu.memory_space<vmem>>, vector<1x8x512xf32>
    %25 = vector.shape_cast %24 : vector<1x8x512xf32> to vector<8x512xf32>
    %26 = arith.truncf %23 : vector<8x128xf32> to vector<8x128xbf16>
    %cst_9 = arith.constant dense<0.000000e+00> : vector<8x512xf32>
    %27 = tpu.matmul %26, %0, %cst_9 {dimension_numbers = #tpu.dot_dimension_numbers<[1], [0], [0], [1], [0, 0, 1, 1], [], []>} : vector<8x128xbf16>, vector<128x512xbf16>, vector<8x512xf32> -> vector<8x512xf32>
    %28 = arith.addf %25, %27 : vector<8x512xf32>
    %29 = vector.extract_strided_slice %28 {offsets = [0, 0], sizes = [8, 384], strides = [1, 1]} : vector<8x512xf32> to vector<8x384xf32>
    %30 = arith.negf %29 : vector<8x384xf32>
    %31 = math.exp %30 : vector<8x384xf32>
    %cst_10 = arith.constant 1.000000e+00 : f32
    %32 = vector.broadcast %cst_10 : f32 to vector<8x384xf32>
    %33 = arith.addf %32, %31 : vector<8x384xf32>
    %34 = arith.divf %32, %33 : vector<8x384xf32>
    %35 = vector.extract_strided_slice %34 {offsets = [0, 0], sizes = [8, 128], strides = [1, 1]} : vector<8x384xf32> to vector<8x128xf32>
    %36 = vector.extract_strided_slice %34 {offsets = [0, 128], sizes = [8, 128], strides = [1, 1]} : vector<8x384xf32> to vector<8x128xf32>
    %37 = vector.extract_strided_slice %34 {offsets = [0, 256], sizes = [8, 128], strides = [1, 1]} : vector<8x384xf32> to vector<8x128xf32>
    %38 = vector.extract_strided_slice %28 {offsets = [0, 384], sizes = [8, 128], strides = [1, 1]} : vector<8x512xf32> to vector<8x128xf32>
    %39 = math.tanh %38 : vector<8x128xf32>
    %40 = arith.mulf %36, %21 : vector<8x128xf32>
    %41 = arith.mulf %35, %39 : vector<8x128xf32>
    %42 = arith.addf %40, %41 : vector<8x128xf32>
    %43 = math.tanh %42 : vector<8x128xf32>
    %44 = arith.mulf %37, %43 : vector<8x128xf32>
    %c2 = arith.constant 2 : index
    %c0_11 = arith.constant 0 : index
    %c0_12 = arith.constant 0 : index
    %45 = vector.load %arg1[%c2, %c0_11, %c0_12] : memref<8x8x512xf32, #tpu.memory_space<vmem>>, vector<1x8x512xf32>
    %46 = vector.shape_cast %45 : vector<1x8x512xf32> to vector<8x512xf32>
    %47 = arith.truncf %44 : vector<8x128xf32> to vector<8x128xbf16>
    %cst_13 = arith.constant dense<0.000000e+00> : vector<8x512xf32>
    %48 = tpu.matmul %47, %0, %cst_13 {dimension_numbers = #tpu.dot_dimension_numbers<[1], [0], [0], [1], [0, 0, 1, 1], [], []>} : vector<8x128xbf16>, vector<128x512xbf16>, vector<8x512xf32> -> vector<8x512xf32>
    %49 = arith.addf %46, %48 : vector<8x512xf32>
    %50 = vector.extract_strided_slice %49 {offsets = [0, 0], sizes = [8, 384], strides = [1, 1]} : vector<8x512xf32> to vector<8x384xf32>
    %51 = arith.negf %50 : vector<8x384xf32>
    %52 = math.exp %51 : vector<8x384xf32>
    %cst_14 = arith.constant 1.000000e+00 : f32
    %53 = vector.broadcast %cst_14 : f32 to vector<8x384xf32>
    %54 = arith.addf %53, %52 : vector<8x384xf32>
    %55 = arith.divf %53, %54 : vector<8x384xf32>
    %56 = vector.extract_strided_slice %55 {offsets = [0, 0], sizes = [8, 128], strides = [1, 1]} : vector<8x384xf32> to vector<8x128xf32>
    %57 = vector.extract_strided_slice %55 {offsets = [0, 128], sizes = [8, 128], strides = [1, 1]} : vector<8x384xf32> to vector<8x128xf32>
    %58 = vector.extract_strided_slice %55 {offsets = [0, 256], sizes = [8, 128], strides = [1, 1]} : vector<8x384xf32> to vector<8x128xf32>
    %59 = vector.extract_strided_slice %49 {offsets = [0, 384], sizes = [8, 128], strides = [1, 1]} : vector<8x512xf32> to vector<8x128xf32>
    %60 = math.tanh %59 : vector<8x128xf32>
    %61 = arith.mulf %57, %42 : vector<8x128xf32>
    %62 = arith.mulf %56, %60 : vector<8x128xf32>
    %63 = arith.addf %61, %62 : vector<8x128xf32>
    %64 = math.tanh %63 : vector<8x128xf32>
    %65 = arith.mulf %58, %64 : vector<8x128xf32>
    %c3 = arith.constant 3 : index
    %c0_15 = arith.constant 0 : index
    %c0_16 = arith.constant 0 : index
    %66 = vector.load %arg1[%c3, %c0_15, %c0_16] : memref<8x8x512xf32, #tpu.memory_space<vmem>>, vector<1x8x512xf32>
    %67 = vector.shape_cast %66 : vector<1x8x512xf32> to vector<8x512xf32>
    %68 = arith.truncf %65 : vector<8x128xf32> to vector<8x128xbf16>
    %cst_17 = arith.constant dense<0.000000e+00> : vector<8x512xf32>
    %69 = tpu.matmul %68, %0, %cst_17 {dimension_numbers = #tpu.dot_dimension_numbers<[1], [0], [0], [1], [0, 0, 1, 1], [], []>} : vector<8x128xbf16>, vector<128x512xbf16>, vector<8x512xf32> -> vector<8x512xf32>
    %70 = arith.addf %67, %69 : vector<8x512xf32>
    %71 = vector.extract_strided_slice %70 {offsets = [0, 0], sizes = [8, 384], strides = [1, 1]} : vector<8x512xf32> to vector<8x384xf32>
    %72 = arith.negf %71 : vector<8x384xf32>
    %73 = math.exp %72 : vector<8x384xf32>
    %cst_18 = arith.constant 1.000000e+00 : f32
    %74 = vector.broadcast %cst_18 : f32 to vector<8x384xf32>
    %75 = arith.addf %74, %73 : vector<8x384xf32>
    %76 = arith.divf %74, %75 : vector<8x384xf32>
    %77 = vector.extract_strided_slice %76 {offsets = [0, 0], sizes = [8, 128], strides = [1, 1]} : vector<8x384xf32> to vector<8x128xf32>
    %78 = vector.extract_strided_slice %76 {offsets = [0, 128], sizes = [8, 128], strides = [1, 1]} : vector<8x384xf32> to vector<8x128xf32>
    %79 = vector.extract_strided_slice %76 {offsets = [0, 256], sizes = [8, 128], strides = [1, 1]} : vector<8x384xf32> to vector<8x128xf32>
    %80 = vector.extract_strided_slice %70 {offsets = [0, 384], sizes = [8, 128], strides = [1, 1]} : vector<8x512xf32> to vector<8x128xf32>
    %81 = math.tanh %80 : vector<8x128xf32>
    %82 = arith.mulf %78, %63 : vector<8x128xf32>
    %83 = arith.mulf %77, %81 : vector<8x128xf32>
    %84 = arith.addf %82, %83 : vector<8x128xf32>
    %85 = math.tanh %84 : vector<8x128xf32>
    %86 = arith.mulf %79, %85 : vector<8x128xf32>
    %c4 = arith.constant 4 : index
    %c0_19 = arith.constant 0 : index
    %c0_20 = arith.constant 0 : index
    %87 = vector.load %arg1[%c4, %c0_19, %c0_20] : memref<8x8x512xf32, #tpu.memory_space<vmem>>, vector<1x8x512xf32>
    %88 = vector.shape_cast %87 : vector<1x8x512xf32> to vector<8x512xf32>
    %89 = arith.truncf %86 : vector<8x128xf32> to vector<8x128xbf16>
    %cst_21 = arith.constant dense<0.000000e+00> : vector<8x512xf32>
    %90 = tpu.matmul %89, %0, %cst_21 {dimension_numbers = #tpu.dot_dimension_numbers<[1], [0], [0], [1], [0, 0, 1, 1], [], []>} : vector<8x128xbf16>, vector<128x512xbf16>, vector<8x512xf32> -> vector<8x512xf32>
    %91 = arith.addf %88, %90 : vector<8x512xf32>
    %92 = vector.extract_strided_slice %91 {offsets = [0, 0], sizes = [8, 384], strides = [1, 1]} : vector<8x512xf32> to vector<8x384xf32>
    %93 = arith.negf %92 : vector<8x384xf32>
    %94 = math.exp %93 : vector<8x384xf32>
    %cst_22 = arith.constant 1.000000e+00 : f32
    %95 = vector.broadcast %cst_22 : f32 to vector<8x384xf32>
    %96 = arith.addf %95, %94 : vector<8x384xf32>
    %97 = arith.divf %95, %96 : vector<8x384xf32>
    %98 = vector.extract_strided_slice %97 {offsets = [0, 0], sizes = [8, 128], strides = [1, 1]} : vector<8x384xf32> to vector<8x128xf32>
    %99 = vector.extract_strided_slice %97 {offsets = [0, 128], sizes = [8, 128], strides = [1, 1]} : vector<8x384xf32> to vector<8x128xf32>
    %100 = vector.extract_strided_slice %97 {offsets = [0, 256], sizes = [8, 128], strides = [1, 1]} : vector<8x384xf32> to vector<8x128xf32>
    %101 = vector.extract_strided_slice %91 {offsets = [0, 384], sizes = [8, 128], strides = [1, 1]} : vector<8x512xf32> to vector<8x128xf32>
    %102 = math.tanh %101 : vector<8x128xf32>
    %103 = arith.mulf %99, %84 : vector<8x128xf32>
    %104 = arith.mulf %98, %102 : vector<8x128xf32>
    %105 = arith.addf %103, %104 : vector<8x128xf32>
    %106 = math.tanh %105 : vector<8x128xf32>
    %107 = arith.mulf %100, %106 : vector<8x128xf32>
    %c5 = arith.constant 5 : index
    %c0_23 = arith.constant 0 : index
    %c0_24 = arith.constant 0 : index
    %108 = vector.load %arg1[%c5, %c0_23, %c0_24] : memref<8x8x512xf32, #tpu.memory_space<vmem>>, vector<1x8x512xf32>
    %109 = vector.shape_cast %108 : vector<1x8x512xf32> to vector<8x512xf32>
    %110 = arith.truncf %107 : vector<8x128xf32> to vector<8x128xbf16>
    %cst_25 = arith.constant dense<0.000000e+00> : vector<8x512xf32>
    %111 = tpu.matmul %110, %0, %cst_25 {dimension_numbers = #tpu.dot_dimension_numbers<[1], [0], [0], [1], [0, 0, 1, 1], [], []>} : vector<8x128xbf16>, vector<128x512xbf16>, vector<8x512xf32> -> vector<8x512xf32>
    %112 = arith.addf %109, %111 : vector<8x512xf32>
    %113 = vector.extract_strided_slice %112 {offsets = [0, 0], sizes = [8, 384], strides = [1, 1]} : vector<8x512xf32> to vector<8x384xf32>
    %114 = arith.negf %113 : vector<8x384xf32>
    %115 = math.exp %114 : vector<8x384xf32>
    %cst_26 = arith.constant 1.000000e+00 : f32
    %116 = vector.broadcast %cst_26 : f32 to vector<8x384xf32>
    %117 = arith.addf %116, %115 : vector<8x384xf32>
    %118 = arith.divf %116, %117 : vector<8x384xf32>
    %119 = vector.extract_strided_slice %118 {offsets = [0, 0], sizes = [8, 128], strides = [1, 1]} : vector<8x384xf32> to vector<8x128xf32>
    %120 = vector.extract_strided_slice %118 {offsets = [0, 128], sizes = [8, 128], strides = [1, 1]} : vector<8x384xf32> to vector<8x128xf32>
    %121 = vector.extract_strided_slice %118 {offsets = [0, 256], sizes = [8, 128], strides = [1, 1]} : vector<8x384xf32> to vector<8x128xf32>
    %122 = vector.extract_strided_slice %112 {offsets = [0, 384], sizes = [8, 128], strides = [1, 1]} : vector<8x512xf32> to vector<8x128xf32>
    %123 = math.tanh %122 : vector<8x128xf32>
    %124 = arith.mulf %120, %105 : vector<8x128xf32>
    %125 = arith.mulf %119, %123 : vector<8x128xf32>
    %126 = arith.addf %124, %125 : vector<8x128xf32>
    %127 = math.tanh %126 : vector<8x128xf32>
    %128 = arith.mulf %121, %127 : vector<8x128xf32>
    %c6 = arith.constant 6 : index
    %c0_27 = arith.constant 0 : index
    %c0_28 = arith.constant 0 : index
    %129 = vector.load %arg1[%c6, %c0_27, %c0_28] : memref<8x8x512xf32, #tpu.memory_space<vmem>>, vector<1x8x512xf32>
    %130 = vector.shape_cast %129 : vector<1x8x512xf32> to vector<8x512xf32>
    %131 = arith.truncf %128 : vector<8x128xf32> to vector<8x128xbf16>
    %cst_29 = arith.constant dense<0.000000e+00> : vector<8x512xf32>
    %132 = tpu.matmul %131, %0, %cst_29 {dimension_numbers = #tpu.dot_dimension_numbers<[1], [0], [0], [1], [0, 0, 1, 1], [], []>} : vector<8x128xbf16>, vector<128x512xbf16>, vector<8x512xf32> -> vector<8x512xf32>
    %133 = arith.addf %130, %132 : vector<8x512xf32>
    %134 = vector.extract_strided_slice %133 {offsets = [0, 0], sizes = [8, 384], strides = [1, 1]} : vector<8x512xf32> to vector<8x384xf32>
    %135 = arith.negf %134 : vector<8x384xf32>
    %136 = math.exp %135 : vector<8x384xf32>
    %cst_30 = arith.constant 1.000000e+00 : f32
    %137 = vector.broadcast %cst_30 : f32 to vector<8x384xf32>
    %138 = arith.addf %137, %136 : vector<8x384xf32>
    %139 = arith.divf %137, %138 : vector<8x384xf32>
    %140 = vector.extract_strided_slice %139 {offsets = [0, 0], sizes = [8, 128], strides = [1, 1]} : vector<8x384xf32> to vector<8x128xf32>
    %141 = vector.extract_strided_slice %139 {offsets = [0, 128], sizes = [8, 128], strides = [1, 1]} : vector<8x384xf32> to vector<8x128xf32>
    %142 = vector.extract_strided_slice %139 {offsets = [0, 256], sizes = [8, 128], strides = [1, 1]} : vector<8x384xf32> to vector<8x128xf32>
    %143 = vector.extract_strided_slice %133 {offsets = [0, 384], sizes = [8, 128], strides = [1, 1]} : vector<8x512xf32> to vector<8x128xf32>
    %144 = math.tanh %143 : vector<8x128xf32>
    %145 = arith.mulf %141, %126 : vector<8x128xf32>
    %146 = arith.mulf %140, %144 : vector<8x128xf32>
    %147 = arith.addf %145, %146 : vector<8x128xf32>
    %148 = math.tanh %147 : vector<8x128xf32>
    %149 = arith.mulf %142, %148 : vector<8x128xf32>
    %c7 = arith.constant 7 : index
    %c0_31 = arith.constant 0 : index
    %c0_32 = arith.constant 0 : index
    %150 = vector.load %arg1[%c7, %c0_31, %c0_32] : memref<8x8x512xf32, #tpu.memory_space<vmem>>, vector<1x8x512xf32>
    %151 = vector.shape_cast %150 : vector<1x8x512xf32> to vector<8x512xf32>
    %152 = arith.truncf %149 : vector<8x128xf32> to vector<8x128xbf16>
    %cst_33 = arith.constant dense<0.000000e+00> : vector<8x512xf32>
    %153 = tpu.matmul %152, %0, %cst_33 {dimension_numbers = #tpu.dot_dimension_numbers<[1], [0], [0], [1], [0, 0, 1, 1], [], []>} : vector<8x128xbf16>, vector<128x512xbf16>, vector<8x512xf32> -> vector<8x512xf32>
    %154 = arith.addf %151, %153 : vector<8x512xf32>
    %155 = vector.extract_strided_slice %154 {offsets = [0, 0], sizes = [8, 384], strides = [1, 1]} : vector<8x512xf32> to vector<8x384xf32>
    %156 = arith.negf %155 : vector<8x384xf32>
    %157 = math.exp %156 : vector<8x384xf32>
    %cst_34 = arith.constant 1.000000e+00 : f32
    %158 = vector.broadcast %cst_34 : f32 to vector<8x384xf32>
    %159 = arith.addf %158, %157 : vector<8x384xf32>
    %160 = arith.divf %158, %159 : vector<8x384xf32>
    %161 = vector.extract_strided_slice %160 {offsets = [0, 0], sizes = [8, 128], strides = [1, 1]} : vector<8x384xf32> to vector<8x128xf32>
    %162 = vector.extract_strided_slice %160 {offsets = [0, 128], sizes = [8, 128], strides = [1, 1]} : vector<8x384xf32> to vector<8x128xf32>
    %163 = vector.extract_strided_slice %160 {offsets = [0, 256], sizes = [8, 128], strides = [1, 1]} : vector<8x384xf32> to vector<8x128xf32>
    %164 = vector.extract_strided_slice %154 {offsets = [0, 384], sizes = [8, 128], strides = [1, 1]} : vector<8x512xf32> to vector<8x128xf32>
    %165 = math.tanh %164 : vector<8x128xf32>
    %166 = arith.mulf %162, %147 : vector<8x128xf32>
    %167 = arith.mulf %161, %165 : vector<8x128xf32>
    %168 = arith.addf %166, %167 : vector<8x128xf32>
    %169 = math.tanh %168 : vector<8x128xf32>
    %170 = arith.mulf %163, %169 : vector<8x128xf32>
    %171 = arith.truncf %170 : vector<8x128xf32> to vector<8x128xbf16>
    %c0_35 = arith.constant 0 : index
    %c0_36 = arith.constant 0 : index
    %172 = vector.load %arg3[%c0_35, %c0_36] : memref<128x1024xbf16, #tpu.memory_space<vmem>>, vector<128x1024xbf16>
    %cst_37 = arith.constant dense<0.000000e+00> : vector<8x1024xf32>
    %173 = tpu.matmul %171, %172, %cst_37 {dimension_numbers = #tpu.dot_dimension_numbers<[1], [0], [0], [1], [0, 0, 1, 1], [], []>} : vector<8x128xbf16>, vector<128x1024xbf16>, vector<8x1024xf32> -> vector<8x1024xf32>
    %c0_38 = arith.constant 0 : index
    %c0_39 = arith.constant 0 : index
    %174 = vector.load %arg4[%c0_38, %c0_39] : memref<1x1024xf32, #tpu.memory_space<vmem>>, vector<1x1024xf32>
    %175 = vector.broadcast %174 : vector<1x1024xf32> to vector<8x1024xf32>
    %176 = arith.addf %173, %175 : vector<8x1024xf32>
    %cst_40 = arith.constant 0.000000e+00 : f32
    %177 = vector.broadcast %cst_40 : f32 to vector<8x1024xf32>
    %178 = arith.maximumf %176, %177 : vector<8x1024xf32>
    %179 = arith.truncf %178 : vector<8x1024xf32> to vector<8x1024xbf16>
    %c0_41 = arith.constant 0 : index
    %c0_42 = arith.constant 0 : index
    %180 = vector.load %arg5[%c0_41, %c0_42] : memref<1024x512xbf16, #tpu.memory_space<vmem>>, vector<1024x512xbf16>
    %cst_43 = arith.constant dense<0.000000e+00> : vector<8x512xf32>
    %181 = tpu.matmul %179, %180, %cst_43 {dimension_numbers = #tpu.dot_dimension_numbers<[1], [0], [0], [1], [0, 0, 1, 1], [], []>} : vector<8x1024xbf16>, vector<1024x512xbf16>, vector<8x512xf32> -> vector<8x512xf32>
    %c0_44 = arith.constant 0 : index
    %c0_45 = arith.constant 0 : index
    %182 = vector.load %arg6[%c0_44, %c0_45] : memref<1x512xf32, #tpu.memory_space<vmem>>, vector<1x512xf32>
    %183 = vector.broadcast %182 : vector<1x512xf32> to vector<8x512xf32>
    %184 = arith.addf %181, %183 : vector<8x512xf32>
    %cst_46 = arith.constant 0.000000e+00 : f32
    %185 = vector.broadcast %cst_46 : f32 to vector<8x512xf32>
    %186 = arith.maximumf %184, %185 : vector<8x512xf32>
    %187 = arith.truncf %186 : vector<8x512xf32> to vector<8x512xbf16>
    %c0_47 = arith.constant 0 : index
    %c0_48 = arith.constant 0 : index
    %188 = vector.load %arg7[%c0_47, %c0_48] : memref<512x128xbf16, #tpu.memory_space<vmem>>, vector<512x128xbf16>
    %cst_49 = arith.constant dense<0.000000e+00> : vector<8x128xf32>
    %189 = tpu.matmul %187, %188, %cst_49 {dimension_numbers = #tpu.dot_dimension_numbers<[1], [0], [0], [1], [0, 0, 1, 1], [], []>} : vector<8x512xbf16>, vector<512x128xbf16>, vector<8x128xf32> -> vector<8x128xf32>
    %c0_50 = arith.constant 0 : index
    %c0_51 = arith.constant 0 : index
    %190 = vector.load %arg8[%c0_50, %c0_51] : memref<1x128xf32, #tpu.memory_space<vmem>>, vector<1x128xf32>
    %191 = vector.broadcast %190 : vector<1x128xf32> to vector<8x128xf32>
    %192 = arith.addf %189, %191 : vector<8x128xf32>
    %c0_52 = arith.constant 0 : index
    %c0_53 = arith.constant 0 : index
    %193 = vector.load %arg9[%c0_52, %c0_53] : memref<8x128xf32, #tpu.memory_space<vmem>>, vector<8x128xf32>
    tpu.vector_store %arg9[%c0_52, %c0_53], %192 {strides = array<i32>} : memref<8x128xf32, #tpu.memory_space<vmem>>, vector<8x128xf32>,
    return
  }
  func.func @transform_0(%arg0: i32) -> (i32, i32, i32) {
    %c0_i32 = arith.constant 0 : i32
    %c0_i32_0 = arith.constant 0 : i32
    %c0_i32_1 = arith.constant 0 : i32
    %c0_i32_2 = arith.constant 0 : i32
    return %c0_i32, %c0_i32_0, %c0_i32_1 : i32, i32, i32
  }
  func.func @transform_1(%arg0: i32) -> (i32, i32) {
    %c0_i32 = arith.constant 0 : i32
    %c0_i32_0 = arith.constant 0 : i32
    %c0_i32_1 = arith.constant 0 : i32
    return %c0_i32, %c0_i32_0 : i32, i32
  }
  func.func @transform_2(%arg0: i32) -> (i32, i32) {
    %c0_i32 = arith.constant 0 : i32
    %c0_i32_0 = arith.constant 0 : i32
    %c0_i32_1 = arith.constant 0 : i32
    return %c0_i32, %c0_i32_0 : i32, i32
  }
  func.func @transform_3(%arg0: i32) -> (i32, i32) {
    %c0_i32 = arith.constant 0 : i32
    %c0_i32_0 = arith.constant 0 : i32
    %c0_i32_1 = arith.constant 0 : i32
    return %c0_i32, %c0_i32_0 : i32, i32
  }
  func.func @transform_4(%arg0: i32) -> (i32, i32) {
    %c0_i32 = arith.constant 0 : i32
    %c0_i32_0 = arith.constant 0 : i32
    %c0_i32_1 = arith.constant 0 : i32
    return %c0_i32, %c0_i32_0 : i32, i32
  }
  func.func @transform_5(%arg0: i32) -> (i32, i32) {
    %c0_i32 = arith.constant 0 : i32
    %c0_i32_0 = arith.constant 0 : i32
    %c0_i32_1 = arith.constant 0 : i32
    return %c0_i32, %c0_i32_0 : i32, i32
  }
  func.func @transform_6(%arg0: i32) -> (i32, i32) {
    %c0_i32 = arith.constant 0 : i32
    %c0_i32_0 = arith.constant 0 : i32
    %c0_i32_1 = arith.constant 0 : i32
    return %c0_i32, %c0_i32_0 : i32, i32
  }
  func.func @transform_7(%arg0: i32) -> (i32, i32) {
    %c0_i32 = arith.constant 0 : i32
    %c0_i32_0 = arith.constant 0 : i32
    %c0_i32_1 = arith.constant 0 : i32
    return %c0_i32, %c0_i32_0 : i32, i32
  }
  func.func @transform_8(%arg0: i32) -> (i32, i32) {
    %c0_i32 = arith.constant 0 : i32
    %c0_i32_0 = arith.constant 0 : i32
    %c0_i32_1 = arith.constant 0 : i32
    return %c0_i32, %c0_i32_0 : i32, i32
  }
}

</mosaic_0001>

<llo_original>
// kernel: model_forward.1
$region0: #{model_forward.1}
  #allocation0 [shape = 'u32[]', space=smem, size = 0x4, offset = 0x4, fixed_abs, tag = 'smem constant byte address 0x4 - core index']
  #allocation1 [shape = 'u32[144,128]{1,0:T(1,128)}', space=vmem, size = 0x12000, scoped, tag = 'internal scratch']
  %s0 = inlined_call_operand.vmem [shape: f32[8,8,512], index: 0, kind: input, shape index: {}]
  %s1 = inlined_call_operand.vmem [shape: bf16[128,512], index: 1, kind: input, shape index: {}]
  %s2 = inlined_call_operand.hbm [shape: bf16[128,1024], index: 2, kind: input, shape index: {}]
  %s3 = inlined_call_operand.vmem [shape: f32[1,1024], index: 3, kind: input, shape index: {}]
  %s4 = inlined_call_operand.vmem [shape: bf16[1024,512], index: 4, kind: input, shape index: {}]
  %s5 = inlined_call_operand.vmem [shape: f32[1,512], index: 5, kind: input, shape index: {}]
  %s6 = inlined_call_operand.hbm [shape: bf16[512,128], index: 6, kind: input, shape index: {}]
  %s7 = inlined_call_operand.vmem [shape: f32[1,128], index: 7, kind: input, shape index: {}]
  %s8 = inlined_call_operand.vmem [shape: f32[8,128], index: 8, kind: output, shape index: {}]
  %s9 = sld [smem:[#allocation0]]
  $region50: #{model_forward.1} parent=0
    _
  %s11 = ssub.s32 1, %s9
  %s12 = scalar_select 0, %s11, %s9
  $region1: #{model_forward.1} parent=0
    #allocation2 [shape = 'u8[262144]{0}', space=vmem, size = 0x40000, scoped, tag = 'input window, operand 2, single buffered']
    #allocation3 [shape = 's32[1]{0}', space=sflag, size = 0x4, scoped, tag = 'scoped memory for model_forward.1']
    #allocation4 [shape = 'u8[131072]{0}', space=vmem, size = 0x20000, scoped, tag = 'input window, operand 6, single buffered']
    #allocation5 [shape = 's32[1]{0}', space=sflag, size = 0x4, scoped, tag = 'scoped memory for model_forward.1']
    %13 = vsyncpa [#allocation3], 0
    %14 = vsyncpa [#allocation5], 0
    // Predicated region
    $region2: #{model_forward.1} parent=1 // pred_check
      _
    $region3: #{model_forward.1} parent=1 // pred_check_branch
      %16 = sbr.rel (0) target = $region5
    $region4: #{model_forward.1} parent=1 // pred_region
      _
    $region5: #{model_forward.1} parent=1 // pred_fallthru
      _
    // Predicated region
    $region6: #{model_forward.1} parent=1 // pred_check
      _
    $region7: #{model_forward.1} parent=1 // pred_check_branch
      %18 = sbr.rel (0) target = $region9
    $region8: #{model_forward.1} parent=1 // pred_region
      _
    $region9: #{model_forward.1} parent=1 // pred_fallthru
      _
    // Predicated region
    $region10: #{model_forward.1} parent=1 // pred_check
      _
    $region11: #{model_forward.1} parent=1 // pred_check_branch
      %20 = sbr.rel (0) target = $region13
    $region12: #{model_forward.1} parent=1 // pred_region
      %s22 = ssub.s32 8192, 8192
      %23 = vsyncadd [#allocation3], %s22
      %s24 = sshll.u32 [#allocation2], 4
      %s25 = int_to_ptr.vmem [resolvable:$true] %s24
      %30 = dma.hbm_to_vmem [thread:$0]  %s2, 8192, %s25, [#allocation3], 512, 512, 32
    $region13: #{model_forward.1} parent=1 // pred_fallthru
      _
    // Predicated region
    $region14: #{model_forward.1} parent=1 // pred_check
      _
    $region15: #{model_forward.1} parent=1 // pred_check_branch
      %32 = sbr.rel (0) target = $region17
    $region16: #{model_forward.1} parent=1 // pred_region
      _
    $region17: #{model_forward.1} parent=1 // pred_fallthru
      _
    // Predicated region
    $region18: #{model_forward.1} parent=1 // pred_check
      _
    $region19: #{model_forward.1} parent=1 // pred_check_branch
      %34 = sbr.rel (0) target = $region21
    $region20: #{model_forward.1} parent=1 // pred_region
      _
    $region21: #{model_forward.1} parent=1 // pred_fallthru
      _
    // Predicated region
    $region22: #{model_forward.1} parent=1 // pred_check
      _
    $region23: #{model_forward.1} parent=1 // pred_check_branch
      %36 = sbr.rel (0) target = $region25
    $region24: #{model_forward.1} parent=1 // pred_region
      _
    $region25: #{model_forward.1} parent=1 // pred_fallthru
      _
    // Predicated region
    $region26: #{model_forward.1} parent=1 // pred_check
      _
    $region27: #{model_forward.1} parent=1 // pred_check_branch
      %38 = sbr.rel (0) target = $region29
    $region28: #{model_forward.1} parent=1 // pred_region
      %s40 = ssub.s32 4096, 4096
      %41 = vsyncadd [#allocation5], %s40
      %s42 = sshll.u32 [#allocation4], 4
      %s43 = int_to_ptr.vmem [resolvable:$true] %s42
      %48 = dma.hbm_to_vmem [thread:$0]  %s6, 4096, %s43, [#allocation5], 64, 64, 4
    $region29: #{model_forward.1} parent=1 // pred_fallthru
      _
    // Predicated region
    $region30: #{model_forward.1} parent=1 // pred_check
      _
    $region31: #{model_forward.1} parent=1 // pred_check_branch
      %50 = sbr.rel (0) target = $region33
    $region32: #{model_forward.1} parent=1 // pred_region
      _
    $region33: #{model_forward.1} parent=1 // pred_fallthru
      _
    // Predicated region
    $region34: #{model_forward.1} parent=1 // pred_check
      _
    $region35: #{model_forward.1} parent=1 // pred_check_branch
      %52 = sbr.rel (0) target = $region37
    $region36: #{model_forward.1} parent=1 // pred_region
      %53 = dma.done [#allocation3], 8192
    $region37: #{model_forward.1} parent=1 // pred_fallthru
      _
    // Predicated region
    $region38: #{model_forward.1} parent=1 // pred_check
      _
    $region39: #{model_forward.1} parent=1 // pred_check_branch
      %55 = sbr.rel (0) target = $region41
    $region40: #{model_forward.1} parent=1 // pred_region
      %56 = dma.done [#allocation5], 4096
    $region41: #{model_forward.1} parent=1 // pred_fallthru
      _
    %v58 = vld [vmem:[%s1] sm:$0xff]
    %v59 = vld [vmem:[%s1 + $0x8] sm:$0xff]
    %v60 = vld [vmem:[%s1 + $0x10] sm:$0xff]
    %v61 = vld [vmem:[%s1 + $0x18] sm:$0xff]
    %v62 = vld [vmem:[%s1 + $0x20] sm:$0xff]
    %v63 = vld [vmem:[%s1 + $0x28] sm:$0xff]
    %v64 = vld [vmem:[%s1 + $0x30] sm:$0xff]
    %v65 = vld [vmem:[%s1 + $0x38] sm:$0xff]
    %v66 = vld [vmem:[%s1 + $0x40] sm:$0xff]
    %v67 = vld [vmem:[%s1 + $0x48] sm:$0xff]
    %v68 = vld [vmem:[%s1 + $0x50] sm:$0xff]
    %v69 = vld [vmem:[%s1 + $0x58] sm:$0xff]
    %v70 = vld [vmem:[%s1 + $0x60] sm:$0xff]
    %v71 = vld [vmem:[%s1 + $0x68] sm:$0xff]
    %v72 = vld [vmem:[%s1 + $0x70] sm:$0xff]
    %v73 = vld [vmem:[%s1 + $0x78] sm:$0xff]
    %v74 = vld [vmem:[%s1 + $0x80] sm:$0xff]
    %v75 = vld [vmem:[%s1 + $0x88] sm:$0xff]
    %v76 = vld [vmem:[%s1 + $0x90] sm:$0xff]
    %v77 = vld [vmem:[%s1 + $0x98] sm:$0xff]
    %v78 = vld [vmem:[%s1 + $0xa0] sm:$0xff]
    %v79 = vld [vmem:[%s1 + $0xa8] sm:$0xff]
    %v80 = vld [vmem:[%s1 + $0xb0] sm:$0xff]
    %v81 = vld [vmem:[%s1 + $0xb8] sm:$0xff]
    %v82 = vld [vmem:[%s1 + $0xc0] sm:$0xff]
    %v83 = vld [vmem:[%s1 + $0xc8] sm:$0xff]
    %v84 = vld [vmem:[%s1 + $0xd0] sm:$0xff]
    %v85 = vld [vmem:[%s1 + $0xd8] sm:$0xff]
    %v86 = vld [vmem:[%s1 + $0xe0] sm:$0xff]
    %v87 = vld [vmem:[%s1 + $0xe8] sm:$0xff]
    %v88 = vld [vmem:[%s1 + $0xf0] sm:$0xff]
    %v89 = vld [vmem:[%s1 + $0xf8] sm:$0xff]
    %v90 = vld [vmem:[%s0] sm:$0xff]
    %v91 = vld [vmem:[%s0 + $0x8] sm:$0xff]
    %v92 = vld [vmem:[%s0 + $0x10] sm:$0xff]
    %v93 = vld [vmem:[%s0 + $0x18] sm:$0xff]
    %v126 = vunpack.c.l.b16 %v58
    %v127 = vunpack.c.h.b16 %v58
    %v128 = vunpack.c.l.b16 %v59
    %v129 = vunpack.c.h.b16 %v59
    %v130 = vunpack.c.l.b16 %v60
    %v131 = vunpack.c.h.b16 %v60
    %v132 = vunpack.c.l.b16 %v61
    %v133 = vunpack.c.h.b16 %v61
    %v134 = vunpack.c.l.b16 %v62
    %v135 = vunpack.c.h.b16 %v62
    %v136 = vunpack.c.l.b16 %v63
    %v137 = vunpack.c.h.b16 %v63
    %v138 = vunpack.c.l.b16 %v64
    %v139 = vunpack.c.h.b16 %v64
    %v140 = vunpack.c.l.b16 %v65
    %v141 = vunpack.c.h.b16 %v65
    %v142 = vunpack.c.l.b16 %v66
    %v143 = vunpack.c.h.b16 %v66
    %v144 = vunpack.c.l.b16 %v67
    %v145 = vunpack.c.h.b16 %v67
    %v146 = vunpack.c.l.b16 %v68
    %v147 = vunpack.c.h.b16 %v68
    %v148 = vunpack.c.l.b16 %v69
    %v149 = vunpack.c.h.b16 %v69
    %v150 = vunpack.c.l.b16 %v70
    %v151 = vunpack.c.h.b16 %v70
    %v152 = vunpack.c.l.b16 %v71
    %v153 = vunpack.c.h.b16 %v71
    %v154 = vunpack.c.l.b16 %v72
    %v155 = vunpack.c.h.b16 %v72
    %v156 = vunpack.c.l.b16 %v73
    %v157 = vunpack.c.h.b16 %v73
    %v158 = vunpack.c.l.b16 %v74
    %v159 = vunpack.c.h.b16 %v74
    %v160 = vunpack.c.l.b16 %v75
    %v161 = vunpack.c.h.b16 %v75
    %v162 = vunpack.c.l.b16 %v76
    %v163 = vunpack.c.h.b16 %v76
    %v164 = vunpack.c.l.b16 %v77
    %v165 = vunpack.c.h.b16 %v77
    %v166 = vunpack.c.l.b16 %v78
    %v167 = vunpack.c.h.b16 %v78
    %v168 = vunpack.c.l.b16 %v79
    %v169 = vunpack.c.h.b16 %v79
    %v170 = vunpack.c.l.b16 %v80
    %v171 = vunpack.c.h.b16 %v80
    %v172 = vunpack.c.l.b16 %v81
    %v173 = vunpack.c.h.b16 %v81
    %v174 = vunpack.c.l.b16 %v82
    %v175 = vunpack.c.h.b16 %v82
    %v176 = vunpack.c.l.b16 %v83
    %v177 = vunpack.c.h.b16 %v83
    %v178 = vunpack.c.l.b16 %v84
    %v179 = vunpack.c.h.b16 %v84
    %v180 = vunpack.c.l.b16 %v85
    %v181 = vunpack.c.h.b16 %v85
    %v182 = vunpack.c.l.b16 %v86
    %v183 = vunpack.c.h.b16 %v86
    %v184 = vunpack.c.l.b16 %v87
    %v185 = vunpack.c.h.b16 %v87
    %v186 = vunpack.c.l.b16 %v88
    %v187 = vunpack.c.h.b16 %v88
    %v188 = vunpack.c.l.b16 %v89
    %v189 = vunpack.c.h.b16 %v89
    %v190 = vpack.c.b16 %v130, %v126
    %v191 = vpack.c.b16 %v131, %v127
    %v192 = vpack.c.b16 %v132, %v128
    %v193 = vpack.c.b16 %v133, %v129
    %v194 = vpack.c.b16 %v138, %v134
    %v195 = vpack.c.b16 %v139, %v135
    %v196 = vpack.c.b16 %v140, %v136
    %v197 = vpack.c.b16 %v141, %v137
    %v198 = vpack.c.b16 %v146, %v142
    %v199 = vpack.c.b16 %v147, %v143
    %v200 = vpack.c.b16 %v148, %v144
    %v201 = vpack.c.b16 %v149, %v145
    %v202 = vpack.c.b16 %v154, %v150
    %v203 = vpack.c.b16 %v155, %v151
    %v204 = vpack.c.b16 %v156, %v152
    %v205 = vpack.c.b16 %v157, %v153
    %v206 = vpack.c.b16 %v162, %v158
    %v207 = vpack.c.b16 %v163, %v159
    %v208 = vpack.c.b16 %v164, %v160
    %v209 = vpack.c.b16 %v165, %v161
    %v210 = vpack.c.b16 %v170, %v166
    %v211 = vpack.c.b16 %v171, %v167
    %v212 = vpack.c.b16 %v172, %v168
    %v213 = vpack.c.b16 %v173, %v169
    %v214 = vpack.c.b16 %v178, %v174
    %v215 = vpack.c.b16 %v179, %v175
    %v216 = vpack.c.b16 %v180, %v176
    %v217 = vpack.c.b16 %v181, %v177
    %v218 = vpack.c.b16 %v186, %v182
    %v219 = vpack.c.b16 %v187, %v183
    %v220 = vpack.c.b16 %v188, %v184
    %v221 = vpack.c.b16 %v189, %v185
    %254 = vmatprep.subr.bf16.mxu0 %v191
    %255 = vmatpush1.bf16.msra.mxu0 %v190
    %256 = vmatprep.subr.bf16.mxu0 %v195
    %257 = vmatpush1.bf16.msra.mxu0 %v194
    %258 = vmatprep.subr.bf16.mxu0 %v199
    %259 = vmatpush1.bf16.msra.mxu0 %v198
    %260 = vmatprep.subr.bf16.mxu0 %v203
    %261 = vmatpush1.bf16.msra.mxu0 %v202
    %262 = vmatprep.subr.bf16.mxu0 %v207
    %263 = vmatpush1.bf16.msra.mxu0 %v206
    %264 = vmatprep.subr.bf16.mxu0 %v211
    %265 = vmatpush1.bf16.msra.mxu0 %v210
    %266 = vmatprep.subr.bf16.mxu0 %v215
    %267 = vmatpush1.bf16.msra.mxu0 %v214
    %268 = vmatprep.subr.bf16.mxu0 %v219
    %269 = vmatpush1.bf16.msra.mxu0 %v218
    %270 = vmatprep.subr.bf16.mxu0 0
    %271 = vmatpush1.bf16.msra.mxu0 0
    %272 = vmatprep.subr.bf16.mxu0 0
    %273 = vmatpush1.bf16.msra.mxu0 0
    %274 = vmatprep.subr.bf16.mxu0 0
    %275 = vmatpush1.bf16.msra.mxu0 0
    %276 = vmatprep.subr.bf16.mxu0 0
    %277 = vmatpush1.bf16.msra.mxu0 0
    %278 = vmatprep.subr.bf16.mxu0 0
    %279 = vmatpush1.bf16.msra.mxu0 0
    %280 = vmatprep.subr.bf16.mxu0 0
    %281 = vmatpush1.bf16.msra.mxu0 0
    %282 = vmatprep.subr.bf16.mxu0 0
    %283 = vmatpush1.bf16.msra.mxu0 0
    %284 = vmatprep.subr.bf16.mxu0 0
    %285 = vmatpush1.bf16.msra.mxu0 0
    %286 = vmatprep.mubr.bf16.mxu0 0
    %287 = vmatmul.mubr.bf16.gmra.mrb[0].mxu0 0
    %v288 = vpop.f32.mrb[0].mxu0
    %v289 = vadd.f32 0.0, %v288
    %v290 = vpop.f32.mrb[0].mxu0
    %v291 = vadd.f32 0.0, %v290
    %v292 = vpop.f32.mrb[0].mxu0
    %v293 = vpop.f32.mrb[0].mxu0
    %294 = vdwg.mxu0
    %295 = vmatprep.subr.bf16.mxu0 %v193
    %296 = vmatpush1.bf16.msra.mxu0 %v192
    %297 = vmatprep.subr.bf16.mxu0 %v197
    %298 = vmatpush1.bf16.msra.mxu0 %v196
    %299 = vmatprep.subr.bf16.mxu0 %v201
    %300 = vmatpush1.bf16.msra.mxu0 %v200
    %301 = vmatprep.subr.bf16.mxu0 %v205
    %302 = vmatpush1.bf16.msra.mxu0 %v204
    %303 = vmatprep.subr.bf16.mxu0 %v209
    %304 = vmatpush1.bf16.msra.mxu0 %v208
    %305 = vmatprep.subr.bf16.mxu0 %v213
    %306 = vmatpush1.bf16.msra.mxu0 %v212
    %307 = vmatprep.subr.bf16.mxu0 %v217
    %308 = vmatpush1.bf16.msra.mxu0 %v216
    %309 = vmatprep.subr.bf16.mxu0 %v221
    %310 = vmatpush1.bf16.msra.mxu0 %v220
    %311 = vmatprep.subr.bf16.mxu0 0
    %312 = vmatpush1.bf16.msra.mxu0 0
    %313 = vmatprep.subr.bf16.mxu0 0
    %314 = vmatpush1.bf16.msra.mxu0 0
    %315 = vmatprep.subr.bf16.mxu0 0
    %316 = vmatpush1.bf16.msra.mxu0 0
    %317 = vmatprep.subr.bf16.mxu0 0
    %318 = vmatpush1.bf16.msra.mxu0 0
    %319 = vmatprep.subr.bf16.mxu0 0
    %320 = vmatpush1.bf16.msra.mxu0 0
    %321 = vmatprep.subr.bf16.mxu0 0
    %322 = vmatpush1.bf16.msra.mxu0 0
    %323 = vmatprep.subr.bf16.mxu0 0
    %324 = vmatpush1.bf16.msra.mxu0 0
    %325 = vmatprep.subr.bf16.mxu0 0
    %326 = vmatpush1.bf16.msra.mxu0 0
    %327 = vmatprep.mubr.bf16.mxu0 0
    %328 = vmatmul.mubr.bf16.gmra.mrb[0].mxu0 0
    %v329 = vpop.f32.mrb[0].mxu0
    %v330 = vadd.f32 0.0, %v329
    %v331 = vpop.f32.mrb[0].mxu0
    %v332 = vadd.f32 0.0, %v331
    %v333 = vpop.f32.mrb[0].mxu0
    %v334 = vpop.f32.mrb[0].mxu0
    %335 = vdwg.mxu0
    %v336 = vadd.f32 %v90, %v289
    %v337 = vadd.f32 %v91, %v291
    %v338 = vadd.f32 %v92, %v330
    %v339 = vadd.f32 %v93, %v332
    %v340 = vxor.u32 %v336, 2147483648
    %v341 = vxor.u32 %v337, 2147483648
    %v342 = vxor.u32 %v338, 2147483648
    %v343 = vmul.f32 %v340, 1.442695
    %v344 = vpow.pop %v343
    %v345 = vmul.f32 %v341, 1.442695
    %v346 = vpow.pop %v345
    %v347 = vmul.f32 %v342, 1.442695
    %v348 = vpow.pop %v347
    %v349 = vadd.f32 %v344, 1.0
    %v350 = vadd.f32 %v346, 1.0
    %v351 = vadd.f32 %v348, 1.0
    %v352 = vrcp.pop %v349
    %v353 = vmul.f32 1.0, %v352
    %v354 = vrcp.pop %v350
    %v355 = vmul.f32 1.0, %v354
    %v356 = vrcp.pop %v351
    %v357 = vmul.f32 1.0, %v356
    %v358 = vtanh.pop %v339
    %v359 = vmul.f32 %v355, 0.0
    %v360 = vmul.f32 %v353, %v358
    %v361 = vadd.f32 %v359, %v360
    %v362 = vtanh.pop %v361
    %v363 = vmul.f32 %v357, %v362
    %s364 = scalar_lea.vmem %s0, 32
    %v365 = vld [vmem:[%s364] sm:$0xff]
    %v366 = vld [vmem:[%s364 + $0x8] sm:$0xff]
    %v367 = vld [vmem:[%s364 + $0x10] sm:$0xff]
    %v368 = vld [vmem:[%s364 + $0x18] sm:$0xff]
    %v369 = vpack.c.bf16 %v363, %v363
    %370 = vmatprep.subr.bf16.mxu0 %v191
    %371 = vmatpush1.bf16.msra.mxu0 %v190
    %372 = vmatprep.subr.bf16.mxu0 %v195
    %373 = vmatpush1.bf16.msra.mxu0 %v194
    %374 = vmatprep.subr.bf16.mxu0 %v199
    %375 = vmatpush1.bf16.msra.mxu0 %v198
    %376 = vmatprep.subr.bf16.mxu0 %v203
    %377 = vmatpush1.bf16.msra.mxu0 %v202
    %378 = vmatprep.subr.bf16.mxu0 %v207
    %379 = vmatpush1.bf16.msra.mxu0 %v206
    %380 = vmatprep.subr.bf16.mxu0 %v211
    %381 = vmatpush1.bf16.msra.mxu0 %v210
    %382 = vmatprep.subr.bf16.mxu0 %v215
    %383 = vmatpush1.bf16.msra.mxu0 %v214
    %384 = vmatprep.subr.bf16.mxu0 %v219
    %385 = vmatpush1.bf16.msra.mxu0 %v218
    %386 = vmatprep.subr.bf16.mxu0 0
    %387 = vmatpush1.bf16.msra.mxu0 0
    %388 = vmatprep.subr.bf16.mxu0 0
    %389 = vmatpush1.bf16.msra.mxu0 0
    %390 = vmatprep.subr.bf16.mxu0 0
    %391 = vmatpush1.bf16.msra.mxu0 0
    %392 = vmatprep.subr.bf16.mxu0 0
    %393 = vmatpush1.bf16.msra.mxu0 0
    %394 = vmatprep.subr.bf16.mxu0 0
    %395 = vmatpush1.bf16.msra.mxu0 0
    %396 = vmatprep.subr.bf16.mxu0 0
    %397 = vmatpush1.bf16.msra.mxu0 0
    %398 = vmatprep.subr.bf16.mxu0 0
    %399 = vmatpush1.bf16.msra.mxu0 0
    %400 = vmatprep.subr.bf16.mxu0 0
    %401 = vmatpush1.bf16.msra.mxu0 0
    %402 = vmatprep.mubr.bf16.mxu0 0
    %403 = vmatmul.mubr.bf16.gmra.mrb[0].mxu0 %v369
    %v404 = vpop.f32.mrb[0].mxu0
    %v405 = vadd.f32 0.0, %v404
    %v406 = vpop.f32.mrb[0].mxu0
    %v407 = vadd.f32 0.0, %v406
    %v408 = vpop.f32.mrb[0].mxu0
    %v409 = vpop.f32.mrb[0].mxu0
    %410 = vdwg.mxu0
    %411 = vmatprep.subr.bf16.mxu0 %v193
    %412 = vmatpush1.bf16.msra.mxu0 %v192
    %413 = vmatprep.subr.bf16.mxu0 %v197
    %414 = vmatpush1.bf16.msra.mxu0 %v196
    %415 = vmatprep.subr.bf16.mxu0 %v201
    %416 = vmatpush1.bf16.msra.mxu0 %v200
    %417 = vmatprep.subr.bf16.mxu0 %v205
    %418 = vmatpush1.bf16.msra.mxu0 %v204
    %419 = vmatprep.subr.bf16.mxu0 %v209
    %420 = vmatpush1.bf16.msra.mxu0 %v208
    %421 = vmatprep.subr.bf16.mxu0 %v213
    %422 = vmatpush1.bf16.msra.mxu0 %v212
    %423 = vmatprep.subr.bf16.mxu0 %v217
    %424 = vmatpush1.bf16.msra.mxu0 %v216
    %425 = vmatprep.subr.bf16.mxu0 %v221
    %426 = vmatpush1.bf16.msra.mxu0 %v220
    %427 = vmatprep.subr.bf16.mxu0 0
    %428 = vmatpush1.bf16.msra.mxu0 0
    %429 = vmatprep.subr.bf16.mxu0 0
    %430 = vmatpush1.bf16.msra.mxu0 0
    %431 = vmatprep.subr.bf16.mxu0 0
    %432 = vmatpush1.bf16.msra.mxu0 0
    %433 = vmatprep.subr.bf16.mxu0 0
    %434 = vmatpush1.bf16.msra.mxu0 0
    %435 = vmatprep.subr.bf16.mxu0 0
    %436 = vmatpush1.bf16.msra.mxu0 0
    %437 = vmatprep.subr.bf16.mxu0 0
    %438 = vmatpush1.bf16.msra.mxu0 0
    %439 = vmatprep.subr.bf16.mxu0 0
    %440 = vmatpush1.bf16.msra.mxu0 0
    %441 = vmatprep.subr.bf16.mxu0 0
    %442 = vmatpush1.bf16.msra.mxu0 0
    %443 = vmatprep.mubr.bf16.mxu0 0
    %444 = vmatmul.mubr.bf16.gmra.mrb[0].mxu0 %v369
    %v445 = vpop.f32.mrb[0].mxu0
    %v446 = vadd.f32 0.0, %v445
    %v447 = vpop.f32.mrb[0].mxu0
    %v448 = vadd.f32 0.0, %v447
    %v449 = vpop.f32.mrb[0].mxu0
    %v450 = vpop.f32.mrb[0].mxu0
    %451 = vdwg.mxu0
    %v452 = vadd.f32 %v365, %v405
    %v453 = vadd.f32 %v366, %v407
    %v454 = vadd.f32 %v367, %v446
    %v455 = vadd.f32 %v368, %v448
    %v456 = vxor.u32 %v452, 2147483648
    %v457 = vxor.u32 %v453, 2147483648
    %v458 = vxor.u32 %v454, 2147483648
    %v459 = vmul.f32 %v456, 1.442695
    %v460 = vpow.pop %v459
    %v461 = vmul.f32 %v457, 1.442695
    %v462 = vpow.pop %v461
    %v463 = vmul.f32 %v458, 1.442695
    %v464 = vpow.pop %v463
    %v465 = vadd.f32 %v460, 1.0
    %v466 = vadd.f32 %v462, 1.0
    %v467 = vadd.f32 %v464, 1.0
    %v468 = vrcp.pop %v465
    %v469 = vmul.f32 1.0, %v468
    %v470 = vrcp.pop %v466
    %v471 = vmul.f32 1.0, %v470
    %v472 = vrcp.pop %v467
    %v473 = vmul.f32 1.0, %v472
    %v474 = vtanh.pop %v455
    %v475 = vmul.f32 %v471, %v361
    %v476 = vmul.f32 %v469, %v474
    %v477 = vadd.f32 %v475, %v476
    %v478 = vtanh.pop %v477
    %v479 = vmul.f32 %v473, %v478
    %s480 = scalar_lea.vmem %s0, 64
    %v481 = vld [vmem:[%s480] sm:$0xff]
    %v482 = vld [vmem:[%s480 + $0x8] sm:$0xff]
    %v483 = vld [vmem:[%s480 + $0x10] sm:$0xff]
    %v484 = vld [vmem:[%s480 + $0x18] sm:$0xff]
    %v485 = vpack.c.bf16 %v479, %v479
    %486 = vmatprep.subr.bf16.mxu0 %v191
    %487 = vmatpush1.bf16.msra.mxu0 %v190
    %488 = vmatprep.subr.bf16.mxu0 %v195
    %489 = vmatpush1.bf16.msra.mxu0 %v194
    %490 = vmatprep.subr.bf16.mxu0 %v199
    %491 = vmatpush1.bf16.msra.mxu0 %v198
    %492 = vmatprep.subr.bf16.mxu0 %v203
    %493 = vmatpush1.bf16.msra.mxu0 %v202
    %494 = vmatprep.subr.bf16.mxu0 %v207
    %495 = vmatpush1.bf16.msra.mxu0 %v206
    %496 = vmatprep.subr.bf16.mxu0 %v211
    %497 = vmatpush1.bf16.msra.mxu0 %v210
    %498 = vmatprep.subr.bf16.mxu0 %v215
    %499 = vmatpush1.bf16.msra.mxu0 %v214
    %500 = vmatprep.subr.bf16.mxu0 %v219
    %501 = vmatpush1.bf16.msra.mxu0 %v218
    %502 = vmatprep.subr.bf16.mxu0 0
    %503 = vmatpush1.bf16.msra.mxu0 0
    %504 = vmatprep.subr.bf16.mxu0 0
    %505 = vmatpush1.bf16.msra.mxu0 0
    %506 = vmatprep.subr.bf16.mxu0 0
    %507 = vmatpush1.bf16.msra.mxu0 0
    %508 = vmatprep.subr.bf16.mxu0 0
    %509 = vmatpush1.bf16.msra.mxu0 0
    %510 = vmatprep.subr.bf16.mxu0 0
    %511 = vmatpush1.bf16.msra.mxu0 0
    %512 = vmatprep.subr.bf16.mxu0 0
    %513 = vmatpush1.bf16.msra.mxu0 0
    %514 = vmatprep.subr.bf16.mxu0 0
    %515 = vmatpush1.bf16.msra.mxu0 0
    %516 = vmatprep.subr.bf16.mxu0 0
    %517 = vmatpush1.bf16.msra.mxu0 0
    %518 = vmatprep.mubr.bf16.mxu0 0
    %519 = vmatmul.mubr.bf16.gmra.mrb[0].mxu0 %v485
    %v520 = vpop.f32.mrb[0].mxu0
    %v521 = vadd.f32 0.0, %v520
    %v522 = vpop.f32.mrb[0].mxu0
    %v523 = vadd.f32 0.0, %v522
    %v524 = vpop.f32.mrb[0].mxu0
    %v525 = vpop.f32.mrb[0].mxu0
    %526 = vdwg.mxu0
    %527 = vmatprep.subr.bf16.mxu0 %v193
    %528 = vmatpush1.bf16.msra.mxu0 %v192
    %529 = vmatprep.subr.bf16.mxu0 %v197
    %530 = vmatpush1.bf16.msra.mxu0 %v196
    %531 = vmatprep.subr.bf16.mxu0 %v201
    %532 = vmatpush1.bf16.msra.mxu0 %v200
    %533 = vmatprep.subr.bf16.mxu0 %v205
    %534 = vmatpush1.bf16.msra.mxu0 %v204
    %535 = vmatprep.subr.bf16.mxu0 %v209
    %536 = vmatpush1.bf16.msra.mxu0 %v208
    %537 = vmatprep.subr.bf16.mxu0 %v213
    %538 = vmatpush1.bf16.msra.mxu0 %v212
    %539 = vmatprep.subr.bf16.mxu0 %v217
    %540 = vmatpush1.bf16.msra.mxu0 %v216
    %541 = vmatprep.subr.bf16.mxu0 %v221
    %542 = vmatpush1.bf16.msra.mxu0 %v220
    %543 = vmatprep.subr.bf16.mxu0 0
    %544 = vmatpush1.bf16.msra.mxu0 0
    %545 = vmatprep.subr.bf16.mxu0 0
    %546 = vmatpush1.bf16.msra.mxu0 0
    %547 = vmatprep.subr.bf16.mxu0 0
    %548 = vmatpush1.bf16.msra.mxu0 0
    %549 = vmatprep.subr.bf16.mxu0 0
    %550 = vmatpush1.bf16.msra.mxu0 0
    %551 = vmatprep.subr.bf16.mxu0 0
    %552 = vmatpush1.bf16.msra.mxu0 0
    %553 = vmatprep.subr.bf16.mxu0 0
    %554 = vmatpush1.bf16.msra.mxu0 0
    %555 = vmatprep.subr.bf16.mxu0 0
    %556 = vmatpush1.bf16.msra.mxu0 0
    %557 = vmatprep.subr.bf16.mxu0 0
    %558 = vmatpush1.bf16.msra.mxu0 0
    %559 = vmatprep.mubr.bf16.mxu0 0
    %560 = vmatmul.mubr.bf16.gmra.mrb[0].mxu0 %v485
    %v561 = vpop.f32.mrb[0].mxu0
    %v562 = vadd.f32 0.0, %v561
    %v563 = vpop.f32.mrb[0].mxu0
    %v564 = vadd.f32 0.0, %v563
    %v565 = vpop.f32.mrb[0].mxu0
    %v566 = vpop.f32.mrb[0].mxu0
    %567 = vdwg.mxu0
    %v568 = vadd.f32 %v481, %v521
    %v569 = vadd.f32 %v482, %v523
    %v570 = vadd.f32 %v483, %v562
    %v571 = vadd.f32 %v484, %v564
    %v572 = vxor.u32 %v568, 2147483648
    %v573 = vxor.u32 %v569, 2147483648
    %v574 = vxor.u32 %v570, 2147483648
    %v575 = vmul.f32 %v572, 1.442695
    %v576 = vpow.pop %v575
    %v577 = vmul.f32 %v573, 1.442695
    %v578 = vpow.pop %v577
    %v579 = vmul.f32 %v574, 1.442695
    %v580 = vpow.pop %v579
    %v581 = vadd.f32 %v576, 1.0
    %v582 = vadd.f32 %v578, 1.0
    %v583 = vadd.f32 %v580, 1.0
    %v584 = vrcp.pop %v581
    %v585 = vmul.f32 1.0, %v584
    %v586 = vrcp.pop %v582
    %v587 = vmul.f32 1.0, %v586
    %v588 = vrcp.pop %v583
    %v589 = vmul.f32 1.0, %v588
    %v590 = vtanh.pop %v571
    %v591 = vmul.f32 %v587, %v477
    %v592 = vmul.f32 %v585, %v590
    %v593 = vadd.f32 %v591, %v592
    %v594 = vtanh.pop %v593
    %v595 = vmul.f32 %v589, %v594
    %s596 = scalar_lea.vmem %s0, 96
    %v597 = vld [vmem:[%s596] sm:$0xff]
    %v598 = vld [vmem:[%s596 + $0x8] sm:$0xff]
    %v599 = vld [vmem:[%s596 + $0x10] sm:$0xff]
    %v600 = vld [vmem:[%s596 + $0x18] sm:$0xff]
    %v601 = vpack.c.bf16 %v595, %v595
    %602 = vmatprep.subr.bf16.mxu0 %v191
    %603 = vmatpush1.bf16.msra.mxu0 %v190
    %604 = vmatprep.subr.bf16.mxu0 %v195
    %605 = vmatpush1.bf16.msra.mxu0 %v194
    %606 = vmatprep.subr.bf16.mxu0 %v199
    %607 = vmatpush1.bf16.msra.mxu0 %v198
    %608 = vmatprep.subr.bf16.mxu0 %v203
    %609 = vmatpush1.bf16.msra.mxu0 %v202
    %610 = vmatprep.subr.bf16.mxu0 %v207
    %611 = vmatpush1.bf16.msra.mxu0 %v206
    %612 = vmatprep.subr.bf16.mxu0 %v211
    %613 = vmatpush1.bf16.msra.mxu0 %v210
    %614 = vmatprep.subr.bf16.mxu0 %v215
    %615 = vmatpush1.bf16.msra.mxu0 %v214
    %616 = vmatprep.subr.bf16.mxu0 %v219
    %617 = vmatpush1.bf16.msra.mxu0 %v218
    %618 = vmatprep.subr.bf16.mxu0 0
    %619 = vmatpush1.bf16.msra.mxu0 0
    %620 = vmatprep.subr.bf16.mxu0 0
    %621 = vmatpush1.bf16.msra.mxu0 0
    %622 = vmatprep.subr.bf16.mxu0 0
    %623 = vmatpush1.bf16.msra.mxu0 0
    %624 = vmatprep.subr.bf16.mxu0 0
    %625 = vmatpush1.bf16.msra.mxu0 0
    %626 = vmatprep.subr.bf16.mxu0 0
    %627 = vmatpush1.bf16.msra.mxu0 0
    %628 = vmatprep.subr.bf16.mxu0 0
    %629 = vmatpush1.bf16.msra.mxu0 0
    %630 = vmatprep.subr.bf16.mxu0 0
    %631 = vmatpush1.bf16.msra.mxu0 0
    %632 = vmatprep.subr.bf16.mxu0 0
    %633 = vmatpush1.bf16.msra.mxu0 0
    %634 = vmatprep.mubr.bf16.mxu0 0
    %635 = vmatmul.mubr.bf16.gmra.mrb[0].mxu0 %v601
    %v636 = vpop.f32.mrb[0].mxu0
    %v637 = vadd.f32 0.0, %v636
    %v638 = vpop.f32.mrb[0].mxu0
    %v639 = vadd.f32 0.0, %v638
    %v640 = vpop.f32.mrb[0].mxu0
    %v641 = vpop.f32.mrb[0].mxu0
    %642 = vdwg.mxu0
    %643 = vmatprep.subr.bf16.mxu0 %v193
    %644 = vmatpush1.bf16.msra.mxu0 %v192
    %645 = vmatprep.subr.bf16.mxu0 %v197
    %646 = vmatpush1.bf16.msra.mxu0 %v196
    %647 = vmatprep.subr.bf16.mxu0 %v201
    %648 = vmatpush1.bf16.msra.mxu0 %v200
    %649 = vmatprep.subr.bf16.mxu0 %v205
    %650 = vmatpush1.bf16.msra.mxu0 %v204
    %651 = vmatprep.subr.bf16.mxu0 %v209
    %652 = vmatpush1.bf16.msra.mxu0 %v208
    %653 = vmatprep.subr.bf16.mxu0 %v213
    %654 = vmatpush1.bf16.msra.mxu0 %v212
    %655 = vmatprep.subr.bf16.mxu0 %v217
    %656 = vmatpush1.bf16.msra.mxu0 %v216
    %657 = vmatprep.subr.bf16.mxu0 %v221
    %658 = vmatpush1.bf16.msra.mxu0 %v220
    %659 = vmatprep.subr.bf16.mxu0 0
    %660 = vmatpush1.bf16.msra.mxu0 0
    %661 = vmatprep.subr.bf16.mxu0 0
    %662 = vmatpush1.bf16.msra.mxu0 0
    %663 = vmatprep.subr.bf16.mxu0 0
    %664 = vmatpush1.bf16.msra.mxu0 0
    %665 = vmatprep.subr.bf16.mxu0 0
    %666 = vmatpush1.bf16.msra.mxu0 0
    %667 = vmatprep.subr.bf16.mxu0 0
    %668 = vmatpush1.bf16.msra.mxu0 0
    %669 = vmatprep.subr.bf16.mxu0 0
    %670 = vmatpush1.bf16.msra.mxu0 0
    %671 = vmatprep.subr.bf16.mxu0 0
    %672 = vmatpush1.bf16.msra.mxu0 0
    %673 = vmatprep.subr.bf16.mxu0 0
    %674 = vmatpush1.bf16.msra.mxu0 0
    %675 = vmatprep.mubr.bf16.mxu0 0
    %676 = vmatmul.mubr.bf16.gmra.mrb[0].mxu0 %v601
    %v677 = vpop.f32.mrb[0].mxu0
    %v678 = vadd.f32 0.0, %v677
    %v679 = vpop.f32.mrb[0].mxu0
    %v680 = vadd.f32 0.0, %v679
    %v681 = vpop.f32.mrb[0].mxu0
    %v682 = vpop.f32.mrb[0].mxu0
    %683 = vdwg.mxu0
    %v684 = vadd.f32 %v597, %v637
    %v685 = vadd.f32 %v598, %v639
    %v686 = vadd.f32 %v599, %v678
    %v687 = vadd.f32 %v600, %v680
    %v688 = vxor.u32 %v684, 2147483648
    %v689 = vxor.u32 %v685, 2147483648
    %v690 = vxor.u32 %v686, 2147483648
    %v691 = vmul.f32 %v688, 1.442695
    %v692 = vpow.pop %v691
    %v693 = vmul.f32 %v689, 1.442695
    %v694 = vpow.pop %v693
    %v695 = vmul.f32 %v690, 1.442695
    %v696 = vpow.pop %v695
    %v697 = vadd.f32 %v692, 1.0
    %v698 = vadd.f32 %v694, 1.0
    %v699 = vadd.f32 %v696, 1.0
    %v700 = vrcp.pop %v697
    %v701 = vmul.f32 1.0, %v700
    %v702 = vrcp.pop %v698
    %v703 = vmul.f32 1.0, %v702
    %v704 = vrcp.pop %v699
    %v705 = vmul.f32 1.0, %v704
    %v706 = vtanh.pop %v687
    %v707 = vmul.f32 %v703, %v593
    %v708 = vmul.f32 %v701, %v706
    %v709 = vadd.f32 %v707, %v708
    %v710 = vtanh.pop %v709
    %v711 = vmul.f32 %v705, %v710
    %s712 = scalar_lea.vmem %s0, 128
    %v713 = vld [vmem:[%s712] sm:$0xff]
    %v714 = vld [vmem:[%s712 + $0x8] sm:$0xff]
    %v715 = vld [vmem:[%s712 + $0x10] sm:$0xff]
    %v716 = vld [vmem:[%s712 + $0x18] sm:$0xff]
    %v717 = vpack.c.bf16 %v711, %v711
    %718 = vmatprep.subr.bf16.mxu0 %v191
    %719 = vmatpush1.bf16.msra.mxu0 %v190
    %720 = vmatprep.subr.bf16.mxu0 %v195
    %721 = vmatpush1.bf16.msra.mxu0 %v194
    %722 = vmatprep.subr.bf16.mxu0 %v199
    %723 = vmatpush1.bf16.msra.mxu0 %v198
    %724 = vmatprep.subr.bf16.mxu0 %v203
    %725 = vmatpush1.bf16.msra.mxu0 %v202
    %726 = vmatprep.subr.bf16.mxu0 %v207
    %727 = vmatpush1.bf16.msra.mxu0 %v206
    %728 = vmatprep.subr.bf16.mxu0 %v211
    %729 = vmatpush1.bf16.msra.mxu0 %v210
    %730 = vmatprep.subr.bf16.mxu0 %v215
    %731 = vmatpush1.bf16.msra.mxu0 %v214
    %732 = vmatprep.subr.bf16.mxu0 %v219
    %733 = vmatpush1.bf16.msra.mxu0 %v218
    %734 = vmatprep.subr.bf16.mxu0 0
    %735 = vmatpush1.bf16.msra.mxu0 0
    %736 = vmatprep.subr.bf16.mxu0 0
    %737 = vmatpush1.bf16.msra.mxu0 0
    %738 = vmatprep.subr.bf16.mxu0 0
    %739 = vmatpush1.bf16.msra.mxu0 0
    %740 = vmatprep.subr.bf16.mxu0 0
    %741 = vmatpush1.bf16.msra.mxu0 0
    %742 = vmatprep.subr.bf16.mxu0 0
    %743 = vmatpush1.bf16.msra.mxu0 0
    %744 = vmatprep.subr.bf16.mxu0 0
    %745 = vmatpush1.bf16.msra.mxu0 0
    %746 = vmatprep.subr.bf16.mxu0 0
    %747 = vmatpush1.bf16.msra.mxu0 0
    %748 = vmatprep.subr.bf16.mxu0 0
    %749 = vmatpush1.bf16.msra.mxu0 0
    %750 = vmatprep.mubr.bf16.mxu0 0
    %751 = vmatmul.mubr.bf16.gmra.mrb[0].mxu0 %v717
    %v752 = vpop.f32.mrb[0].mxu0
    %v753 = vadd.f32 0.0, %v752
    %v754 = vpop.f32.mrb[0].mxu0
    %v755 = vadd.f32 0.0, %v754
    %v756 = vpop.f32.mrb[0].mxu0
    %v757 = vpop.f32.mrb[0].mxu0
    %758 = vdwg.mxu0
    %759 = vmatprep.subr.bf16.mxu0 %v193
    %760 = vmatpush1.bf16.msra.mxu0 %v192
    %761 = vmatprep.subr.bf16.mxu0 %v197
    %762 = vmatpush1.bf16.msra.mxu0 %v196
    %763 = vmatprep.subr.bf16.mxu0 %v201
    %764 = vmatpush1.bf16.msra.mxu0 %v200
    %765 = vmatprep.subr.bf16.mxu0 %v205
    %766 = vmatpush1.bf16.msra.mxu0 %v204
    %767 = vmatprep.subr.bf16.mxu0 %v209
    %768 = vmatpush1.bf16.msra.mxu0 %v208
    %769 = vmatprep.subr.bf16.mxu0 %v213
    %770 = vmatpush1.bf16.msra.mxu0 %v212
    %771 = vmatprep.subr.bf16.mxu0 %v217
    %772 = vmatpush1.bf16.msra.mxu0 %v216
    %773 = vmatprep.subr.bf16.mxu0 %v221
    %774 = vmatpush1.bf16.msra.mxu0 %v220
    %775 = vmatprep.subr.bf16.mxu0 0
    %776 = vmatpush1.bf16.msra.mxu0 0
    %777 = vmatprep.subr.bf16.mxu0 0
    %778 = vmatpush1.bf16.msra.mxu0 0
    %779 = vmatprep.subr.bf16.mxu0 0
    %780 = vmatpush1.bf16.msra.mxu0 0
    %781 = vmatprep.subr.bf16.mxu0 0
    %782 = vmatpush1.bf16.msra.mxu0 0
    %783 = vmatprep.subr.bf16.mxu0 0
    %784 = vmatpush1.bf16.msra.mxu0 0
    %785 = vmatprep.subr.bf16.mxu0 0
    %786 = vmatpush1.bf16.msra.mxu0 0
    %787 = vmatprep.subr.bf16.mxu0 0
    %788 = vmatpush1.bf16.msra.mxu0 0
    %789 = vmatprep.subr.bf16.mxu0 0
    %790 = vmatpush1.bf16.msra.mxu0 0
    %791 = vmatprep.mubr.bf16.mxu0 0
    %792 = vmatmul.mubr.bf16.gmra.mrb[0].mxu0 %v717
    %v793 = vpop.f32.mrb[0].mxu0
    %v794 = vadd.f32 0.0, %v793
    %v795 = vpop.f32.mrb[0].mxu0
    %v796 = vadd.f32 0.0, %v795
    %v797 = vpop.f32.mrb[0].mxu0
    %v798 = vpop.f32.mrb[0].mxu0
    %799 = vdwg.mxu0
    %v800 = vadd.f32 %v713, %v753
    %v801 = vadd.f32 %v714, %v755
    %v802 = vadd.f32 %v715, %v794
    %v803 = vadd.f32 %v716, %v796
    %v804 = vxor.u32 %v800, 2147483648
    %v805 = vxor.u32 %v801, 2147483648
    %v806 = vxor.u32 %v802, 2147483648
    %v807 = vmul.f32 %v804, 1.442695
    %v808 = vpow.pop %v807
    %v809 = vmul.f32 %v805, 1.442695
    %v810 = vpow.pop %v809
    %v811 = vmul.f32 %v806, 1.442695
    %v812 = vpow.pop %v811
    %v813 = vadd.f32 %v808, 1.0
    %v814 = vadd.f32 %v810, 1.0
    %v815 = vadd.f32 %v812, 1.0
    %v816 = vrcp.pop %v813
    %v817 = vmul.f32 1.0, %v816
    %v818 = vrcp.pop %v814
    %v819 = vmul.f32 1.0, %v818
    %v820 = vrcp.pop %v815
    %v821 = vmul.f32 1.0, %v820
    %v822 = vtanh.pop %v803
    %v823 = vmul.f32 %v819, %v709
    %v824 = vmul.f32 %v817, %v822
    %v825 = vadd.f32 %v823, %v824
    %v826 = vtanh.pop %v825
    %v827 = vmul.f32 %v821, %v826
    %s828 = scalar_lea.vmem %s0, 160
    %v829 = vld [vmem:[%s828] sm:$0xff]
    %v830 = vld [vmem:[%s828 + $0x8] sm:$0xff]
    %v831 = vld [vmem:[%s828 + $0x10] sm:$0xff]
    %v832 = vld [vmem:[%s828 + $0x18] sm:$0xff]
    %v833 = vpack.c.bf16 %v827, %v827
    %834 = vmatprep.subr.bf16.mxu0 %v191
    %835 = vmatpush1.bf16.msra.mxu0 %v190
    %836 = vmatprep.subr.bf16.mxu0 %v195
    %837 = vmatpush1.bf16.msra.mxu0 %v194
    %838 = vmatprep.subr.bf16.mxu0 %v199
    %839 = vmatpush1.bf16.msra.mxu0 %v198
    %840 = vmatprep.subr.bf16.mxu0 %v203
    %841 = vmatpush1.bf16.msra.mxu0 %v202
    %842 = vmatprep.subr.bf16.mxu0 %v207
    %843 = vmatpush1.bf16.msra.mxu0 %v206
    %844 = vmatprep.subr.bf16.mxu0 %v211
    %845 = vmatpush1.bf16.msra.mxu0 %v210
    %846 = vmatprep.subr.bf16.mxu0 %v215
    %847 = vmatpush1.bf16.msra.mxu0 %v214
    %848 = vmatprep.subr.bf16.mxu0 %v219
    %849 = vmatpush1.bf16.msra.mxu0 %v218
    %850 = vmatprep.subr.bf16.mxu0 0
    %851 = vmatpush1.bf16.msra.mxu0 0
    %852 = vmatprep.subr.bf16.mxu0 0
    %853 = vmatpush1.bf16.msra.mxu0 0
    %854 = vmatprep.subr.bf16.mxu0 0
    %855 = vmatpush1.bf16.msra.mxu0 0
    %856 = vmatprep.subr.bf16.mxu0 0
    %857 = vmatpush1.bf16.msra.mxu0 0
    %858 = vmatprep.subr.bf16.mxu0 0
    %859 = vmatpush1.bf16.msra.mxu0 0
    %860 = vmatprep.subr.bf16.mxu0 0
    %861 = vmatpush1.bf16.msra.mxu0 0
    %862 = vmatprep.subr.bf16.mxu0 0
    %863 = vmatpush1.bf16.msra.mxu0 0
    %864 = vmatprep.subr.bf16.mxu0 0
    %865 = vmatpush1.bf16.msra.mxu0 0
    %866 = vmatprep.mubr.bf16.mxu0 0
    %867 = vmatmul.mubr.bf16.gmra.mrb[0].mxu0 %v833
    %v868 = vpop.f32.mrb[0].mxu0
    %v869 = vadd.f32 0.0, %v868
    %v870 = vpop.f32.mrb[0].mxu0
    %v871 = vadd.f32 0.0, %v870
    %v872 = vpop.f32.mrb[0].mxu0
    %v873 = vpop.f32.mrb[0].mxu0
    %874 = vdwg.mxu0
    %875 = vmatprep.subr.bf16.mxu0 %v193
    %876 = vmatpush1.bf16.msra.mxu0 %v192
    %877 = vmatprep.subr.bf16.mxu0 %v197
    %878 = vmatpush1.bf16.msra.mxu0 %v196
    %879 = vmatprep.subr.bf16.mxu0 %v201
    %880 = vmatpush1.bf16.msra.mxu0 %v200
    %881 = vmatprep.subr.bf16.mxu0 %v205
    %882 = vmatpush1.bf16.msra.mxu0 %v204
    %883 = vmatprep.subr.bf16.mxu0 %v209
    %884 = vmatpush1.bf16.msra.mxu0 %v208
    %885 = vmatprep.subr.bf16.mxu0 %v213
    %886 = vmatpush1.bf16.msra.mxu0 %v212
    %887 = vmatprep.subr.bf16.mxu0 %v217
    %888 = vmatpush1.bf16.msra.mxu0 %v216
    %889 = vmatprep.subr.bf16.mxu0 %v221
    %890 = vmatpush1.bf16.msra.mxu0 %v220
    %891 = vmatprep.subr.bf16.mxu0 0
    %892 = vmatpush1.bf16.msra.mxu0 0
    %893 = vmatprep.subr.bf16.mxu0 0
    %894 = vmatpush1.bf16.msra.mxu0 0
    %895 = vmatprep.subr.bf16.mxu0 0
    %896 = vmatpush1.bf16.msra.mxu0 0
    %897 = vmatprep.subr.bf16.mxu0 0
    %898 = vmatpush1.bf16.msra.mxu0 0
    %899 = vmatprep.subr.bf16.mxu0 0
    %900 = vmatpush1.bf16.msra.mxu0 0
    %901 = vmatprep.subr.bf16.mxu0 0
    %902 = vmatpush1.bf16.msra.mxu0 0
    %903 = vmatprep.subr.bf16.mxu0 0
    %904 = vmatpush1.bf16.msra.mxu0 0
    %905 = vmatprep.subr.bf16.mxu0 0
    %906 = vmatpush1.bf16.msra.mxu0 0
    %907 = vmatprep.mubr.bf16.mxu0 0
    %908 = vmatmul.mubr.bf16.gmra.mrb[0].mxu0 %v833
    %v909 = vpop.f32.mrb[0].mxu0
    %v910 = vadd.f32 0.0, %v909
    %v911 = vpop.f32.mrb[0].mxu0
    %v912 = vadd.f32 0.0, %v911
    %v913 = vpop.f32.mrb[0].mxu0
    %v914 = vpop.f32.mrb[0].mxu0
    %915 = vdwg.mxu0
    %v916 = vadd.f32 %v829, %v869
    %v917 = vadd.f32 %v830, %v871
    %v918 = vadd.f32 %v831, %v910
    %v919 = vadd.f32 %v832, %v912
    %v920 = vxor.u32 %v916, 2147483648
    %v921 = vxor.u32 %v917, 2147483648
    %v922 = vxor.u32 %v918, 2147483648
    %v923 = vmul.f32 %v920, 1.442695
    %v924 = vpow.pop %v923
    %v925 = vmul.f32 %v921, 1.442695
    %v926 = vpow.pop %v925
    %v927 = vmul.f32 %v922, 1.442695
    %v928 = vpow.pop %v927
    %v929 = vadd.f32 %v924, 1.0
    %v930 = vadd.f32 %v926, 1.0
    %v931 = vadd.f32 %v928, 1.0
    %v932 = vrcp.pop %v929
    %v933 = vmul.f32 1.0, %v932
    %v934 = vrcp.pop %v930
    %v935 = vmul.f32 1.0, %v934
    %v936 = vrcp.pop %v931
    %v937 = vmul.f32 1.0, %v936
    %v938 = vtanh.pop %v919
    %v939 = vmul.f32 %v935, %v825
    %v940 = vmul.f32 %v933, %v938
    %v941 = vadd.f32 %v939, %v940
    %v942 = vtanh.pop %v941
    %v943 = vmul.f32 %v937, %v942
    %s944 = scalar_lea.vmem %s0, 192
    %v945 = vld [vmem:[%s944] sm:$0xff]
    %v946 = vld [vmem:[%s944 + $0x8] sm:$0xff]
    %v947 = vld [vmem:[%s944 + $0x10] sm:$0xff]
    %v948 = vld [vmem:[%s944 + $0x18] sm:$0xff]
    %v949 = vpack.c.bf16 %v943, %v943
    %950 = vmatprep.subr.bf16.mxu0 %v191
    %951 = vmatpush1.bf16.msra.mxu0 %v190
    %952 = vmatprep.subr.bf16.mxu0 %v195
    %953 = vmatpush1.bf16.msra.mxu0 %v194
    %954 = vmatprep.subr.bf16.mxu0 %v199
    %955 = vmatpush1.bf16.msra.mxu0 %v198
    %956 = vmatprep.subr.bf16.mxu0 %v203
    %957 = vmatpush1.bf16.msra.mxu0 %v202
    %958 = vmatprep.subr.bf16.mxu0 %v207
    %959 = vmatpush1.bf16.msra.mxu0 %v206
    %960 = vmatprep.subr.bf16.mxu0 %v211
    %961 = vmatpush1.bf16.msra.mxu0 %v210
    %962 = vmatprep.subr.bf16.mxu0 %v215
    %963 = vmatpush1.bf16.msra.mxu0 %v214
    %964 = vmatprep.subr.bf16.mxu0 %v219
    %965 = vmatpush1.bf16.msra.mxu0 %v218
    %966 = vmatprep.subr.bf16.mxu0 0
    %967 = vmatpush1.bf16.msra.mxu0 0
    %968 = vmatprep.subr.bf16.mxu0 0
    %969 = vmatpush1.bf16.msra.mxu0 0
    %970 = vmatprep.subr.bf16.mxu0 0
    %971 = vmatpush1.bf16.msra.mxu0 0
    %972 = vmatprep.subr.bf16.mxu0 0
    %973 = vmatpush1.bf16.msra.mxu0 0
    %974 = vmatprep.subr.bf16.mxu0 0
    %975 = vmatpush1.bf16.msra.mxu0 0
    %976 = vmatprep.subr.bf16.mxu0 0
    %977 = vmatpush1.bf16.msra.mxu0 0
    %978 = vmatprep.subr.bf16.mxu0 0
    %979 = vmatpush1.bf16.msra.mxu0 0
    %980 = vmatprep.subr.bf16.mxu0 0
    %981 = vmatpush1.bf16.msra.mxu0 0
    %982 = vmatprep.mubr.bf16.mxu0 0
    %983 = vmatmul.mubr.bf16.gmra.mrb[0].mxu0 %v949
    %v984 = vpop.f32.mrb[0].mxu0
    %v985 = vadd.f32 0.0, %v984
    %v986 = vpop.f32.mrb[0].mxu0
    %v987 = vadd.f32 0.0, %v986
    %v988 = vpop.f32.mrb[0].mxu0
    %v989 = vpop.f32.mrb[0].mxu0
    %990 = vdwg.mxu0
    %991 = vmatprep.subr.bf16.mxu0 %v193
    %992 = vmatpush1.bf16.msra.mxu0 %v192
    %993 = vmatprep.subr.bf16.mxu0 %v197
    %994 = vmatpush1.bf16.msra.mxu0 %v196
    %995 = vmatprep.subr.bf16.mxu0 %v201
    %996 = vmatpush1.bf16.msra.mxu0 %v200
    %997 = vmatprep.subr.bf16.mxu0 %v205
    %998 = vmatpush1.bf16.msra.mxu0 %v204
    %999 = vmatprep.subr.bf16.mxu0 %v209
    %1000 = vmatpush1.bf16.msra.mxu0 %v208
    %1001 = vmatprep.subr.bf16.mxu0 %v213
    %1002 = vmatpush1.bf16.msra.mxu0 %v212
    %1003 = vmatprep.subr.bf16.mxu0 %v217
    %1004 = vmatpush1.bf16.msra.mxu0 %v216
    %1005 = vmatprep.subr.bf16.mxu0 %v221
    %1006 = vmatpush1.bf16.msra.mxu0 %v220
    %1007 = vmatprep.subr.bf16.mxu0 0
    %1008 = vmatpush1.bf16.msra.mxu0 0
    %1009 = vmatprep.subr.bf16.mxu0 0
    %1010 = vmatpush1.bf16.msra.mxu0 0
    %1011 = vmatprep.subr.bf16.mxu0 0
    %1012 = vmatpush1.bf16.msra.mxu0 0
    %1013 = vmatprep.subr.bf16.mxu0 0
    %1014 = vmatpush1.bf16.msra.mxu0 0
    %1015 = vmatprep.subr.bf16.mxu0 0
    %1016 = vmatpush1.bf16.msra.mxu0 0
    %1017 = vmatprep.subr.bf16.mxu0 0
    %1018 = vmatpush1.bf16.msra.mxu0 0
    %1019 = vmatprep.subr.bf16.mxu0 0
    %1020 = vmatpush1.bf16.msra.mxu0 0
    %1021 = vmatprep.subr.bf16.mxu0 0
    %1022 = vmatpush1.bf16.msra.mxu0 0
    %1023 = vmatprep.mubr.bf16.mxu0 0
    %1024 = vmatmul.mubr.bf16.gmra.mrb[0].mxu0 %v949
    %v1025 = vpop.f32.mrb[0].mxu0
    %v1026 = vadd.f32 0.0, %v1025
    %v1027 = vpop.f32.mrb[0].mxu0
    %v1028 = vadd.f32 0.0, %v1027
    %v1029 = vpop.f32.mrb[0].mxu0
    %v1030 = vpop.f32.mrb[0].mxu0
    %1031 = vdwg.mxu0
    %v1032 = vadd.f32 %v945, %v985
    %v1033 = vadd.f32 %v946, %v987
    %v1034 = vadd.f32 %v947, %v1026
    %v1035 = vadd.f32 %v948, %v1028
    %v1036 = vxor.u32 %v1032, 2147483648
    %v1037 = vxor.u32 %v1033, 2147483648
    %v1038 = vxor.u32 %v1034, 2147483648
    %v1039 = vmul.f32 %v1036, 1.442695
    %v1040 = vpow.pop %v1039
    %v1041 = vmul.f32 %v1037, 1.442695
    %v1042 = vpow.pop %v1041
    %v1043 = vmul.f32 %v1038, 1.442695
    %v1044 = vpow.pop %v1043
    %v1045 = vadd.f32 %v1040, 1.0
    %v1046 = vadd.f32 %v1042, 1.0
    %v1047 = vadd.f32 %v1044, 1.0
    %v1048 = vrcp.pop %v1045
    %v1049 = vmul.f32 1.0, %v1048
    %v1050 = vrcp.pop %v1046
    %v1051 = vmul.f32 1.0, %v1050
    %v1052 = vrcp.pop %v1047
    %v1053 = vmul.f32 1.0, %v1052
    %v1054 = vtanh.pop %v1035
    %v1055 = vmul.f32 %v1051, %v941
    %v1056 = vmul.f32 %v1049, %v1054
    %v1057 = vadd.f32 %v1055, %v1056
    %v1058 = vtanh.pop %v1057
    %v1059 = vmul.f32 %v1053, %v1058
    %s1060 = scalar_lea.vmem %s0, 224
    %v1061 = vld [vmem:[%s1060] sm:$0xff]
    %v1062 = vld [vmem:[%s1060 + $0x8] sm:$0xff]
    %v1063 = vld [vmem:[%s1060 + $0x10] sm:$0xff]
    %v1064 = vld [vmem:[%s1060 + $0x18] sm:$0xff]
    %v1065 = vpack.c.bf16 %v1059, %v1059
    %1066 = vmatprep.subr.bf16.mxu0 %v191
    %1067 = vmatpush1.bf16.msra.mxu0 %v190
    %1068 = vmatprep.subr.bf16.mxu0 %v195
    %1069 = vmatpush1.bf16.msra.mxu0 %v194
    %1070 = vmatprep.subr.bf16.mxu0 %v199
    %1071 = vmatpush1.bf16.msra.mxu0 %v198
    %1072 = vmatprep.subr.bf16.mxu0 %v203
    %1073 = vmatpush1.bf16.msra.mxu0 %v202
    %1074 = vmatprep.subr.bf16.mxu0 %v207
    %1075 = vmatpush1.bf16.msra.mxu0 %v206
    %1076 = vmatprep.subr.bf16.mxu0 %v211
    %1077 = vmatpush1.bf16.msra.mxu0 %v210
    %1078 = vmatprep.subr.bf16.mxu0 %v215
    %1079 = vmatpush1.bf16.msra.mxu0 %v214
    %1080 = vmatprep.subr.bf16.mxu0 %v219
    %1081 = vmatpush1.bf16.msra.mxu0 %v218
    %1082 = vmatprep.subr.bf16.mxu0 0
    %1083 = vmatpush1.bf16.msra.mxu0 0
    %1084 = vmatprep.subr.bf16.mxu0 0
    %1085 = vmatpush1.bf16.msra.mxu0 0
    %1086 = vmatprep.subr.bf16.mxu0 0
    %1087 = vmatpush1.bf16.msra.mxu0 0
    %1088 = vmatprep.subr.bf16.mxu0 0
    %1089 = vmatpush1.bf16.msra.mxu0 0
    %1090 = vmatprep.subr.bf16.mxu0 0
    %1091 = vmatpush1.bf16.msra.mxu0 0
    %1092 = vmatprep.subr.bf16.mxu0 0
    %1093 = vmatpush1.bf16.msra.mxu0 0
    %1094 = vmatprep.subr.bf16.mxu0 0
    %1095 = vmatpush1.bf16.msra.mxu0 0
    %1096 = vmatprep.subr.bf16.mxu0 0
    %1097 = vmatpush1.bf16.msra.mxu0 0
    %1098 = vmatprep.mubr.bf16.mxu0 0
    %1099 = vmatmul.mubr.bf16.gmra.mrb[0].mxu0 %v1065
    %v1100 = vpop.f32.mrb[0].mxu0
    %v1101 = vadd.f32 0.0, %v1100
    %v1102 = vpop.f32.mrb[0].mxu0
    %v1103 = vadd.f32 0.0, %v1102
    %v1104 = vpop.f32.mrb[0].mxu0
    %v1105 = vpop.f32.mrb[0].mxu0
    %1106 = vdwg.mxu0
    %1107 = vmatprep.subr.bf16.mxu0 %v193
    %1108 = vmatpush1.bf16.msra.mxu0 %v192
    %1109 = vmatprep.subr.bf16.mxu0 %v197
    %1110 = vmatpush1.bf16.msra.mxu0 %v196
    %1111 = vmatprep.subr.bf16.mxu0 %v201
    %1112 = vmatpush1.bf16.msra.mxu0 %v200
    %1113 = vmatprep.subr.bf16.mxu0 %v205
    %1114 = vmatpush1.bf16.msra.mxu0 %v204
    %1115 = vmatprep.subr.bf16.mxu0 %v209
    %1116 = vmatpush1.bf16.msra.mxu0 %v208
    %1117 = vmatprep.subr.bf16.mxu0 %v213
    %1118 = vmatpush1.bf16.msra.mxu0 %v212
    %1119 = vmatprep.subr.bf16.mxu0 %v217
    %1120 = vmatpush1.bf16.msra.mxu0 %v216
    %1121 = vmatprep.subr.bf16.mxu0 %v221
    %1122 = vmatpush1.bf16.msra.mxu0 %v220
    %1123 = vmatprep.subr.bf16.mxu0 0
    %1124 = vmatpush1.bf16.msra.mxu0 0
    %1125 = vmatprep.subr.bf16.mxu0 0
    %1126 = vmatpush1.bf16.msra.mxu0 0
    %1127 = vmatprep.subr.bf16.mxu0 0
    %1128 = vmatpush1.bf16.msra.mxu0 0
    %1129 = vmatprep.subr.bf16.mxu0 0
    %1130 = vmatpush1.bf16.msra.mxu0 0
    %1131 = vmatprep.subr.bf16.mxu0 0
    %1132 = vmatpush1.bf16.msra.mxu0 0
    %1133 = vmatprep.subr.bf16.mxu0 0
    %1134 = vmatpush1.bf16.msra.mxu0 0
    %1135 = vmatprep.subr.bf16.mxu0 0
    %1136 = vmatpush1.bf16.msra.mxu0 0
    %1137 = vmatprep.subr.bf16.mxu0 0
    %1138 = vmatpush1.bf16.msra.mxu0 0
    %1139 = vmatprep.mubr.bf16.mxu0 0
    %1140 = vmatmul.mubr.bf16.gmra.mrb[0].mxu0 %v1065
    %v1141 = vpop.f32.mrb[0].mxu0
    %v1142 = vadd.f32 0.0, %v1141
    %v1143 = vpop.f32.mrb[0].mxu0
    %v1144 = vadd.f32 0.0, %v1143
    %v1145 = vpop.f32.mrb[0].mxu0
    %v1146 = vpop.f32.mrb[0].mxu0
    %1147 = vdwg.mxu0
    %v1148 = vadd.f32 %v1061, %v1101
    %v1149 = vadd.f32 %v1062, %v1103
    %v1150 = vadd.f32 %v1063, %v1142
    %v1151 = vadd.f32 %v1064, %v1144
    %v1152 = vxor.u32 %v1148, 2147483648
    %v1153 = vxor.u32 %v1149, 2147483648
    %v1154 = vxor.u32 %v1150, 2147483648
    %v1155 = vmul.f32 %v1152, 1.442695
    %v1156 = vpow.pop %v1155
    %v1157 = vmul.f32 %v1153, 1.442695
    %v1158 = vpow.pop %v1157
    %v1159 = vmul.f32 %v1154, 1.442695
    %v1160 = vpow.pop %v1159
    %v1161 = vadd.f32 %v1156, 1.0
    %v1162 = vadd.f32 %v1158, 1.0
    %v1163 = vadd.f32 %v1160, 1.0
    %v1164 = vrcp.pop %v1161
    %v1165 = vmul.f32 1.0, %v1164
    %v1166 = vrcp.pop %v1162
    %v1167 = vmul.f32 1.0, %v1166
    %v1168 = vrcp.pop %v1163
    %v1169 = vmul.f32 1.0, %v1168
    %v1170 = vtanh.pop %v1151
    %v1171 = vmul.f32 %v1167, %v1057
    %v1172 = vmul.f32 %v1165, %v1170
    %v1173 = vadd.f32 %v1171, %v1172
    %v1174 = vtanh.pop %v1173
    %v1175 = vmul.f32 %v1169, %v1174
    %v1176 = vpack.c.bf16 %v1175, %v1175
    %v1177 = vld [vmem:[#allocation2] sm:$0xff]
    %v1178 = vld [vmem:[#allocation2 + $0x8] sm:$0xff]
    %v1179 = vld [vmem:[#allocation2 + $0x10] sm:$0xff]
    %v1180 = vld [vmem:[#allocation2 + $0x18] sm:$0xff]
    %v1181 = vld [vmem:[#allocation2 + $0x20] sm:$0xff]
    %v1182 = vld [vmem:[#allocation2 + $0x28] sm:$0xff]
    %v1183 = vld [vmem:[#allocation2 + $0x30] sm:$0xff]
    %v1184 = vld [vmem:[#allocation2 + $0x38] sm:$0xff]
    %v1185 = vld [vmem:[#allocation2 + $0x40] sm:$0xff]
    %v1186 = vld [vmem:[#allocation2 + $0x48] sm:$0xff]
    %v1187 = vld [vmem:[#allocation2 + $0x50] sm:$0xff]
    %v1188 = vld [vmem:[#allocation2 + $0x58] sm:$0xff]
    %v1189 = vld [vmem:[#allocation2 + $0x60] sm:$0xff]
    %v1190 = vld [vmem:[#allocation2 + $0x68] sm:$0xff]
    %v1191 = vld [vmem:[#allocation2 + $0x70] sm:$0xff]
    %v1192 = vld [vmem:[#allocation2 + $0x78] sm:$0xff]
    %v1193 = vld [vmem:[#allocation2 + $0x80] sm:$0xff]
    %v1194 = vld [vmem:[#allocation2 + $0x88] sm:$0xff]
    %v1195 = vld [vmem:[#allocation2 + $0x90] sm:$0xff]
    %v1196 = vld [vmem:[#allocation2 + $0x98] sm:$0xff]
    %v1197 = vld [vmem:[#allocation2 + $0xa0] sm:$0xff]
    %v1198 = vld [vmem:[#allocation2 + $0xa8] sm:$0xff]
    %v1199 = vld [vmem:[#allocation2 + $0xb0] sm:$0xff]
    %v1200 = vld [vmem:[#allocation2 + $0xb8] sm:$0xff]
    %v1201 = vld [vmem:[#allocation2 + $0xc0] sm:$0xff]
    %v1202 = vld [vmem:[#allocation2 + $0xc8] sm:$0xff]
    %v1203 = vld [vmem:[#allocation2 + $0xd0] sm:$0xff]
    %v1204 = vld [vmem:[#allocation2 + $0xd8] sm:$0xff]
    %v1205 = vld [vmem:[#allocation2 + $0xe0] sm:$0xff]
    %v1206 = vld [vmem:[#allocation2 + $0xe8] sm:$0xff]
    %v1207 = vld [vmem:[#allocation2 + $0xf0] sm:$0xff]
    %v1208 = vld [vmem:[#allocation2 + $0xf8] sm:$0xff]
    %v1209 = vld [vmem:[#allocation2 + $0x100] sm:$0xff]
    %v1210 = vld [vmem:[#allocation2 + $0x108] sm:$0xff]
    %v1211 = vld [vmem:[#allocation2 + $0x110] sm:$0xff]
    %v1212 = vld [vmem:[#allocation2 + $0x118] sm:$0xff]
    %v1213 = vld [vmem:[#allocation2 + $0x120] sm:$0xff]
    %v1214 = vld [vmem:[#allocation2 + $0x128] sm:$0xff]
    %v1215 = vld [vmem:[#allocation2 + $0x130] sm:$0xff]
    %v1216 = vld [vmem:[#allocation2 + $0x138] sm:$0xff]
    %v1217 = vld [vmem:[#allocation2 + $0x140] sm:$0xff]
    %v1218 = vld [vmem:[#allocation2 + $0x148] sm:$0xff]
    %v1219 = vld [vmem:[#allocation2 + $0x150] sm:$0xff]
    %v1220 = vld [vmem:[#allocation2 + $0x158] sm:$0xff]
    %v1221 = vld [vmem:[#allocation2 + $0x160] sm:$0xff]
    %v1222 = vld [vmem:[#allocation2 + $0x168] sm:$0xff]
    %v1223 = vld [vmem:[#allocation2 + $0x170] sm:$0xff]
    %v1224 = vld [vmem:[#allocation2 + $0x178] sm:$0xff]
    %v1225 = vld [vmem:[#allocation2 + $0x180] sm:$0xff]
    %v1226 = vld [vmem:[#allocation2 + $0x188] sm:$0xff]
    %v1227 = vld [vmem:[#allocation2 + $0x190] sm:$0xff]
    %v1228 = vld [vmem:[#allocation2 + $0x198] sm:$0xff]
    %v1229 = vld [vmem:[#allocation2 + $0x1a0] sm:$0xff]
    %v1230 = vld [vmem:[#allocation2 + $0x1a8] sm:$0xff]
    %v1231 = vld [vmem:[#allocation2 + $0x1b0] sm:$0xff]
    %v1232 = vld [vmem:[#allocation2 + $0x1b8] sm:$0xff]
    %v1233 = vld [vmem:[#allocation2 + $0x1c0] sm:$0xff]
    %v1234 = vld [vmem:[#allocation2 + $0x1c8] sm:$0xff]
    %v1235 = vld [vmem:[#allocation2 + $0x1d0] sm:$0xff]
    %v1236 = vld [vmem:[#allocation2 + $0x1d8] sm:$0xff]
    %v1237 = vld [vmem:[#allocation2 + $0x1e0] sm:$0xff]
    %v1238 = vld [vmem:[#allocation2 + $0x1e8] sm:$0xff]
    %v1239 = vld [vmem:[#allocation2 + $0x1f0] sm:$0xff]
    %v1240 = vld [vmem:[#allocation2 + $0x1f8] sm:$0xff]
    %v1241 = vld [vmem:[%s3] sm:$0xff]
    %v1243 = vlaneseq
    %v1244 = vshrl.u32 %v1243, 7
    %v1245 = vsub.s32 0, %v1244
    %v1246 = vrot.slane %v1241, %v1245
    %v1247 = vlaneseq
    %v1248 = vshrl.u32 %v1247, 7
    %v1249 = vsub.s32 1, %v1248
    %v1250 = vrot.slane %v1241, %v1249
    %v1251 = vlaneseq
    %v1252 = vshrl.u32 %v1251, 7
    %v1253 = vsub.s32 2, %v1252
    %v1254 = vrot.slane %v1241, %v1253
    %v1255 = vlaneseq
    %v1256 = vshrl.u32 %v1255, 7
    %v1257 = vsub.s32 3, %v1256
    %v1258 = vrot.slane %v1241, %v1257
    %v1259 = vlaneseq
    %v1260 = vshrl.u32 %v1259, 7
    %v1261 = vsub.s32 4, %v1260
    %v1262 = vrot.slane %v1241, %v1261
    %v1263 = vlaneseq
    %v1264 = vshrl.u32 %v1263, 7
    %v1265 = vsub.s32 5, %v1264
    %v1266 = vrot.slane %v1241, %v1265
    %v1267 = vlaneseq
    %v1268 = vshrl.u32 %v1267, 7
    %v1269 = vsub.s32 6, %v1268
    %v1270 = vrot.slane %v1241, %v1269
    %v1271 = vlaneseq
    %v1272 = vshrl.u32 %v1271, 7
    %v1273 = vsub.s32 7, %v1272
    %v1274 = vrot.slane %v1241, %v1273
    %v1347 = vunpack.c.l.b16 %v1177
    %v1348 = vunpack.c.h.b16 %v1177
    %v1349 = vunpack.c.l.b16 %v1178
    %v1350 = vunpack.c.h.b16 %v1178
    %v1351 = vunpack.c.l.b16 %v1179
    %v1352 = vunpack.c.h.b16 %v1179
    %v1353 = vunpack.c.l.b16 %v1180
    %v1354 = vunpack.c.h.b16 %v1180
    %v1355 = vunpack.c.l.b16 %v1181
    %v1356 = vunpack.c.h.b16 %v1181
    %v1357 = vunpack.c.l.b16 %v1182
    %v1358 = vunpack.c.h.b16 %v1182
    %v1359 = vunpack.c.l.b16 %v1183
    %v1360 = vunpack.c.h.b16 %v1183
    %v1361 = vunpack.c.l.b16 %v1184
    %v1362 = vunpack.c.h.b16 %v1184
    %v1363 = vunpack.c.l.b16 %v1185
    %v1364 = vunpack.c.h.b16 %v1185
    %v1365 = vunpack.c.l.b16 %v1186
    %v1366 = vunpack.c.h.b16 %v1186
    %v1367 = vunpack.c.l.b16 %v1187
    %v1368 = vunpack.c.h.b16 %v1187
    %v1369 = vunpack.c.l.b16 %v1188
    %v1370 = vunpack.c.h.b16 %v1188
    %v1371 = vunpack.c.l.b16 %v1189
    %v1372 = vunpack.c.h.b16 %v1189
    %v1373 = vunpack.c.l.b16 %v1190
    %v1374 = vunpack.c.h.b16 %v1190
    %v1375 = vunpack.c.l.b16 %v1191
    %v1376 = vunpack.c.h.b16 %v1191
    %v1377 = vunpack.c.l.b16 %v1192
    %v1378 = vunpack.c.h.b16 %v1192
    %v1379 = vunpack.c.l.b16 %v1193
    %v1380 = vunpack.c.h.b16 %v1193
    %v1381 = vunpack.c.l.b16 %v1194
    %v1382 = vunpack.c.h.b16 %v1194
    %v1383 = vunpack.c.l.b16 %v1195
    %v1384 = vunpack.c.h.b16 %v1195
    %v1385 = vunpack.c.l.b16 %v1196
    %v1386 = vunpack.c.h.b16 %v1196
    %v1387 = vunpack.c.l.b16 %v1197
    %v1388 = vunpack.c.h.b16 %v1197
    %v1389 = vunpack.c.l.b16 %v1198
    %v1390 = vunpack.c.h.b16 %v1198
    %v1391 = vunpack.c.l.b16 %v1199
    %v1392 = vunpack.c.h.b16 %v1199
    %v1393 = vunpack.c.l.b16 %v1200
    %v1394 = vunpack.c.h.b16 %v1200
    %v1395 = vunpack.c.l.b16 %v1201
    %v1396 = vunpack.c.h.b16 %v1201
    %v1397 = vunpack.c.l.b16 %v1202
    %v1398 = vunpack.c.h.b16 %v1202
    %v1399 = vunpack.c.l.b16 %v1203
    %v1400 = vunpack.c.h.b16 %v1203
    %v1401 = vunpack.c.l.b16 %v1204
    %v1402 = vunpack.c.h.b16 %v1204
    %v1403 = vunpack.c.l.b16 %v1205
    %v1404 = vunpack.c.h.b16 %v1205
    %v1405 = vunpack.c.l.b16 %v1206
    %v1406 = vunpack.c.h.b16 %v1206
    %v1407 = vunpack.c.l.b16 %v1207
    %v1408 = vunpack.c.h.b16 %v1207
    %v1409 = vunpack.c.l.b16 %v1208
    %v1410 = vunpack.c.h.b16 %v1208
    %v1411 = vunpack.c.l.b16 %v1209
    %v1412 = vunpack.c.h.b16 %v1209
    %v1413 = vunpack.c.l.b16 %v1210
    %v1414 = vunpack.c.h.b16 %v1210
    %v1415 = vunpack.c.l.b16 %v1211
    %v1416 = vunpack.c.h.b16 %v1211
    %v1417 = vunpack.c.l.b16 %v1212
    %v1418 = vunpack.c.h.b16 %v1212
    %v1419 = vunpack.c.l.b16 %v1213
    %v1420 = vunpack.c.h.b16 %v1213
    %v1421 = vunpack.c.l.b16 %v1214
    %v1422 = vunpack.c.h.b16 %v1214
    %v1423 = vunpack.c.l.b16 %v1215
    %v1424 = vunpack.c.h.b16 %v1215
    %v1425 = vunpack.c.l.b16 %v1216
    %v1426 = vunpack.c.h.b16 %v1216
    %v1427 = vunpack.c.l.b16 %v1217
    %v1428 = vunpack.c.h.b16 %v1217
    %v1429 = vunpack.c.l.b16 %v1218
    %v1430 = vunpack.c.h.b16 %v1218
    %v1431 = vunpack.c.l.b16 %v1219
    %v1432 = vunpack.c.h.b16 %v1219
    %v1433 = vunpack.c.l.b16 %v1220
    %v1434 = vunpack.c.h.b16 %v1220
    %v1435 = vunpack.c.l.b16 %v1221
    %v1436 = vunpack.c.h.b16 %v1221
    %v1437 = vunpack.c.l.b16 %v1222
    %v1438 = vunpack.c.h.b16 %v1222
    %v1439 = vunpack.c.l.b16 %v1223
    %v1440 = vunpack.c.h.b16 %v1223
    %v1441 = vunpack.c.l.b16 %v1224
    %v1442 = vunpack.c.h.b16 %v1224
    %v1443 = vunpack.c.l.b16 %v1225
    %v1444 = vunpack.c.h.b16 %v1225
    %v1445 = vunpack.c.l.b16 %v1226
    %v1446 = vunpack.c.h.b16 %v1226
    %v1447 = vunpack.c.l.b16 %v1227
    %v1448 = vunpack.c.h.b16 %v1227
    %v1449 = vunpack.c.l.b16 %v1228
    %v1450 = vunpack.c.h.b16 %v1228
    %v1451 = vunpack.c.l.b16 %v1229
    %v1452 = vunpack.c.h.b16 %v1229
    %v1453 = vunpack.c.l.b16 %v1230
    %v1454 = vunpack.c.h.b16 %v1230
    %v1455 = vunpack.c.l.b16 %v1231
    %v1456 = vunpack.c.h.b16 %v1231
    %v1457 = vunpack.c.l.b16 %v1232
    %v1458 = vunpack.c.h.b16 %v1232
    %v1459 = vunpack.c.l.b16 %v1233
    %v1460 = vunpack.c.h.b16 %v1233
    %v1461 = vunpack.c.l.b16 %v1234
    %v1462 = vunpack.c.h.b16 %v1234
    %v1463 = vunpack.c.l.b16 %v1235
    %v1464 = vunpack.c.h.b16 %v1235
    %v1465 = vunpack.c.l.b16 %v1236
    %v1466 = vunpack.c.h.b16 %v1236
    %v1467 = vunpack.c.l.b16 %v1237
    %v1468 = vunpack.c.h.b16 %v1237
    %v1469 = vunpack.c.l.b16 %v1238
    %v1470 = vunpack.c.h.b16 %v1238
    %v1471 = vunpack.c.l.b16 %v1239
    %v1472 = vunpack.c.h.b16 %v1239
    %v1473 = vunpack.c.l.b16 %v1240
    %v1474 = vunpack.c.h.b16 %v1240
    %v1475 = vpack.c.b16 %v1355, %v1347
    %v1476 = vpack.c.b16 %v1356, %v1348
    %v1477 = vpack.c.b16 %v1357, %v1349
    %v1478 = vpack.c.b16 %v1358, %v1350
    %v1479 = vpack.c.b16 %v1359, %v1351
    %v1480 = vpack.c.b16 %v1360, %v1352
    %v1481 = vpack.c.b16 %v1361, %v1353
    %v1482 = vpack.c.b16 %v1362, %v1354
    %v1483 = vpack.c.b16 %v1371, %v1363
    %v1484 = vpack.c.b16 %v1372, %v1364
    %v1485 = vpack.c.b16 %v1373, %v1365
    %v1486 = vpack.c.b16 %v1374, %v1366
    %v1487 = vpack.c.b16 %v1375, %v1367
    %v1488 = vpack.c.b16 %v1376, %v1368
    %v1489 = vpack.c.b16 %v1377, %v1369
    %v1490 = vpack.c.b16 %v1378, %v1370
    %v1491 = vpack.c.b16 %v1387, %v1379
    %v1492 = vpack.c.b16 %v1388, %v1380
    %v1493 = vpack.c.b16 %v1389, %v1381
    %v1494 = vpack.c.b16 %v1390, %v1382
    %v1495 = vpack.c.b16 %v1391, %v1383
    %v1496 = vpack.c.b16 %v1392, %v1384
    %v1497 = vpack.c.b16 %v1393, %v1385
    %v1498 = vpack.c.b16 %v1394, %v1386
    %v1499 = vpack.c.b16 %v1403, %v1395
    %v1500 = vpack.c.b16 %v1404, %v1396
    %v1501 = vpack.c.b16 %v1405, %v1397
    %v1502 = vpack.c.b16 %v1406, %v1398
    %v1503 = vpack.c.b16 %v1407, %v1399
    %v1504 = vpack.c.b16 %v1408, %v1400
    %v1505 = vpack.c.b16 %v1409, %v1401
    %v1506 = vpack.c.b16 %v1410, %v1402
    %v1507 = vpack.c.b16 %v1419, %v1411
    %v1508 = vpack.c.b16 %v1420, %v1412
    %v1509 = vpack.c.b16 %v1421, %v1413
    %v1510 = vpack.c.b16 %v1422, %v1414
    %v1511 = vpack.c.b16 %v1423, %v1415
    %v1512 = vpack.c.b16 %v1424, %v1416
    %v1513 = vpack.c.b16 %v1425, %v1417
    %v1514 = vpack.c.b16 %v1426, %v1418
    %v1515 = vpack.c.b16 %v1435, %v1427
    %v1516 = vpack.c.b16 %v1436, %v1428
    %v1517 = vpack.c.b16 %v1437, %v1429
    %v1518 = vpack.c.b16 %v1438, %v1430
    %v1519 = vpack.c.b16 %v1439, %v1431
    %v1520 = vpack.c.b16 %v1440, %v1432
    %v1521 = vpack.c.b16 %v1441, %v1433
    %v1522 = vpack.c.b16 %v1442, %v1434
    %v1523 = vpack.c.b16 %v1451, %v1443
    %v1524 = vpack.c.b16 %v1452, %v1444
    %v1525 = vpack.c.b16 %v1453, %v1445
    %v1526 = vpack.c.b16 %v1454, %v1446
    %v1527 = vpack.c.b16 %v1455, %v1447
    %v1528 = vpack.c.b16 %v1456, %v1448
    %v1529 = vpack.c.b16 %v1457, %v1449
    %v1530 = vpack.c.b16 %v1458, %v1450
    %v1531 = vpack.c.b16 %v1467, %v1459
    %v1532 = vpack.c.b16 %v1468, %v1460
    %v1533 = vpack.c.b16 %v1469, %v1461
    %v1534 = vpack.c.b16 %v1470, %v1462
    %v1535 = vpack.c.b16 %v1471, %v1463
    %v1536 = vpack.c.b16 %v1472, %v1464
    %v1537 = vpack.c.b16 %v1473, %v1465
    %v1538 = vpack.c.b16 %v1474, %v1466
    %1603 = vmatprep.subr.bf16.mxu0 %v1476
    %1604 = vmatpush1.bf16.msra.mxu0 %v1475
    %1605 = vmatprep.subr.bf16.mxu0 %v1484
    %1606 = vmatpush1.bf16.msra.mxu0 %v1483
    %1607 = vmatprep.subr.bf16.mxu0 %v1492
    %1608 = vmatpush1.bf16.msra.mxu0 %v1491
    %1609 = vmatprep.subr.bf16.mxu0 %v1500
    %1610 = vmatpush1.bf16.msra.mxu0 %v1499
    %1611 = vmatprep.subr.bf16.mxu0 %v1508
    %1612 = vmatpush1.bf16.msra.mxu0 %v1507
    %1613 = vmatprep.subr.bf16.mxu0 %v1516
    %1614 = vmatpush1.bf16.msra.mxu0 %v1515
    %1615 = vmatprep.subr.bf16.mxu0 %v1524
    %1616 = vmatpush1.bf16.msra.mxu0 %v1523
    %1617 = vmatprep.subr.bf16.mxu0 %v1532
    %1618 = vmatpush1.bf16.msra.mxu0 %v1531
    %1619 = vmatprep.subr.bf16.mxu0 0
    %1620 = vmatpush1.bf16.msra.mxu0 0
    %1621 = vmatprep.subr.bf16.mxu0 0
    %1622 = vmatpush1.bf16.msra.mxu0 0
    %1623 = vmatprep.subr.bf16.mxu0 0
    %1624 = vmatpush1.bf16.msra.mxu0 0
    %1625 = vmatprep.subr.bf16.mxu0 0
    %1626 = vmatpush1.bf16.msra.mxu0 0
    %1627 = vmatprep.subr.bf16.mxu0 0
    %1628 = vmatpush1.bf16.msra.mxu0 0
    %1629 = vmatprep.subr.bf16.mxu0 0
    %1630 = vmatpush1.bf16.msra.mxu0 0
    %1631 = vmatprep.subr.bf16.mxu0 0
    %1632 = vmatpush1.bf16.msra.mxu0 0
    %1633 = vmatprep.subr.bf16.mxu0 0
    %1634 = vmatpush1.bf16.msra.mxu0 0
    %1635 = vmatprep.mubr.bf16.mxu0 0
    %1636 = vmatmul.mubr.bf16.gmra.mrb[0].mxu0 %v1176
    %v1637 = vpop.f32.mrb[0].mxu0
    %v1638 = vadd.f32 %v1246, %v1637
    %v1639 = vpop.f32.mrb[0].mxu0
    %v1640 = vadd.f32 %v1250, %v1639
    %v1641 = vpop.f32.mrb[0].mxu0
    %v1642 = vpop.f32.mrb[0].mxu0
    %1643 = vdwg.mxu0
    %1644 = vmatprep.subr.bf16.mxu0 %v1478
    %1645 = vmatpush1.bf16.msra.mxu0 %v1477
    %1646 = vmatprep.subr.bf16.mxu0 %v1486
    %1647 = vmatpush1.bf16.msra.mxu0 %v1485
    %1648 = vmatprep.subr.bf16.mxu0 %v1494
    %1649 = vmatpush1.bf16.msra.mxu0 %v1493
    %1650 = vmatprep.subr.bf16.mxu0 %v1502
    %1651 = vmatpush1.bf16.msra.mxu0 %v1501
    %1652 = vmatprep.subr.bf16.mxu0 %v1510
    %1653 = vmatpush1.bf16.msra.mxu0 %v1509
    %1654 = vmatprep.subr.bf16.mxu0 %v1518
    %1655 = vmatpush1.bf16.msra.mxu0 %v1517
    %1656 = vmatprep.subr.bf16.mxu0 %v1526
    %1657 = vmatpush1.bf16.msra.mxu0 %v1525
    %1658 = vmatprep.subr.bf16.mxu0 %v1534
    %1659 = vmatpush1.bf16.msra.mxu0 %v1533
    %1660 = vmatprep.subr.bf16.mxu0 0
    %1661 = vmatpush1.bf16.msra.mxu0 0
    %1662 = vmatprep.subr.bf16.mxu0 0
    %1663 = vmatpush1.bf16.msra.mxu0 0
    %1664 = vmatprep.subr.bf16.mxu0 0
    %1665 = vmatpush1.bf16.msra.mxu0 0
    %1666 = vmatprep.subr.bf16.mxu0 0
    %1667 = vmatpush1.bf16.msra.mxu0 0
    %1668 = vmatprep.subr.bf16.mxu0 0
    %1669 = vmatpush1.bf16.msra.mxu0 0
    %1670 = vmatprep.subr.bf16.mxu0 0
    %1671 = vmatpush1.bf16.msra.mxu0 0
    %1672 = vmatprep.subr.bf16.mxu0 0
    %1673 = vmatpush1.bf16.msra.mxu0 0
    %1674 = vmatprep.subr.bf16.mxu0 0
    %1675 = vmatpush1.bf16.msra.mxu0 0
    %1676 = vmatprep.mubr.bf16.mxu0 0
    %1677 = vmatmul.mubr.bf16.gmra.mrb[0].mxu0 %v1176
    %v1678 = vpop.f32.mrb[0].mxu0
    %v1679 = vadd.f32 %v1254, %v1678
    %v1680 = vpop.f32.mrb[0].mxu0
    %v1681 = vadd.f32 %v1258, %v1680
    %v1682 = vpop.f32.mrb[0].mxu0
    %v1683 = vpop.f32.mrb[0].mxu0
    %1684 = vdwg.mxu0
    %1685 = vmatprep.subr.bf16.mxu0 %v1480
    %1686 = vmatpush1.bf16.msra.mxu0 %v1479
    %1687 = vmatprep.subr.bf16.mxu0 %v1488
    %1688 = vmatpush1.bf16.msra.mxu0 %v1487
    %1689 = vmatprep.subr.bf16.mxu0 %v1496
    %1690 = vmatpush1.bf16.msra.mxu0 %v1495
    %1691 = vmatprep.subr.bf16.mxu0 %v1504
    %1692 = vmatpush1.bf16.msra.mxu0 %v1503
    %1693 = vmatprep.subr.bf16.mxu0 %v1512
    %1694 = vmatpush1.bf16.msra.mxu0 %v1511
    %1695 = vmatprep.subr.bf16.mxu0 %v1520
    %1696 = vmatpush1.bf16.msra.mxu0 %v1519
    %1697 = vmatprep.subr.bf16.mxu0 %v1528
    %1698 = vmatpush1.bf16.msra.mxu0 %v1527
    %1699 = vmatprep.subr.bf16.mxu0 %v1536
    %1700 = vmatpush1.bf16.msra.mxu0 %v1535
    %1701 = vmatprep.subr.bf16.mxu0 0
    %1702 = vmatpush1.bf16.msra.mxu0 0
    %1703 = vmatprep.subr.bf16.mxu0 0
    %1704 = vmatpush1.bf16.msra.mxu0 0
    %1705 = vmatprep.subr.bf16.mxu0 0
    %1706 = vmatpush1.bf16.msra.mxu0 0
    %1707 = vmatprep.subr.bf16.mxu0 0
    %1708 = vmatpush1.bf16.msra.mxu0 0
    %1709 = vmatprep.subr.bf16.mxu0 0
    %1710 = vmatpush1.bf16.msra.mxu0 0
    %1711 = vmatprep.subr.bf16.mxu0 0
    %1712 = vmatpush1.bf16.msra.mxu0 0
    %1713 = vmatprep.subr.bf16.mxu0 0
    %1714 = vmatpush1.bf16.msra.mxu0 0
    %1715 = vmatprep.subr.bf16.mxu0 0
    %1716 = vmatpush1.bf16.msra.mxu0 0
    %1717 = vmatprep.mubr.bf16.mxu0 0
    %1718 = vmatmul.mubr.bf16.gmra.mrb[0].mxu0 %v1176
    %v1719 = vpop.f32.mrb[0].mxu0
    %v1720 = vadd.f32 %v1262, %v1719
    %v1721 = vpop.f32.mrb[0].mxu0
    %v1722 = vadd.f32 %v1266, %v1721
    %v1723 = vpop.f32.mrb[0].mxu0
    %v1724 = vpop.f32.mrb[0].mxu0
    %1725 = vdwg.mxu0
    %1726 = vmatprep.subr.bf16.mxu0 %v1482
    %1727 = vmatpush1.bf16.msra.mxu0 %v1481
    %1728 = vmatprep.subr.bf16.mxu0 %v1490
    %1729 = vmatpush1.bf16.msra.mxu0 %v1489
    %1730 = vmatprep.subr.bf16.mxu0 %v1498
    %1731 = vmatpush1.bf16.msra.mxu0 %v1497
    %1732 = vmatprep.subr.bf16.mxu0 %v1506
    %1733 = vmatpush1.bf16.msra.mxu0 %v1505
    %1734 = vmatprep.subr.bf16.mxu0 %v1514
    %1735 = vmatpush1.bf16.msra.mxu0 %v1513
    %1736 = vmatprep.subr.bf16.mxu0 %v1522
    %1737 = vmatpush1.bf16.msra.mxu0 %v1521
    %1738 = vmatprep.subr.bf16.mxu0 %v1530
    %1739 = vmatpush1.bf16.msra.mxu0 %v1529
    %1740 = vmatprep.subr.bf16.mxu0 %v1538
    %1741 = vmatpush1.bf16.msra.mxu0 %v1537
    %1742 = vmatprep.subr.bf16.mxu0 0
    %1743 = vmatpush1.bf16.msra.mxu0 0
    %1744 = vmatprep.subr.bf16.mxu0 0
    %1745 = vmatpush1.bf16.msra.mxu0 0
    %1746 = vmatprep.subr.bf16.mxu0 0
    %1747 = vmatpush1.bf16.msra.mxu0 0
    %1748 = vmatprep.subr.bf16.mxu0 0
    %1749 = vmatpush1.bf16.msra.mxu0 0
    %1750 = vmatprep.subr.bf16.mxu0 0
    %1751 = vmatpush1.bf16.msra.mxu0 0
    %1752 = vmatprep.subr.bf16.mxu0 0
    %1753 = vmatpush1.bf16.msra.mxu0 0
    %1754 = vmatprep.subr.bf16.mxu0 0
    %1755 = vmatpush1.bf16.msra.mxu0 0
    %1756 = vmatprep.subr.bf16.mxu0 0
    %1757 = vmatpush1.bf16.msra.mxu0 0
    %1758 = vmatprep.mubr.bf16.mxu0 0
    %1759 = vmatmul.mubr.bf16.gmra.mrb[0].mxu0 %v1176
    %v1760 = vpop.f32.mrb[0].mxu0
    %v1761 = vadd.f32 %v1270, %v1760
    %v1762 = vpop.f32.mrb[0].mxu0
    %v1763 = vadd.f32 %v1274, %v1762
    %v1764 = vpop.f32.mrb[0].mxu0
    %v1765 = vpop.f32.mrb[0].mxu0
    %1766 = vdwg.mxu0
    %v1767 = vmax.f32 %v1638, 0.0
    %v1768 = vmax.f32 %v1640, 0.0
    %v1769 = vmax.f32 %v1679, 0.0
    %v1770 = vmax.f32 %v1681, 0.0
    %v1771 = vmax.f32 %v1720, 0.0
    %v1772 = vmax.f32 %v1722, 0.0
    %v1773 = vmax.f32 %v1761, 0.0
    %v1774 = vmax.f32 %v1763, 0.0
    %v1775 = vpack.c.bf16 %v1767, %v1767
    %v1776 = vpack.c.bf16 %v1768, %v1768
    %v1777 = vpack.c.bf16 %v1769, %v1769
    %v1778 = vpack.c.bf16 %v1770, %v1770
    %v1779 = vpack.c.bf16 %v1771, %v1771
    %v1780 = vpack.c.bf16 %v1772, %v1772
    %v1781 = vpack.c.bf16 %v1773, %v1773
    %v1782 = vpack.c.bf16 %v1774, %v1774
    %v1783 = vld [vmem:[%s4] sm:$0xff]
    %v1784 = vld [vmem:[%s4 + $0x8] sm:$0xff]
    %v1785 = vld [vmem:[%s4 + $0x10] sm:$0xff]
    %v1786 = vld [vmem:[%s4 + $0x18] sm:$0xff]
    %v1787 = vld [vmem:[%s4 + $0x20] sm:$0xff]
    %v1788 = vld [vmem:[%s4 + $0x28] sm:$0xff]
    %v1789 = vld [vmem:[%s4 + $0x30] sm:$0xff]
    %v1790 = vld [vmem:[%s4 + $0x38] sm:$0xff]
    %v1791 = vld [vmem:[%s4 + $0x40] sm:$0xff]
    %v1792 = vld [vmem:[%s4 + $0x48] sm:$0xff]
    %v1793 = vld [vmem:[%s4 + $0x50] sm:$0xff]
    %v1794 = vld [vmem:[%s4 + $0x58] sm:$0xff]
    %v1795 = vld [vmem:[%s4 + $0x60] sm:$0xff]
    %v1796 = vld [vmem:[%s4 + $0x68] sm:$0xff]
    %v1797 = vld [vmem:[%s4 + $0x70] sm:$0xff]
    %v1798 = vld [vmem:[%s4 + $0x78] sm:$0xff]
    %v1799 = vld [vmem:[%s4 + $0x80] sm:$0xff]
    %v1800 = vld [vmem:[%s4 + $0x88] sm:$0xff]
    %v1801 = vld [vmem:[%s4 + $0x90] sm:$0xff]
    %v1802 = vld [vmem:[%s4 + $0x98] sm:$0xff]
    %v1803 = vld [vmem:[%s4 + $0xa0] sm:$0xff]
    %v1804 = vld [vmem:[%s4 + $0xa8] sm:$0xff]
    %v1805 = vld [vmem:[%s4 + $0xb0] sm:$0xff]
    %v1806 = vld [vmem:[%s4 + $0xb8] sm:$0xff]
    %v1807 = vld [vmem:[%s4 + $0xc0] sm:$0xff]
    %v1808 = vld [vmem:[%s4 + $0xc8] sm:$0xff]
    %v1809 = vld [vmem:[%s4 + $0xd0] sm:$0xff]
    %v1810 = vld [vmem:[%s4 + $0xd8] sm:$0xff]
    %v1811 = vld [vmem:[%s4 + $0xe0] sm:$0xff]
    %v1812 = vld [vmem:[%s4 + $0xe8] sm:$0xff]
    %v1813 = vld [vmem:[%s4 + $0xf0] sm:$0xff]
    %v1814 = vld [vmem:[%s4 + $0xf8] sm:$0xff]
    %v1815 = vld [vmem:[%s4 + $0x100] sm:$0xff]
    %v1816 = vld [vmem:[%s4 + $0x108] sm:$0xff]
    %v1817 = vld [vmem:[%s4 + $0x110] sm:$0xff]
    %v1818 = vld [vmem:[%s4 + $0x118] sm:$0xff]
    %v1819 = vld [vmem:[%s4 + $0x120] sm:$0xff]
    %v1820 = vld [vmem:[%s4 + $0x128] sm:$0xff]
    %v1821 = vld [vmem:[%s4 + $0x130] sm:$0xff]
    %v1822 = vld [vmem:[%s4 + $0x138] sm:$0xff]
    %v1823 = vld [vmem:[%s4 + $0x140] sm:$0xff]
    %v1824 = vld [vmem:[%s4 + $0x148] sm:$0xff]
    %v1825 = vld [vmem:[%s4 + $0x150] sm:$0xff]
    %v1826 = vld [vmem:[%s4 + $0x158] sm:$0xff]
    %v1827 = vld [vmem:[%s4 + $0x160] sm:$0xff]
    %v1828 = vld [vmem:[%s4 + $0x168] sm:$0xff]
    %v1829 = vld [vmem:[%s4 + $0x170] sm:$0xff]
    %v1830 = vld [vmem:[%s4 + $0x178] sm:$0xff]
    %v1831 = vld [vmem:[%s4 + $0x180] sm:$0xff]
    %v1832 = vld [vmem:[%s4 + $0x188] sm:$0xff]
    %v1833 = vld [vmem:[%s4 + $0x190] sm:$0xff]
    %v1834 = vld [vmem:[%s4 + $0x198] sm:$0xff]
    %v1835 = vld [vmem:[%s4 + $0x1a0] sm:$0xff]
    %v1836 = vld [vmem:[%s4 + $0x1a8] sm:$0xff]
    %v1837 = vld [vmem:[%s4 + $0x1b0] sm:$0xff]
    %v1838 = vld [vmem:[%s4 + $0x1b8] sm:$0xff]
    %v1839 = vld [vmem:[%s4 + $0x1c0] sm:$0xff]
    %v1840 = vld [vmem:[%s4 + $0x1c8] sm:$0xff]
    %v1841 = vld [vmem:[%s4 + $0x1d0] sm:$0xff]
    %v1842 = vld [vmem:[%s4 + $0x1d8] sm:$0xff]
    %v1843 = vld [vmem:[%s4 + $0x1e0] sm:$0xff]
    %v1844 = vld [vmem:[%s4 + $0x1e8] sm:$0xff]
    %v1845 = vld [vmem:[%s4 + $0x1f0] sm:$0xff]
    %v1846 = vld [vmem:[%s4 + $0x1f8] sm:$0xff]
    %v1847 = vld [vmem:[%s4 + $0x200] sm:$0xff]
    %v1848 = vld [vmem:[%s4 + $0x208] sm:$0xff]
    %v1849 = vld [vmem:[%s4 + $0x210] sm:$0xff]
    %v1850 = vld [vmem:[%s4 + $0x218] sm:$0xff]
    %v1851 = vld [vmem:[%s4 + $0x220] sm:$0xff]
    %v1852 = vld [vmem:[%s4 + $0x228] sm:$0xff]
    %v1853 = vld [vmem:[%s4 + $0x230] sm:$0xff]
    %v1854 = vld [vmem:[%s4 + $0x238] sm:$0xff]
    %v1855 = vld [vmem:[%s4 + $0x240] sm:$0xff]
    %v1856 = vld [vmem:[%s4 + $0x248] sm:$0xff]
    %v1857 = vld [vmem:[%s4 + $0x250] sm:$0xff]
    %v1858 = vld [vmem:[%s4 + $0x258] sm:$0xff]
    %v1859 = vld [vmem:[%s4 + $0x260] sm:$0xff]
    %v1860 = vld [vmem:[%s4 + $0x268] sm:$0xff]
    %v1861 = vld [vmem:[%s4 + $0x270] sm:$0xff]
    %v1862 = vld [vmem:[%s4 + $0x278] sm:$0xff]
    %v1863 = vld [vmem:[%s4 + $0x280] sm:$0xff]
    %v1864 = vld [vmem:[%s4 + $0x288] sm:$0xff]
    %v1865 = vld [vmem:[%s4 + $0x290] sm:$0xff]
    %v1866 = vld [vmem:[%s4 + $0x298] sm:$0xff]
    %v1867 = vld [vmem:[%s4 + $0x2a0] sm:$0xff]
    %v1868 = vld [vmem:[%s4 + $0x2a8] sm:$0xff]
    %v1869 = vld [vmem:[%s4 + $0x2b0] sm:$0xff]
    %v1870 = vld [vmem:[%s4 + $0x2b8] sm:$0xff]
    %v1871 = vld [vmem:[%s4 + $0x2c0] sm:$0xff]
    %v1872 = vld [vmem:[%s4 + $0x2c8] sm:$0xff]
    %v1873 = vld [vmem:[%s4 + $0x2d0] sm:$0xff]
    %v1874 = vld [vmem:[%s4 + $0x2d8] sm:$0xff]
    %v1875 = vld [vmem:[%s4 + $0x2e0] sm:$0xff]
    %v1876 = vld [vmem:[%s4 + $0x2e8] sm:$0xff]
    %v1877 = vld [vmem:[%s4 + $0x2f0] sm:$0xff]
    %v1878 = vld [vmem:[%s4 + $0x2f8] sm:$0xff]
    %v1879 = vld [vmem:[%s4 + $0x300] sm:$0xff]
    %v1880 = vld [vmem:[%s4 + $0x308] sm:$0xff]
    %v1881 = vld [vmem:[%s4 + $0x310] sm:$0xff]
    %v1882 = vld [vmem:[%s4 + $0x318] sm:$0xff]
    %v1883 = vld [vmem:[%s4 + $0x320] sm:$0xff]
    %v1884 = vld [vmem:[%s4 + $0x328] sm:$0xff]
    %v1885 = vld [vmem:[%s4 + $0x330] sm:$0xff]
    %v1886 = vld [vmem:[%s4 + $0x338] sm:$0xff]
    %v1887 = vld [vmem:[%s4 + $0x340] sm:$0xff]
    %v1888 = vld [vmem:[%s4 + $0x348] sm:$0xff]
    %v1889 = vld [vmem:[%s4 + $0x350] sm:$0xff]
    %v1890 = vld [vmem:[%s4 + $0x358] sm:$0xff]
    %v1891 = vld [vmem:[%s4 + $0x360] sm:$0xff]
    %v1892 = vld [vmem:[%s4 + $0x368] sm:$0xff]
    %v1893 = vld [vmem:[%s4 + $0x370] sm:$0xff]
    %v1894 = vld [vmem:[%s4 + $0x378] sm:$0xff]
    %v1895 = vld [vmem:[%s4 + $0x380] sm:$0xff]
    %v1896 = vld [vmem:[%s4 + $0x388] sm:$0xff]
    %v1897 = vld [vmem:[%s4 + $0x390] sm:$0xff]
    %v1898 = vld [vmem:[%s4 + $0x398] sm:$0xff]
    %v1899 = vld [vmem:[%s4 + $0x3a0] sm:$0xff]
    %v1900 = vld [vmem:[%s4 + $0x3a8] sm:$0xff]
    %v1901 = vld [vmem:[%s4 + $0x3b0] sm:$0xff]
    %v1902 = vld [vmem:[%s4 + $0x3b8] sm:$0xff]
    %v1903 = vld [vmem:[%s4 + $0x3c0] sm:$0xff]
    %v1904 = vld [vmem:[%s4 + $0x3c8] sm:$0xff]
    %v1905 = vld [vmem:[%s4 + $0x3d0] sm:$0xff]
    %v1906 = vld [vmem:[%s4 + $0x3d8] sm:$0xff]
    %v1907 = vld [vmem:[%s4 + $0x3e0] sm:$0xff]
    %v1908 = vld [vmem:[%s4 + $0x3e8] sm:$0xff]
    %v1909 = vld [vmem:[%s4 + $0x3f0] sm:$0xff]
    %v1910 = vld [vmem:[%s4 + $0x3f8] sm:$0xff]
    %v1911 = vld [vmem:[%s4 + $0x400] sm:$0xff]
    %v1912 = vld [vmem:[%s4 + $0x408] sm:$0xff]
    %v1913 = vld [vmem:[%s4 + $0x410] sm:$0xff]
    %v1914 = vld [vmem:[%s4 + $0x418] sm:$0xff]
    %v1915 = vld [vmem:[%s4 + $0x420] sm:$0xff]
    %v1916 = vld [vmem:[%s4 + $0x428] sm:$0xff]
    %v1917 = vld [vmem:[%s4 + $0x430] sm:$0xff]
    %v1918 = vld [vmem:[%s4 + $0x438] sm:$0xff]
    %v1919 = vld [vmem:[%s4 + $0x440] sm:$0xff]
    %v1920 = vld [vmem:[%s4 + $0x448] sm:$0xff]
    %v1921 = vld [vmem:[%s4 + $0x450] sm:$0xff]
    %v1922 = vld [vmem:[%s4 + $0x458] sm:$0xff]
    %v1923 = vld [vmem:[%s4 + $0x460] sm:$0xff]
    %v1924 = vld [vmem:[%s4 + $0x468] sm:$0xff]
    %v1925 = vld [vmem:[%s4 + $0x470] sm:$0xff]
    %v1926 = vld [vmem:[%s4 + $0x478] sm:$0xff]
    %v1927 = vld [vmem:[%s4 + $0x480] sm:$0xff]
    %v1928 = vld [vmem:[%s4 + $0x488] sm:$0xff]
    %v1929 = vld [vmem:[%s4 + $0x490] sm:$0xff]
    %v1930 = vld [vmem:[%s4 + $0x498] sm:$0xff]
    %v1931 = vld [vmem:[%s4 + $0x4a0] sm:$0xff]
    %v1932 = vld [vmem:[%s4 + $0x4a8] sm:$0xff]
    %v1933 = vld [vmem:[%s4 + $0x4b0] sm:$0xff]
    %v1934 = vld [vmem:[%s4 + $0x4b8] sm:$0xff]
    %v1935 = vld [vmem:[%s4 + $0x4c0] sm:$0xff]
    %v1936 = vld [vmem:[%s4 + $0x4c8] sm:$0xff]
    %v1937 = vld [vmem:[%s4 + $0x4d0] sm:$0xff]
    %v1938 = vld [vmem:[%s4 + $0x4d8] sm:$0xff]
    %v1939 = vld [vmem:[%s4 + $0x4e0] sm:$0xff]
    %v1940 = vld [vmem:[%s4 + $0x4e8] sm:$0xff]
    %v1941 = vld [vmem:[%s4 + $0x4f0] sm:$0xff]
    %v1942 = vld [vmem:[%s4 + $0x4f8] sm:$0xff]
    %v1943 = vld [vmem:[%s4 + $0x500] sm:$0xff]
    %v1944 = vld [vmem:[%s4 + $0x508] sm:$0xff]
    %v1945 = vld [vmem:[%s4 + $0x510] sm:$0xff]
    %v1946 = vld [vmem:[%s4 + $0x518] sm:$0xff]
    %v1947 = vld [vmem:[%s4 + $0x520] sm:$0xff]
    %v1948 = vld [vmem:[%s4 + $0x528] sm:$0xff]
    %v1949 = vld [vmem:[%s4 + $0x530] sm:$0xff]
    %v1950 = vld [vmem:[%s4 + $0x538] sm:$0xff]
    %v1951 = vld [vmem:[%s4 + $0x540] sm:$0xff]
    %v1952 = vld [vmem:[%s4 + $0x548] sm:$0xff]
    %v1953 = vld [vmem:[%s4 + $0x550] sm:$0xff]
    %v1954 = vld [vmem:[%s4 + $0x558] sm:$0xff]
    %v1955 = vld [vmem:[%s4 + $0x560] sm:$0xff]
    %v1956 = vld [vmem:[%s4 + $0x568] sm:$0xff]
    %v1957 = vld [vmem:[%s4 + $0x570] sm:$0xff]
    %v1958 = vld [vmem:[%s4 + $0x578] sm:$0xff]
    %v1959 = vld [vmem:[%s4 + $0x580] sm:$0xff]
    %v1960 = vld [vmem:[%s4 + $0x588] sm:$0xff]
    %v1961 = vld [vmem:[%s4 + $0x590] sm:$0xff]
    %v1962 = vld [vmem:[%s4 + $0x598] sm:$0xff]
    %v1963 = vld [vmem:[%s4 + $0x5a0] sm:$0xff]
    %v1964 = vld [vmem:[%s4 + $0x5a8] sm:$0xff]
    %v1965 = vld [vmem:[%s4 + $0x5b0] sm:$0xff]
    %v1966 = vld [vmem:[%s4 + $0x5b8] sm:$0xff]
    %v1967 = vld [vmem:[%s4 + $0x5c0] sm:$0xff]
    %v1968 = vld [vmem:[%s4 + $0x5c8] sm:$0xff]
    %v1969 = vld [vmem:[%s4 + $0x5d0] sm:$0xff]
    %v1970 = vld [vmem:[%s4 + $0x5d8] sm:$0xff]
    %v1971 = vld [vmem:[%s4 + $0x5e0] sm:$0xff]
    %v1972 = vld [vmem:[%s4 + $0x5e8] sm:$0xff]
    %v1973 = vld [vmem:[%s4 + $0x5f0] sm:$0xff]
    %v1974 = vld [vmem:[%s4 + $0x5f8] sm:$0xff]
    %v1975 = vld [vmem:[%s4 + $0x600] sm:$0xff]
    %v1976 = vld [vmem:[%s4 + $0x608] sm:$0xff]
    %v1977 = vld [vmem:[%s4 + $0x610] sm:$0xff]
    %v1978 = vld [vmem:[%s4 + $0x618] sm:$0xff]
    %v1979 = vld [vmem:[%s4 + $0x620] sm:$0xff]
    %v1980 = vld [vmem:[%s4 + $0x628] sm:$0xff]
    %v1981 = vld [vmem:[%s4 + $0x630] sm:$0xff]
    %v1982 = vld [vmem:[%s4 + $0x638] sm:$0xff]
    %v1983 = vld [vmem:[%s4 + $0x640] sm:$0xff]
    %v1984 = vld [vmem:[%s4 + $0x648] sm:$0xff]
    %v1985 = vld [vmem:[%s4 + $0x650] sm:$0xff]
    %v1986 = vld [vmem:[%s4 + $0x658] sm:$0xff]
    %v1987 = vld [vmem:[%s4 + $0x660] sm:$0xff]
    %v1988 = vld [vmem:[%s4 + $0x668] sm:$0xff]
    %v1989 = vld [vmem:[%s4 + $0x670] sm:$0xff]
    %v1990 = vld [vmem:[%s4 + $0x678] sm:$0xff]
    %v1991 = vld [vmem:[%s4 + $0x680] sm:$0xff]
    %v1992 = vld [vmem:[%s4 + $0x688] sm:$0xff]
    %v1993 = vld [vmem:[%s4 + $0x690] sm:$0xff]
    %v1994 = vld [vmem:[%s4 + $0x698] sm:$0xff]
    %v1995 = vld [vmem:[%s4 + $0x6a0] sm:$0xff]
    %v1996 = vld [vmem:[%s4 + $0x6a8] sm:$0xff]
    %v1997 = vld [vmem:[%s4 + $0x6b0] sm:$0xff]
    %v1998 = vld [vmem:[%s4 + $0x6b8] sm:$0xff]
    %v1999 = vld [vmem:[%s4 + $0x6c0] sm:$0xff]
    %v2000 = vld [vmem:[%s4 + $0x6c8] sm:$0xff]
    %v2001 = vld [vmem:[%s4 + $0x6d0] sm:$0xff]
    %v2002 = vld [vmem:[%s4 + $0x6d8] sm:$0xff]
    %v2003 = vld [vmem:[%s4 + $0x6e0] sm:$0xff]
    %v2004 = vld [vmem:[%s4 + $0x6e8] sm:$0xff]
    %v2005 = vld [vmem:[%s4 + $0x6f0] sm:$0xff]
    %v2006 = vld [vmem:[%s4 + $0x6f8] sm:$0xff]
    %v2007 = vld [vmem:[%s4 + $0x700] sm:$0xff]
    %v2008 = vld [vmem:[%s4 + $0x708] sm:$0xff]
    %v2009 = vld [vmem:[%s4 + $0x710] sm:$0xff]
    %v2010 = vld [vmem:[%s4 + $0x718] sm:$0xff]
    %v2011 = vld [vmem:[%s4 + $0x720] sm:$0xff]
    %v2012 = vld [vmem:[%s4 + $0x728] sm:$0xff]
    %v2013 = vld [vmem:[%s4 + $0x730] sm:$0xff]
    %v2014 = vld [vmem:[%s4 + $0x738] sm:$0xff]
    %v2015 = vld [vmem:[%s4 + $0x740] sm:$0xff]
    %v2016 = vld [vmem:[%s4 + $0x748] sm:$0xff]
    %v2017 = vld [vmem:[%s4 + $0x750] sm:$0xff]
    %v2018 = vld [vmem:[%s4 + $0x758] sm:$0xff]
    %v2019 = vld [vmem:[%s4 + $0x760] sm:$0xff]
    %v2020 = vld [vmem:[%s4 + $0x768] sm:$0xff]
    %v2021 = vld [vmem:[%s4 + $0x770] sm:$0xff]
    %v2022 = vld [vmem:[%s4 + $0x778] sm:$0xff]
    %v2023 = vld [vmem:[%s4 + $0x780] sm:$0xff]
    %v2024 = vld [vmem:[%s4 + $0x788] sm:$0xff]
    %v2025 = vld [vmem:[%s4 + $0x790] sm:$0xff]
    %v2026 = vld [vmem:[%s4 + $0x798] sm:$0xff]
    %v2027 = vld [vmem:[%s4 + $0x7a0] sm:$0xff]
    %v2028 = vld [vmem:[%s4 + $0x7a8] sm:$0xff]
    %v2029 = vld [vmem:[%s4 + $0x7b0] sm:$0xff]
    %v2030 = vld [vmem:[%s4 + $0x7b8] sm:$0xff]
    %v2031 = vld [vmem:[%s4 + $0x7c0] sm:$0xff]
    %v2032 = vld [vmem:[%s4 + $0x7c8] sm:$0xff]
    %v2033 = vld [vmem:[%s4 + $0x7d0] sm:$0xff]
    %v2034 = vld [vmem:[%s4 + $0x7d8] sm:$0xff]
    %v2035 = vld [vmem:[%s4 + $0x7e0] sm:$0xff]
    %v2036 = vld [vmem:[%s4 + $0x7e8] sm:$0xff]
    %v2037 = vld [vmem:[%s4 + $0x7f0] sm:$0xff]
    %v2038 = vld [vmem:[%s4 + $0x7f8] sm:$0xff]
    %v2039 = vld [vmem:[%s5] sm:$0xf]
    %v2041 = vlaneseq
    %v2042 = vshrl.u32 %v2041, 7
    %v2043 = vsub.s32 0, %v2042
    %v2044 = vrot.slane %v2039, %v2043
    %v2045 = vlaneseq
    %v2046 = vshrl.u32 %v2045, 7
    %v2047 = vsub.s32 1, %v2046
    %v2048 = vrot.slane %v2039, %v2047
    %v2049 = vlaneseq
    %v2050 = vshrl.u32 %v2049, 7
    %v2051 = vsub.s32 2, %v2050
    %v2052 = vrot.slane %v2039, %v2051
    %v2053 = vlaneseq
    %v2054 = vshrl.u32 %v2053, 7
    %v2055 = vsub.s32 3, %v2054
    %v2056 = vrot.slane %v2039, %v2055
    %v2317 = vunpack.c.l.b16 %v1783
    %v2318 = vunpack.c.h.b16 %v1783
    %v2319 = vunpack.c.l.b16 %v1784
    %v2320 = vunpack.c.h.b16 %v1784
    %v2321 = vunpack.c.l.b16 %v1785
    %v2322 = vunpack.c.h.b16 %v1785
    %v2323 = vunpack.c.l.b16 %v1786
    %v2324 = vunpack.c.h.b16 %v1786
    %v2325 = vunpack.c.l.b16 %v1787
    %v2326 = vunpack.c.h.b16 %v1787
    %v2327 = vunpack.c.l.b16 %v1788
    %v2328 = vunpack.c.h.b16 %v1788
    %v2329 = vunpack.c.l.b16 %v1789
    %v2330 = vunpack.c.h.b16 %v1789
    %v2331 = vunpack.c.l.b16 %v1790
    %v2332 = vunpack.c.h.b16 %v1790
    %v2333 = vunpack.c.l.b16 %v1791
    %v2334 = vunpack.c.h.b16 %v1791
    %v2335 = vunpack.c.l.b16 %v1792
    %v2336 = vunpack.c.h.b16 %v1792
    %v2337 = vunpack.c.l.b16 %v1793
    %v2338 = vunpack.c.h.b16 %v1793
    %v2339 = vunpack.c.l.b16 %v1794
    %v2340 = vunpack.c.h.b16 %v1794
    %v2341 = vunpack.c.l.b16 %v1795
    %v2342 = vunpack.c.h.b16 %v1795
    %v2343 = vunpack.c.l.b16 %v1796
    %v2344 = vunpack.c.h.b16 %v1796
    %v2345 = vunpack.c.l.b16 %v1797
    %v2346 = vunpack.c.h.b16 %v1797
    %v2347 = vunpack.c.l.b16 %v1798
    %v2348 = vunpack.c.h.b16 %v1798
    %v2349 = vunpack.c.l.b16 %v1799
    %v2350 = vunpack.c.h.b16 %v1799
    %v2351 = vunpack.c.l.b16 %v1800
    %v2352 = vunpack.c.h.b16 %v1800
    %v2353 = vunpack.c.l.b16 %v1801
    %v2354 = vunpack.c.h.b16 %v1801
    %v2355 = vunpack.c.l.b16 %v1802
    %v2356 = vunpack.c.h.b16 %v1802
    %v2357 = vunpack.c.l.b16 %v1803
    %v2358 = vunpack.c.h.b16 %v1803
    %v2359 = vunpack.c.l.b16 %v1804
    %v2360 = vunpack.c.h.b16 %v1804
    %v2361 = vunpack.c.l.b16 %v1805
    %v2362 = vunpack.c.h.b16 %v1805
    %v2363 = vunpack.c.l.b16 %v1806
    %v2364 = vunpack.c.h.b16 %v1806
    %v2365 = vunpack.c.l.b16 %v1807
    %v2366 = vunpack.c.h.b16 %v1807
    %v2367 = vunpack.c.l.b16 %v1808
    %v2368 = vunpack.c.h.b16 %v1808
    %v2369 = vunpack.c.l.b16 %v1809
    %v2370 = vunpack.c.h.b16 %v1809
    %v2371 = vunpack.c.l.b16 %v1810
    %v2372 = vunpack.c.h.b16 %v1810
    %v2373 = vunpack.c.l.b16 %v1811
    %v2374 = vunpack.c.h.b16 %v1811
    %v2375 = vunpack.c.l.b16 %v1812
    %v2376 = vunpack.c.h.b16 %v1812
    %v2377 = vunpack.c.l.b16 %v1813
    %v2378 = vunpack.c.h.b16 %v1813
    %v2379 = vunpack.c.l.b16 %v1814
    %v2380 = vunpack.c.h.b16 %v1814
    %v2381 = vunpack.c.l.b16 %v1815
    %v2382 = vunpack.c.h.b16 %v1815
    %v2383 = vunpack.c.l.b16 %v1816
    %v2384 = vunpack.c.h.b16 %v1816
    %v2385 = vunpack.c.l.b16 %v1817
    %v2386 = vunpack.c.h.b16 %v1817
    %v2387 = vunpack.c.l.b16 %v1818
    %v2388 = vunpack.c.h.b16 %v1818
    %v2389 = vunpack.c.l.b16 %v1819
    %v2390 = vunpack.c.h.b16 %v1819
    %v2391 = vunpack.c.l.b16 %v1820
    %v2392 = vunpack.c.h.b16 %v1820
    %v2393 = vunpack.c.l.b16 %v1821
    %v2394 = vunpack.c.h.b16 %v1821
    %v2395 = vunpack.c.l.b16 %v1822
    %v2396 = vunpack.c.h.b16 %v1822
    %v2397 = vunpack.c.l.b16 %v1823
    %v2398 = vunpack.c.h.b16 %v1823
    %v2399 = vunpack.c.l.b16 %v1824
    %v2400 = vunpack.c.h.b16 %v1824
    %v2401 = vunpack.c.l.b16 %v1825
    %v2402 = vunpack.c.h.b16 %v1825
    %v2403 = vunpack.c.l.b16 %v1826
    %v2404 = vunpack.c.h.b16 %v1826
    %v2405 = vunpack.c.l.b16 %v1827
    %v2406 = vunpack.c.h.b16 %v1827
    %v2407 = vunpack.c.l.b16 %v1828
    %v2408 = vunpack.c.h.b16 %v1828
    %v2409 = vunpack.c.l.b16 %v1829
    %v2410 = vunpack.c.h.b16 %v1829
    %v2411 = vunpack.c.l.b16 %v1830
    %v2412 = vunpack.c.h.b16 %v1830
    %v2413 = vunpack.c.l.b16 %v1831
    %v2414 = vunpack.c.h.b16 %v1831
    %v2415 = vunpack.c.l.b16 %v1832
    %v2416 = vunpack.c.h.b16 %v1832
    %v2417 = vunpack.c.l.b16 %v1833
    %v2418 = vunpack.c.h.b16 %v1833
    %v2419 = vunpack.c.l.b16 %v1834
    %v2420 = vunpack.c.h.b16 %v1834
    %v2421 = vunpack.c.l.b16 %v1835
    %v2422 = vunpack.c.h.b16 %v1835
    %v2423 = vunpack.c.l.b16 %v1836
    %v2424 = vunpack.c.h.b16 %v1836
    %v2425 = vunpack.c.l.b16 %v1837
    %v2426 = vunpack.c.h.b16 %v1837
    %v2427 = vunpack.c.l.b16 %v1838
    %v2428 = vunpack.c.h.b16 %v1838
    %v2429 = vunpack.c.l.b16 %v1839
    %v2430 = vunpack.c.h.b16 %v1839
    %v2431 = vunpack.c.l.b16 %v1840
    %v2432 = vunpack.c.h.b16 %v1840
    %v2433 = vunpack.c.l.b16 %v1841
    %v2434 = vunpack.c.h.b16 %v1841
    %v2435 = vunpack.c.l.b16 %v1842
    %v2436 = vunpack.c.h.b16 %v1842
    %v2437 = vunpack.c.l.b16 %v1843
    %v2438 = vunpack.c.h.b16 %v1843
    %v2439 = vunpack.c.l.b16 %v1844
    %v2440 = vunpack.c.h.b16 %v1844
    %v2441 = vunpack.c.l.b16 %v1845
    %v2442 = vunpack.c.h.b16 %v1845
    %v2443 = vunpack.c.l.b16 %v1846
    %v2444 = vunpack.c.h.b16 %v1846
    %v2445 = vunpack.c.l.b16 %v1847
    %v2446 = vunpack.c.h.b16 %v1847
    %v2447 = vunpack.c.l.b16 %v1848
    %v2448 = vunpack.c.h.b16 %v1848
    %v2449 = vunpack.c.l.b16 %v1849
    %v2450 = vunpack.c.h.b16 %v1849
    %v2451 = vunpack.c.l.b16 %v1850
    %v2452 = vunpack.c.h.b16 %v1850
    %v2453 = vunpack.c.l.b16 %v1851
    %v2454 = vunpack.c.h.b16 %v1851
    %v2455 = vunpack.c.l.b16 %v1852
    %v2456 = vunpack.c.h.b16 %v1852
    %v2457 = vunpack.c.l.b16 %v1853
    %v2458 = vunpack.c.h.b16 %v1853
    %v2459 = vunpack.c.l.b16 %v1854
    %v2460 = vunpack.c.h.b16 %v1854
    %v2461 = vunpack.c.l.b16 %v1855
    %v2462 = vunpack.c.h.b16 %v1855
    %v2463 = vunpack.c.l.b16 %v1856
    %v2464 = vunpack.c.h.b16 %v1856
    %v2465 = vunpack.c.l.b16 %v1857
    %v2466 = vunpack.c.h.b16 %v1857
    %v2467 = vunpack.c.l.b16 %v1858
    %v2468 = vunpack.c.h.b16 %v1858
    %v2469 = vunpack.c.l.b16 %v1859
    %v2470 = vunpack.c.h.b16 %v1859
    %v2471 = vunpack.c.l.b16 %v1860
    %v2472 = vunpack.c.h.b16 %v1860
    %v2473 = vunpack.c.l.b16 %v1861
    %v2474 = vunpack.c.h.b16 %v1861
    %v2475 = vunpack.c.l.b16 %v1862
    %v2476 = vunpack.c.h.b16 %v1862
    %v2477 = vunpack.c.l.b16 %v1863
    %v2478 = vunpack.c.h.b16 %v1863
    %v2479 = vunpack.c.l.b16 %v1864
    %v2480 = vunpack.c.h.b16 %v1864
    %v2481 = vunpack.c.l.b16 %v1865
    %v2482 = vunpack.c.h.b16 %v1865
    %v2483 = vunpack.c.l.b16 %v1866
    %v2484 = vunpack.c.h.b16 %v1866
    %v2485 = vunpack.c.l.b16 %v1867
    %v2486 = vunpack.c.h.b16 %v1867
    %v2487 = vunpack.c.l.b16 %v1868
    %v2488 = vunpack.c.h.b16 %v1868
    %v2489 = vunpack.c.l.b16 %v1869
    %v2490 = vunpack.c.h.b16 %v1869
    %v2491 = vunpack.c.l.b16 %v1870
    %v2492 = vunpack.c.h.b16 %v1870
    %v2493 = vunpack.c.l.b16 %v1871
    %v2494 = vunpack.c.h.b16 %v1871
    %v2495 = vunpack.c.l.b16 %v1872
    %v2496 = vunpack.c.h.b16 %v1872
    %v2497 = vunpack.c.l.b16 %v1873
    %v2498 = vunpack.c.h.b16 %v1873
    %v2499 = vunpack.c.l.b16 %v1874
    %v2500 = vunpack.c.h.b16 %v1874
    %v2501 = vunpack.c.l.b16 %v1875
    %v2502 = vunpack.c.h.b16 %v1875
    %v2503 = vunpack.c.l.b16 %v1876
    %v2504 = vunpack.c.h.b16 %v1876
    %v2505 = vunpack.c.l.b16 %v1877
    %v2506 = vunpack.c.h.b16 %v1877
    %v2507 = vunpack.c.l.b16 %v1878
    %v2508 = vunpack.c.h.b16 %v1878
    %v2509 = vunpack.c.l.b16 %v1879
    %v2510 = vunpack.c.h.b16 %v1879
    %v2511 = vunpack.c.l.b16 %v1880
    %v2512 = vunpack.c.h.b16 %v1880
    %v2513 = vunpack.c.l.b16 %v1881
    %v2514 = vunpack.c.h.b16 %v1881
    %v2515 = vunpack.c.l.b16 %v1882
    %v2516 = vunpack.c.h.b16 %v1882
    %v2517 = vunpack.c.l.b16 %v1883
    %v2518 = vunpack.c.h.b16 %v1883
    %v2519 = vunpack.c.l.b16 %v1884
    %v2520 = vunpack.c.h.b16 %v1884
    %v2521 = vunpack.c.l.b16 %v1885
    %v2522 = vunpack.c.h.b16 %v1885
    %v2523 = vunpack.c.l.b16 %v1886
    %v2524 = vunpack.c.h.b16 %v1886
    %v2525 = vunpack.c.l.b16 %v1887
    %v2526 = vunpack.c.h.b16 %v1887
    %v2527 = vunpack.c.l.b16 %v1888
    %v2528 = vunpack.c.h.b16 %v1888
    %v2529 = vunpack.c.l.b16 %v1889
    %v2530 = vunpack.c.h.b16 %v1889
    %v2531 = vunpack.c.l.b16 %v1890
    %v2532 = vunpack.c.h.b16 %v1890
    %v2533 = vunpack.c.l.b16 %v1891
    %v2534 = vunpack.c.h.b16 %v1891
    %v2535 = vunpack.c.l.b16 %v1892
    %v2536 = vunpack.c.h.b16 %v1892
    %v2537 = vunpack.c.l.b16 %v1893
    %v2538 = vunpack.c.h.b16 %v1893
    %v2539 = vunpack.c.l.b16 %v1894
    %v2540 = vunpack.c.h.b16 %v1894
    %v2541 = vunpack.c.l.b16 %v1895
    %v2542 = vunpack.c.h.b16 %v1895
    %v2543 = vunpack.c.l.b16 %v1896
    %v2544 = vunpack.c.h.b16 %v1896
    %v2545 = vunpack.c.l.b16 %v1897
    %v2546 = vunpack.c.h.b16 %v1897
    %v2547 = vunpack.c.l.b16 %v1898
    %v2548 = vunpack.c.h.b16 %v1898
    %v2549 = vunpack.c.l.b16 %v1899
    %v2550 = vunpack.c.h.b16 %v1899
    %v2551 = vunpack.c.l.b16 %v1900
    %v2552 = vunpack.c.h.b16 %v1900
    %v2553 = vunpack.c.l.b16 %v1901
    %v2554 = vunpack.c.h.b16 %v1901
    %v2555 = vunpack.c.l.b16 %v1902
    %v2556 = vunpack.c.h.b16 %v1902
    %v2557 = vunpack.c.l.b16 %v1903
    %v2558 = vunpack.c.h.b16 %v1903
    %v2559 = vunpack.c.l.b16 %v1904
    %v2560 = vunpack.c.h.b16 %v1904
    %v2561 = vunpack.c.l.b16 %v1905
    %v2562 = vunpack.c.h.b16 %v1905
    %v2563 = vunpack.c.l.b16 %v1906
    %v2564 = vunpack.c.h.b16 %v1906
    %v2565 = vunpack.c.l.b16 %v1907
    %v2566 = vunpack.c.h.b16 %v1907
    %v2567 = vunpack.c.l.b16 %v1908
    %v2568 = vunpack.c.h.b16 %v1908
    %v2569 = vunpack.c.l.b16 %v1909
    %v2570 = vunpack.c.h.b16 %v1909
    %v2571 = vunpack.c.l.b16 %v1910
    %v2572 = vunpack.c.h.b16 %v1910
    %v2573 = vunpack.c.l.b16 %v1911
    %v2574 = vunpack.c.h.b16 %v1911
    %v2575 = vunpack.c.l.b16 %v1912
    %v2576 = vunpack.c.h.b16 %v1912
    %v2577 = vunpack.c.l.b16 %v1913
    %v2578 = vunpack.c.h.b16 %v1913
    %v2579 = vunpack.c.l.b16 %v1914
    %v2580 = vunpack.c.h.b16 %v1914
    %v2581 = vunpack.c.l.b16 %v1915
    %v2582 = vunpack.c.h.b16 %v1915
    %v2583 = vunpack.c.l.b16 %v1916
    %v2584 = vunpack.c.h.b16 %v1916
    %v2585 = vunpack.c.l.b16 %v1917
    %v2586 = vunpack.c.h.b16 %v1917
    %v2587 = vunpack.c.l.b16 %v1918
    %v2588 = vunpack.c.h.b16 %v1918
    %v2589 = vunpack.c.l.b16 %v1919
    %v2590 = vunpack.c.h.b16 %v1919
    %v2591 = vunpack.c.l.b16 %v1920
    %v2592 = vunpack.c.h.b16 %v1920
    %v2593 = vunpack.c.l.b16 %v1921
    %v2594 = vunpack.c.h.b16 %v1921
    %v2595 = vunpack.c.l.b16 %v1922
    %v2596 = vunpack.c.h.b16 %v1922
    %v2597 = vunpack.c.l.b16 %v1923
    %v2598 = vunpack.c.h.b16 %v1923
    %v2599 = vunpack.c.l.b16 %v1924
    %v2600 = vunpack.c.h.b16 %v1924
    %v2601 = vunpack.c.l.b16 %v1925
    %v2602 = vunpack.c.h.b16 %v1925
    %v2603 = vunpack.c.l.b16 %v1926
    %v2604 = vunpack.c.h.b16 %v1926
    %v2605 = vunpack.c.l.b16 %v1927
    %v2606 = vunpack.c.h.b16 %v1927
    %v2607 = vunpack.c.l.b16 %v1928
    %v2608 = vunpack.c.h.b16 %v1928
    %v2609 = vunpack.c.l.b16 %v1929
    %v2610 = vunpack.c.h.b16 %v1929
    %v2611 = vunpack.c.l.b16 %v1930
    %v2612 = vunpack.c.h.b16 %v1930
    %v2613 = vunpack.c.l.b16 %v1931
    %v2614 = vunpack.c.h.b16 %v1931
    %v2615 = vunpack.c.l.b16 %v1932
    %v2616 = vunpack.c.h.b16 %v1932
    %v2617 = vunpack.c.l.b16 %v1933
    %v2618 = vunpack.c.h.b16 %v1933
    %v2619 = vunpack.c.l.b16 %v1934
    %v2620 = vunpack.c.h.b16 %v1934
    %v2621 = vunpack.c.l.b16 %v1935
    %v2622 = vunpack.c.h.b16 %v1935
    %v2623 = vunpack.c.l.b16 %v1936
    %v2624 = vunpack.c.h.b16 %v1936
    %v2625 = vunpack.c.l.b16 %v1937
    %v2626 = vunpack.c.h.b16 %v1937
    %v2627 = vunpack.c.l.b16 %v1938
    %v2628 = vunpack.c.h.b16 %v1938
    %v2629 = vunpack.c.l.b16 %v1939
    %v2630 = vunpack.c.h.b16 %v1939
    %v2631 = vunpack.c.l.b16 %v1940
    %v2632 = vunpack.c.h.b16 %v1940
    %v2633 = vunpack.c.l.b16 %v1941
    %v2634 = vunpack.c.h.b16 %v1941
    %v2635 = vunpack.c.l.b16 %v1942
    %v2636 = vunpack.c.h.b16 %v1942
    %v2637 = vunpack.c.l.b16 %v1943
    %v2638 = vunpack.c.h.b16 %v1943
    %v2639 = vunpack.c.l.b16 %v1944
    %v2640 = vunpack.c.h.b16 %v1944
    %v2641 = vunpack.c.l.b16 %v1945
    %v2642 = vunpack.c.h.b16 %v1945
    %v2643 = vunpack.c.l.b16 %v1946
    %v2644 = vunpack.c.h.b16 %v1946
    %v2645 = vunpack.c.l.b16 %v1947
    %v2646 = vunpack.c.h.b16 %v1947
    %v2647 = vunpack.c.l.b16 %v1948
    %v2648 = vunpack.c.h.b16 %v1948
    %v2649 = vunpack.c.l.b16 %v1949
    %v2650 = vunpack.c.h.b16 %v1949
    %v2651 = vunpack.c.l.b16 %v1950
    %v2652 = vunpack.c.h.b16 %v1950
    %v2653 = vunpack.c.l.b16 %v1951
    %v2654 = vunpack.c.h.b16 %v1951
    %v2655 = vunpack.c.l.b16 %v1952
    %v2656 = vunpack.c.h.b16 %v1952
    %v2657 = vunpack.c.l.b16 %v1953
    %v2658 = vunpack.c.h.b16 %v1953
    %v2659 = vunpack.c.l.b16 %v1954
    %v2660 = vunpack.c.h.b16 %v1954
    %v2661 = vunpack.c.l.b16 %v1955
    %v2662 = vunpack.c.h.b16 %v1955
    %v2663 = vunpack.c.l.b16 %v1956
    %v2664 = vunpack.c.h.b16 %v1956
    %v2665 = vunpack.c.l.b16 %v1957
    %v2666 = vunpack.c.h.b16 %v1957
    %v2667 = vunpack.c.l.b16 %v1958
    %v2668 = vunpack.c.h.b16 %v1958
    %v2669 = vunpack.c.l.b16 %v1959
    %v2670 = vunpack.c.h.b16 %v1959
    %v2671 = vunpack.c.l.b16 %v1960
    %v2672 = vunpack.c.h.b16 %v1960
    %v2673 = vunpack.c.l.b16 %v1961
    %v2674 = vunpack.c.h.b16 %v1961
    %v2675 = vunpack.c.l.b16 %v1962
    %v2676 = vunpack.c.h.b16 %v1962
    %v2677 = vunpack.c.l.b16 %v1963
    %v2678 = vunpack.c.h.b16 %v1963
    %v2679 = vunpack.c.l.b16 %v1964
    %v2680 = vunpack.c.h.b16 %v1964
    %v2681 = vunpack.c.l.b16 %v1965
    %v2682 = vunpack.c.h.b16 %v1965
    %v2683 = vunpack.c.l.b16 %v1966
    %v2684 = vunpack.c.h.b16 %v1966
    %v2685 = vunpack.c.l.b16 %v1967
    %v2686 = vunpack.c.h.b16 %v1967
    %v2687 = vunpack.c.l.b16 %v1968
    %v2688 = vunpack.c.h.b16 %v1968
    %v2689 = vunpack.c.l.b16 %v1969
    %v2690 = vunpack.c.h.b16 %v1969
    %v2691 = vunpack.c.l.b16 %v1970
    %v2692 = vunpack.c.h.b16 %v1970
    %v2693 = vunpack.c.l.b16 %v1971
    %v2694 = vunpack.c.h.b16 %v1971
    %v2695 = vunpack.c.l.b16 %v1972
    %v2696 = vunpack.c.h.b16 %v1972
    %v2697 = vunpack.c.l.b16 %v1973
    %v2698 = vunpack.c.h.b16 %v1973
    %v2699 = vunpack.c.l.b16 %v1974
    %v2700 = vunpack.c.h.b16 %v1974
    %v2701 = vunpack.c.l.b16 %v1975
    %v2702 = vunpack.c.h.b16 %v1975
    %v2703 = vunpack.c.l.b16 %v1976
    %v2704 = vunpack.c.h.b16 %v1976
    %v2705 = vunpack.c.l.b16 %v1977
    %v2706 = vunpack.c.h.b16 %v1977
    %v2707 = vunpack.c.l.b16 %v1978
    %v2708 = vunpack.c.h.b16 %v1978
    %v2709 = vunpack.c.l.b16 %v1979
    %v2710 = vunpack.c.h.b16 %v1979
    %v2711 = vunpack.c.l.b16 %v1980
    %v2712 = vunpack.c.h.b16 %v1980
    %v2713 = vunpack.c.l.b16 %v1981
    %v2714 = vunpack.c.h.b16 %v1981
    %v2715 = vunpack.c.l.b16 %v1982
    %v2716 = vunpack.c.h.b16 %v1982
    %v2717 = vunpack.c.l.b16 %v1983
    %v2718 = vunpack.c.h.b16 %v1983
    %v2719 = vunpack.c.l.b16 %v1984
    %v2720 = vunpack.c.h.b16 %v1984
    %v2721 = vunpack.c.l.b16 %v1985
    %v2722 = vunpack.c.h.b16 %v1985
    %v2723 = vunpack.c.l.b16 %v1986
    %v2724 = vunpack.c.h.b16 %v1986
    %v2725 = vunpack.c.l.b16 %v1987
    %v2726 = vunpack.c.h.b16 %v1987
    %v2727 = vunpack.c.l.b16 %v1988
    %v2728 = vunpack.c.h.b16 %v1988
    %v2729 = vunpack.c.l.b16 %v1989
    %v2730 = vunpack.c.h.b16 %v1989
    %v2731 = vunpack.c.l.b16 %v1990
    %v2732 = vunpack.c.h.b16 %v1990
    %v2733 = vunpack.c.l.b16 %v1991
    %v2734 = vunpack.c.h.b16 %v1991
    %v2735 = vunpack.c.l.b16 %v1992
    %v2736 = vunpack.c.h.b16 %v1992
    %v2737 = vunpack.c.l.b16 %v1993
    %v2738 = vunpack.c.h.b16 %v1993
    %v2739 = vunpack.c.l.b16 %v1994
    %v2740 = vunpack.c.h.b16 %v1994
    %v2741 = vunpack.c.l.b16 %v1995
    %v2742 = vunpack.c.h.b16 %v1995
    %v2743 = vunpack.c.l.b16 %v1996
    %v2744 = vunpack.c.h.b16 %v1996
    %v2745 = vunpack.c.l.b16 %v1997
    %v2746 = vunpack.c.h.b16 %v1997
    %v2747 = vunpack.c.l.b16 %v1998
    %v2748 = vunpack.c.h.b16 %v1998
    %v2749 = vunpack.c.l.b16 %v1999
    %v2750 = vunpack.c.h.b16 %v1999
    %v2751 = vunpack.c.l.b16 %v2000
    %v2752 = vunpack.c.h.b16 %v2000
    %v2753 = vunpack.c.l.b16 %v2001
    %v2754 = vunpack.c.h.b16 %v2001
    %v2755 = vunpack.c.l.b16 %v2002
    %v2756 = vunpack.c.h.b16 %v2002
    %v2757 = vunpack.c.l.b16 %v2003
    %v2758 = vunpack.c.h.b16 %v2003
    %v2759 = vunpack.c.l.b16 %v2004
    %v2760 = vunpack.c.h.b16 %v2004
    %v2761 = vunpack.c.l.b16 %v2005
    %v2762 = vunpack.c.h.b16 %v2005
    %v2763 = vunpack.c.l.b16 %v2006
    %v2764 = vunpack.c.h.b16 %v2006
    %v2765 = vunpack.c.l.b16 %v2007
    %v2766 = vunpack.c.h.b16 %v2007
    %v2767 = vunpack.c.l.b16 %v2008
    %v2768 = vunpack.c.h.b16 %v2008
    %v2769 = vunpack.c.l.b16 %v2009
    %v2770 = vunpack.c.h.b16 %v2009
    %v2771 = vunpack.c.l.b16 %v2010
    %v2772 = vunpack.c.h.b16 %v2010
    %v2773 = vunpack.c.l.b16 %v2011
    %v2774 = vunpack.c.h.b16 %v2011
    %v2775 = vunpack.c.l.b16 %v2012
    %v2776 = vunpack.c.h.b16 %v2012
    %v2777 = vunpack.c.l.b16 %v2013
    %v2778 = vunpack.c.h.b16 %v2013
    %v2779 = vunpack.c.l.b16 %v2014
    %v2780 = vunpack.c.h.b16 %v2014
    %v2781 = vunpack.c.l.b16 %v2015
    %v2782 = vunpack.c.h.b16 %v2015
    %v2783 = vunpack.c.l.b16 %v2016
    %v2784 = vunpack.c.h.b16 %v2016
    %v2785 = vunpack.c.l.b16 %v2017
    %v2786 = vunpack.c.h.b16 %v2017
    %v2787 = vunpack.c.l.b16 %v2018
    %v2788 = vunpack.c.h.b16 %v2018
    %v2789 = vunpack.c.l.b16 %v2019
    %v2790 = vunpack.c.h.b16 %v2019
    %v2791 = vunpack.c.l.b16 %v2020
    %v2792 = vunpack.c.h.b16 %v2020
    %v2793 = vunpack.c.l.b16 %v2021
    %v2794 = vunpack.c.h.b16 %v2021
    %v2795 = vunpack.c.l.b16 %v2022
    %v2796 = vunpack.c.h.b16 %v2022
    %v2797 = vunpack.c.l.b16 %v2023
    %v2798 = vunpack.c.h.b16 %v2023
    %v2799 = vunpack.c.l.b16 %v2024
    %v2800 = vunpack.c.h.b16 %v2024
    %v2801 = vunpack.c.l.b16 %v2025
    %v2802 = vunpack.c.h.b16 %v2025
    %v2803 = vunpack.c.l.b16 %v2026
    %v2804 = vunpack.c.h.b16 %v2026
    %v2805 = vunpack.c.l.b16 %v2027
    %v2806 = vunpack.c.h.b16 %v2027
    %v2807 = vunpack.c.l.b16 %v2028
    %v2808 = vunpack.c.h.b16 %v2028
    %v2809 = vunpack.c.l.b16 %v2029
    %v2810 = vunpack.c.h.b16 %v2029
    %v2811 = vunpack.c.l.b16 %v2030
    %v2812 = vunpack.c.h.b16 %v2030
    %v2813 = vunpack.c.l.b16 %v2031
    %v2814 = vunpack.c.h.b16 %v2031
    %v2815 = vunpack.c.l.b16 %v2032
    %v2816 = vunpack.c.h.b16 %v2032
    %v2817 = vunpack.c.l.b16 %v2033
    %v2818 = vunpack.c.h.b16 %v2033
    %v2819 = vunpack.c.l.b16 %v2034
    %v2820 = vunpack.c.h.b16 %v2034
    %v2821 = vunpack.c.l.b16 %v2035
    %v2822 = vunpack.c.h.b16 %v2035
    %v2823 = vunpack.c.l.b16 %v2036
    %v2824 = vunpack.c.h.b16 %v2036
    %v2825 = vunpack.c.l.b16 %v2037
    %v2826 = vunpack.c.h.b16 %v2037
    %v2827 = vunpack.c.l.b16 %v2038
    %v2828 = vunpack.c.h.b16 %v2038
    %v2829 = vpack.c.b16 %v2321, %v2317
    %v2830 = vpack.c.b16 %v2322, %v2318
    %v2831 = vpack.c.b16 %v2323, %v2319
    %v2832 = vpack.c.b16 %v2324, %v2320
    %v2833 = vpack.c.b16 %v2329, %v2325
    %v2834 = vpack.c.b16 %v2330, %v2326
    %v2835 = vpack.c.b16 %v2331, %v2327
    %v2836 = vpack.c.b16 %v2332, %v2328
    %v2837 = vpack.c.b16 %v2337, %v2333
    %v2838 = vpack.c.b16 %v2338, %v2334
    %v2839 = vpack.c.b16 %v2339, %v2335
    %v2840 = vpack.c.b16 %v2340, %v2336
    %v2841 = vpack.c.b16 %v2345, %v2341
    %v2842 = vpack.c.b16 %v2346, %v2342
    %v2843 = vpack.c.b16 %v2347, %v2343
    %v2844 = vpack.c.b16 %v2348, %v2344
    %v2845 = vpack.c.b16 %v2353, %v2349
    %v2846 = vpack.c.b16 %v2354, %v2350
    %v2847 = vpack.c.b16 %v2355, %v2351
    %v2848 = vpack.c.b16 %v2356, %v2352
    %v2849 = vpack.c.b16 %v2361, %v2357
    %v2850 = vpack.c.b16 %v2362, %v2358
    %v2851 = vpack.c.b16 %v2363, %v2359
    %v2852 = vpack.c.b16 %v2364, %v2360
    %v2853 = vpack.c.b16 %v2369, %v2365
    %v2854 = vpack.c.b16 %v2370, %v2366
    %v2855 = vpack.c.b16 %v2371, %v2367
    %v2856 = vpack.c.b16 %v2372, %v2368
    %v2857 = vpack.c.b16 %v2377, %v2373
    %v2858 = vpack.c.b16 %v2378, %v2374
    %v2859 = vpack.c.b16 %v2379, %v2375
    %v2860 = vpack.c.b16 %v2380, %v2376
    %v2861 = vpack.c.b16 %v2385, %v2381
    %v2862 = vpack.c.b16 %v2386, %v2382
    %v2863 = vpack.c.b16 %v2387, %v2383
    %v2864 = vpack.c.b16 %v2388, %v2384
    %v2865 = vpack.c.b16 %v2393, %v2389
    %v2866 = vpack.c.b16 %v2394, %v2390
    %v2867 = vpack.c.b16 %v2395, %v2391
    %v2868 = vpack.c.b16 %v2396, %v2392
    %v2869 = vpack.c.b16 %v2401, %v2397
    %v2870 = vpack.c.b16 %v2402, %v2398
    %v2871 = vpack.c.b16 %v2403, %v2399
    %v2872 = vpack.c.b16 %v2404, %v2400
    %v2873 = vpack.c.b16 %v2409, %v2405
    %v2874 = vpack.c.b16 %v2410, %v2406
    %v2875 = vpack.c.b16 %v2411, %v2407
    %v2876 = vpack.c.b16 %v2412, %v2408
    %v2877 = vpack.c.b16 %v2417, %v2413
    %v2878 = vpack.c.b16 %v2418, %v2414
    %v2879 = vpack.c.b16 %v2419, %v2415
    %v2880 = vpack.c.b16 %v2420, %v2416
    %v2881 = vpack.c.b16 %v2425, %v2421
    %v2882 = vpack.c.b16 %v2426, %v2422
    %v2883 = vpack.c.b16 %v2427, %v2423
    %v2884 = vpack.c.b16 %v2428, %v2424
    %v2885 = vpack.c.b16 %v2433, %v2429
    %v2886 = vpack.c.b16 %v2434, %v2430
    %v2887 = vpack.c.b16 %v2435, %v2431
    %v2888 = vpack.c.b16 %v2436, %v2432
    %v2889 = vpack.c.b16 %v2441, %v2437
    %v2890 = vpack.c.b16 %v2442, %v2438
    %v2891 = vpack.c.b16 %v2443, %v2439
    %v2892 = vpack.c.b16 %v2444, %v2440
    %v2893 = vpack.c.b16 %v2449, %v2445
    %v2894 = vpack.c.b16 %v2450, %v2446
    %v2895 = vpack.c.b16 %v2451, %v2447
    %v2896 = vpack.c.b16 %v2452, %v2448
    %v2897 = vpack.c.b16 %v2457, %v2453
    %v2898 = vpack.c.b16 %v2458, %v2454
    %v2899 = vpack.c.b16 %v2459, %v2455
    %v2900 = vpack.c.b16 %v2460, %v2456
    %v2901 = vpack.c.b16 %v2465, %v2461
    %v2902 = vpack.c.b16 %v2466, %v2462
    %v2903 = vpack.c.b16 %v2467, %v2463
    %v2904 = vpack.c.b16 %v2468, %v2464
    %v2905 = vpack.c.b16 %v2473, %v2469
    %v2906 = vpack.c.b16 %v2474, %v2470
    %v2907 = vpack.c.b16 %v2475, %v2471
    %v2908 = vpack.c.b16 %v2476, %v2472
    %v2909 = vpack.c.b16 %v2481, %v2477
    %v2910 = vpack.c.b16 %v2482, %v2478
    %v2911 = vpack.c.b16 %v2483, %v2479
    %v2912 = vpack.c.b16 %v2484, %v2480
    %v2913 = vpack.c.b16 %v2489, %v2485
    %v2914 = vpack.c.b16 %v2490, %v2486
    %v2915 = vpack.c.b16 %v2491, %v2487
    %v2916 = vpack.c.b16 %v2492, %v2488
    %v2917 = vpack.c.b16 %v2497, %v2493
    %v2918 = vpack.c.b16 %v2498, %v2494
    %v2919 = vpack.c.b16 %v2499, %v2495
    %v2920 = vpack.c.b16 %v2500, %v2496
    %v2921 = vpack.c.b16 %v2505, %v2501
    %v2922 = vpack.c.b16 %v2506, %v2502
    %v2923 = vpack.c.b16 %v2507, %v2503
    %v2924 = vpack.c.b16 %v2508, %v2504
    %v2925 = vpack.c.b16 %v2513, %v2509
    %v2926 = vpack.c.b16 %v2514, %v2510
    %v2927 = vpack.c.b16 %v2515, %v2511
    %v2928 = vpack.c.b16 %v2516, %v2512
    %v2929 = vpack.c.b16 %v2521, %v2517
    %v2930 = vpack.c.b16 %v2522, %v2518
    %v2931 = vpack.c.b16 %v2523, %v2519
    %v2932 = vpack.c.b16 %v2524, %v2520
    %v2933 = vpack.c.b16 %v2529, %v2525
    %v2934 = vpack.c.b16 %v2530, %v2526
    %v2935 = vpack.c.b16 %v2531, %v2527
    %v2936 = vpack.c.b16 %v2532, %v2528
    %v2937 = vpack.c.b16 %v2537, %v2533
    %v2938 = vpack.c.b16 %v2538, %v2534
    %v2939 = vpack.c.b16 %v2539, %v2535
    %v2940 = vpack.c.b16 %v2540, %v2536
    %v2941 = vpack.c.b16 %v2545, %v2541
    %v2942 = vpack.c.b16 %v2546, %v2542
    %v2943 = vpack.c.b16 %v2547, %v2543
    %v2944 = vpack.c.b16 %v2548, %v2544
    %v2945 = vpack.c.b16 %v2553, %v2549
    %v2946 = vpack.c.b16 %v2554, %v2550
    %v2947 = vpack.c.b16 %v2555, %v2551
    %v2948 = vpack.c.b16 %v2556, %v2552
    %v2949 = vpack.c.b16 %v2561, %v2557
    %v2950 = vpack.c.b16 %v2562, %v2558
    %v2951 = vpack.c.b16 %v2563, %v2559
    %v2952 = vpack.c.b16 %v2564, %v2560
    %v2953 = vpack.c.b16 %v2569, %v2565
    %v2954 = vpack.c.b16 %v2570, %v2566
    %v2955 = vpack.c.b16 %v2571, %v2567
    %v2956 = vpack.c.b16 %v2572, %v2568
    %v2957 = vpack.c.b16 %v2577, %v2573
    %v2958 = vpack.c.b16 %v2578, %v2574
    %v2959 = vpack.c.b16 %v2579, %v2575
    %v2960 = vpack.c.b16 %v2580, %v2576
    %v2961 = vpack.c.b16 %v2585, %v2581
    %v2962 = vpack.c.b16 %v2586, %v2582
    %v2963 = vpack.c.b16 %v2587, %v2583
    %v2964 = vpack.c.b16 %v2588, %v2584
    %v2965 = vpack.c.b16 %v2593, %v2589
    %v2966 = vpack.c.b16 %v2594, %v2590
    %v2967 = vpack.c.b16 %v2595, %v2591
    %v2968 = vpack.c.b16 %v2596, %v2592
    %v2969 = vpack.c.b16 %v2601, %v2597
    %v2970 = vpack.c.b16 %v2602, %v2598
    %v2971 = vpack.c.b16 %v2603, %v2599
    %v2972 = vpack.c.b16 %v2604, %v2600
    %v2973 = vpack.c.b16 %v2609, %v2605
    %v2974 = vpack.c.b16 %v2610, %v2606
    %v2975 = vpack.c.b16 %v2611, %v2607
    %v2976 = vpack.c.b16 %v2612, %v2608
    %v2977 = vpack.c.b16 %v2617, %v2613
    %v2978 = vpack.c.b16 %v2618, %v2614
    %v2979 = vpack.c.b16 %v2619, %v2615
    %v2980 = vpack.c.b16 %v2620, %v2616
    %v2981 = vpack.c.b16 %v2625, %v2621
    %v2982 = vpack.c.b16 %v2626, %v2622
    %v2983 = vpack.c.b16 %v2627, %v2623
    %v2984 = vpack.c.b16 %v2628, %v2624
    %v2985 = vpack.c.b16 %v2633, %v2629
    %v2986 = vpack.c.b16 %v2634, %v2630
    %v2987 = vpack.c.b16 %v2635, %v2631
    %v2988 = vpack.c.b16 %v2636, %v2632
    %v2989 = vpack.c.b16 %v2641, %v2637
    %v2990 = vpack.c.b16 %v2642, %v2638
    %v2991 = vpack.c.b16 %v2643, %v2639
    %v2992 = vpack.c.b16 %v2644, %v2640
    %v2993 = vpack.c.b16 %v2649, %v2645
    %v2994 = vpack.c.b16 %v2650, %v2646
    %v2995 = vpack.c.b16 %v2651, %v2647
    %v2996 = vpack.c.b16 %v2652, %v2648
    %v2997 = vpack.c.b16 %v2657, %v2653
    %v2998 = vpack.c.b16 %v2658, %v2654
    %v2999 = vpack.c.b16 %v2659, %v2655
    %v3000 = vpack.c.b16 %v2660, %v2656
    %v3001 = vpack.c.b16 %v2665, %v2661
    %v3002 = vpack.c.b16 %v2666, %v2662
    %v3003 = vpack.c.b16 %v2667, %v2663
    %v3004 = vpack.c.b16 %v2668, %v2664
    %v3005 = vpack.c.b16 %v2673, %v2669
    %v3006 = vpack.c.b16 %v2674, %v2670
    %v3007 = vpack.c.b16 %v2675, %v2671
    %v3008 = vpack.c.b16 %v2676, %v2672
    %v3009 = vpack.c.b16 %v2681, %v2677
    %v3010 = vpack.c.b16 %v2682, %v2678
    %v3011 = vpack.c.b16 %v2683, %v2679
    %v3012 = vpack.c.b16 %v2684, %v2680
    %v3013 = vpack.c.b16 %v2689, %v2685
    %v3014 = vpack.c.b16 %v2690, %v2686
    %v3015 = vpack.c.b16 %v2691, %v2687
    %v3016 = vpack.c.b16 %v2692, %v2688
    %v3017 = vpack.c.b16 %v2697, %v2693
    %v3018 = vpack.c.b16 %v2698, %v2694
    %v3019 = vpack.c.b16 %v2699, %v2695
    %v3020 = vpack.c.b16 %v2700, %v2696
    %v3021 = vpack.c.b16 %v2705, %v2701
    %v3022 = vpack.c.b16 %v2706, %v2702
    %v3023 = vpack.c.b16 %v2707, %v2703
    %v3024 = vpack.c.b16 %v2708, %v2704
    %v3025 = vpack.c.b16 %v2713, %v2709
    %v3026 = vpack.c.b16 %v2714, %v2710
    %v3027 = vpack.c.b16 %v2715, %v2711
    %v3028 = vpack.c.b16 %v2716, %v2712
    %v3029 = vpack.c.b16 %v2721, %v2717
    %v3030 = vpack.c.b16 %v2722, %v2718
    %v3031 = vpack.c.b16 %v2723, %v2719
    %v3032 = vpack.c.b16 %v2724, %v2720
    %v3033 = vpack.c.b16 %v2729, %v2725
    %v3034 = vpack.c.b16 %v2730, %v2726
    %v3035 = vpack.c.b16 %v2731, %v2727
    %v3036 = vpack.c.b16 %v2732, %v2728
    %v3037 = vpack.c.b16 %v2737, %v2733
    %v3038 = vpack.c.b16 %v2738, %v2734
    %v3039 = vpack.c.b16 %v2739, %v2735
    %v3040 = vpack.c.b16 %v2740, %v2736
    %v3041 = vpack.c.b16 %v2745, %v2741
    %v3042 = vpack.c.b16 %v2746, %v2742
    %v3043 = vpack.c.b16 %v2747, %v2743
    %v3044 = vpack.c.b16 %v2748, %v2744
    %v3045 = vpack.c.b16 %v2753, %v2749
    %v3046 = vpack.c.b16 %v2754, %v2750
    %v3047 = vpack.c.b16 %v2755, %v2751
    %v3048 = vpack.c.b16 %v2756, %v2752
    %v3049 = vpack.c.b16 %v2761, %v2757
    %v3050 = vpack.c.b16 %v2762, %v2758
    %v3051 = vpack.c.b16 %v2763, %v2759
    %v3052 = vpack.c.b16 %v2764, %v2760
    %v3053 = vpack.c.b16 %v2769, %v2765
    %v3054 = vpack.c.b16 %v2770, %v2766
    %v3055 = vpack.c.b16 %v2771, %v2767
    %v3056 = vpack.c.b16 %v2772, %v2768
    %v3057 = vpack.c.b16 %v2777, %v2773
    %v3058 = vpack.c.b16 %v2778, %v2774
    %v3059 = vpack.c.b16 %v2779, %v2775
    %v3060 = vpack.c.b16 %v2780, %v2776
    %v3061 = vpack.c.b16 %v2785, %v2781
    %v3062 = vpack.c.b16 %v2786, %v2782
    %v3063 = vpack.c.b16 %v2787, %v2783
    %v3064 = vpack.c.b16 %v2788, %v2784
    %v3065 = vpack.c.b16 %v2793, %v2789
    %v3066 = vpack.c.b16 %v2794, %v2790
    %v3067 = vpack.c.b16 %v2795, %v2791
    %v3068 = vpack.c.b16 %v2796, %v2792
    %v3069 = vpack.c.b16 %v2801, %v2797
    %v3070 = vpack.c.b16 %v2802, %v2798
    %v3071 = vpack.c.b16 %v2803, %v2799
    %v3072 = vpack.c.b16 %v2804, %v2800
    %v3073 = vpack.c.b16 %v2809, %v2805
    %v3074 = vpack.c.b16 %v2810, %v2806
    %v3075 = vpack.c.b16 %v2811, %v2807
    %v3076 = vpack.c.b16 %v2812, %v2808
    %v3077 = vpack.c.b16 %v2817, %v2813
    %v3078 = vpack.c.b16 %v2818, %v2814
    %v3079 = vpack.c.b16 %v2819, %v2815
    %v3080 = vpack.c.b16 %v2820, %v2816
    %v3081 = vpack.c.b16 %v2825, %v2821
    %v3082 = vpack.c.b16 %v2826, %v2822
    %v3083 = vpack.c.b16 %v2827, %v2823
    %v3084 = vpack.c.b16 %v2828, %v2824
    %3341 = vmatprep.subr.bf16.mxu0 %v2830
    %3342 = vmatpush1.bf16.msra.mxu0 %v2829
    %3343 = vmatprep.subr.bf16.mxu0 %v2834
    %3344 = vmatpush1.bf16.msra.mxu0 %v2833
    %3345 = vmatprep.subr.bf16.mxu0 %v2838
    %3346 = vmatpush1.bf16.msra.mxu0 %v2837
    %3347 = vmatprep.subr.bf16.mxu0 %v2842
    %3348 = vmatpush1.bf16.msra.mxu0 %v2841
    %3349 = vmatprep.subr.bf16.mxu0 %v2846
    %3350 = vmatpush1.bf16.msra.mxu0 %v2845
    %3351 = vmatprep.subr.bf16.mxu0 %v2850
    %3352 = vmatpush1.bf16.msra.mxu0 %v2849
    %3353 = vmatprep.subr.bf16.mxu0 %v2854
    %3354 = vmatpush1.bf16.msra.mxu0 %v2853
    %3355 = vmatprep.subr.bf16.mxu0 %v2858
    %3356 = vmatpush1.bf16.msra.mxu0 %v2857
    %3357 = vmatprep.subr.bf16.mxu0 %v2862
    %3358 = vmatpush1.bf16.msra.mxu0 %v2861
    %3359 = vmatprep.subr.bf16.mxu0 %v2866
    %3360 = vmatpush1.bf16.msra.mxu0 %v2865
    %3361 = vmatprep.subr.bf16.mxu0 %v2870
    %3362 = vmatpush1.bf16.msra.mxu0 %v2869
    %3363 = vmatprep.subr.bf16.mxu0 %v2874
    %3364 = vmatpush1.bf16.msra.mxu0 %v2873
    %3365 = vmatprep.subr.bf16.mxu0 %v2878
    %3366 = vmatpush1.bf16.msra.mxu0 %v2877
    %3367 = vmatprep.subr.bf16.mxu0 %v2882
    %3368 = vmatpush1.bf16.msra.mxu0 %v2881
    %3369 = vmatprep.subr.bf16.mxu0 %v2886
    %3370 = vmatpush1.bf16.msra.mxu0 %v2885
    %3371 = vmatprep.subr.bf16.mxu0 %v2890
    %3372 = vmatpush1.bf16.msra.mxu0 %v2889
    %3373 = vmatprep.mubr.bf16.mxu0 %v1776
    %3374 = vmatmul.mubr.bf16.gmra.mrb[0].mxu0 %v1775
    %v3375 = vpop.f32.mrb[0].mxu0
    %v3376 = vadd.f32 %v2044, %v3375
    %v3377 = vpop.f32.mrb[0].mxu0
    %v3378 = vadd.f32 %v2048, %v3377
    %v3379 = vpop.f32.mrb[0].mxu0
    %v3380 = vpop.f32.mrb[0].mxu0
    %3381 = vdwg.mxu0
    %3382 = vmatprep.subr.bf16.mxu0 %v2894
    %3383 = vmatpush1.bf16.msra.mxu0 %v2893
    %3384 = vmatprep.subr.bf16.mxu0 %v2898
    %3385 = vmatpush1.bf16.msra.mxu0 %v2897
    %3386 = vmatprep.subr.bf16.mxu0 %v2902
    %3387 = vmatpush1.bf16.msra.mxu0 %v2901
    %3388 = vmatprep.subr.bf16.mxu0 %v2906
    %3389 = vmatpush1.bf16.msra.mxu0 %v2905
    %3390 = vmatprep.subr.bf16.mxu0 %v2910
    %3391 = vmatpush1.bf16.msra.mxu0 %v2909
    %3392 = vmatprep.subr.bf16.mxu0 %v2914
    %3393 = vmatpush1.bf16.msra.mxu0 %v2913
    %3394 = vmatprep.subr.bf16.mxu0 %v2918
    %3395 = vmatpush1.bf16.msra.mxu0 %v2917
    %3396 = vmatprep.subr.bf16.mxu0 %v2922
    %3397 = vmatpush1.bf16.msra.mxu0 %v2921
    %3398 = vmatprep.subr.bf16.mxu0 %v2926
    %3399 = vmatpush1.bf16.msra.mxu0 %v2925
    %3400 = vmatprep.subr.bf16.mxu0 %v2930
    %3401 = vmatpush1.bf16.msra.mxu0 %v2929
    %3402 = vmatprep.subr.bf16.mxu0 %v2934
    %3403 = vmatpush1.bf16.msra.mxu0 %v2933
    %3404 = vmatprep.subr.bf16.mxu0 %v2938
    %3405 = vmatpush1.bf16.msra.mxu0 %v2937
    %3406 = vmatprep.subr.bf16.mxu0 %v2942
    %3407 = vmatpush1.bf16.msra.mxu0 %v2941
    %3408 = vmatprep.subr.bf16.mxu0 %v2946
    %3409 = vmatpush1.bf16.msra.mxu0 %v2945
    %3410 = vmatprep.subr.bf16.mxu0 %v2950
    %3411 = vmatpush1.bf16.msra.mxu0 %v2949
    %3412 = vmatprep.subr.bf16.mxu0 %v2954
    %3413 = vmatpush1.bf16.msra.mxu0 %v2953
    %3414 = vmatprep.mubr.bf16.mxu0 %v1778
    %3415 = vmatmul.mubr.bf16.gmra.mrb[0].mxu0 %v1777
    %v3416 = vpop.f32.mrb[0].mxu0
    %v3417 = vadd.f32 %v3376, %v3416
    %v3418 = vpop.f32.mrb[0].mxu0
    %v3419 = vadd.f32 %v3378, %v3418
    %v3420 = vpop.f32.mrb[0].mxu0
    %v3421 = vpop.f32.mrb[0].mxu0
    %3422 = vdwg.mxu0
    %3423 = vmatprep.subr.bf16.mxu0 %v2958
    %3424 = vmatpush1.bf16.msra.mxu0 %v2957
    %3425 = vmatprep.subr.bf16.mxu0 %v2962
    %3426 = vmatpush1.bf16.msra.mxu0 %v2961
    %3427 = vmatprep.subr.bf16.mxu0 %v2966
    %3428 = vmatpush1.bf16.msra.mxu0 %v2965
    %3429 = vmatprep.subr.bf16.mxu0 %v2970
    %3430 = vmatpush1.bf16.msra.mxu0 %v2969
    %3431 = vmatprep.subr.bf16.mxu0 %v2974
    %3432 = vmatpush1.bf16.msra.mxu0 %v2973
    %3433 = vmatprep.subr.bf16.mxu0 %v2978
    %3434 = vmatpush1.bf16.msra.mxu0 %v2977
    %3435 = vmatprep.subr.bf16.mxu0 %v2982
    %3436 = vmatpush1.bf16.msra.mxu0 %v2981
    %3437 = vmatprep.subr.bf16.mxu0 %v2986
    %3438 = vmatpush1.bf16.msra.mxu0 %v2985
    %3439 = vmatprep.subr.bf16.mxu0 %v2990
    %3440 = vmatpush1.bf16.msra.mxu0 %v2989
    %3441 = vmatprep.subr.bf16.mxu0 %v2994
    %3442 = vmatpush1.bf16.msra.mxu0 %v2993
    %3443 = vmatprep.subr.bf16.mxu0 %v2998
    %3444 = vmatpush1.bf16.msra.mxu0 %v2997
    %3445 = vmatprep.subr.bf16.mxu0 %v3002
    %3446 = vmatpush1.bf16.msra.mxu0 %v3001
    %3447 = vmatprep.subr.bf16.mxu0 %v3006
    %3448 = vmatpush1.bf16.msra.mxu0 %v3005
    %3449 = vmatprep.subr.bf16.mxu0 %v3010
    %3450 = vmatpush1.bf16.msra.mxu0 %v3009
    %3451 = vmatprep.subr.bf16.mxu0 %v3014
    %3452 = vmatpush1.bf16.msra.mxu0 %v3013
    %3453 = vmatprep.subr.bf16.mxu0 %v3018
    %3454 = vmatpush1.bf16.msra.mxu0 %v3017
    %3455 = vmatprep.mubr.bf16.mxu0 %v1780
    %3456 = vmatmul.mubr.bf16.gmra.mrb[0].mxu0 %v1779
    %v3457 = vpop.f32.mrb[0].mxu0
    %v3458 = vadd.f32 %v3417, %v3457
    %v3459 = vpop.f32.mrb[0].mxu0
    %v3460 = vadd.f32 %v3419, %v3459
    %v3461 = vpop.f32.mrb[0].mxu0
    %v3462 = vpop.f32.mrb[0].mxu0
    %3463 = vdwg.mxu0
    %3464 = vmatprep.subr.bf16.mxu0 %v3022
    %3465 = vmatpush1.bf16.msra.mxu0 %v3021
    %3466 = vmatprep.subr.bf16.mxu0 %v3026
    %3467 = vmatpush1.bf16.msra.mxu0 %v3025
    %3468 = vmatprep.subr.bf16.mxu0 %v3030
    %3469 = vmatpush1.bf16.msra.mxu0 %v3029
    %3470 = vmatprep.subr.bf16.mxu0 %v3034
    %3471 = vmatpush1.bf16.msra.mxu0 %v3033
    %3472 = vmatprep.subr.bf16.mxu0 %v3038
    %3473 = vmatpush1.bf16.msra.mxu0 %v3037
    %3474 = vmatprep.subr.bf16.mxu0 %v3042
    %3475 = vmatpush1.bf16.msra.mxu0 %v3041
    %3476 = vmatprep.subr.bf16.mxu0 %v3046
    %3477 = vmatpush1.bf16.msra.mxu0 %v3045
    %3478 = vmatprep.subr.bf16.mxu0 %v3050
    %3479 = vmatpush1.bf16.msra.mxu0 %v3049
    %3480 = vmatprep.subr.bf16.mxu0 %v3054
    %3481 = vmatpush1.bf16.msra.mxu0 %v3053
    %3482 = vmatprep.subr.bf16.mxu0 %v3058
    %3483 = vmatpush1.bf16.msra.mxu0 %v3057
    %3484 = vmatprep.subr.bf16.mxu0 %v3062
    %3485 = vmatpush1.bf16.msra.mxu0 %v3061
    %3486 = vmatprep.subr.bf16.mxu0 %v3066
    %3487 = vmatpush1.bf16.msra.mxu0 %v3065
    %3488 = vmatprep.subr.bf16.mxu0 %v3070
    %3489 = vmatpush1.bf16.msra.mxu0 %v3069
    %3490 = vmatprep.subr.bf16.mxu0 %v3074
    %3491 = vmatpush1.bf16.msra.mxu0 %v3073
    %3492 = vmatprep.subr.bf16.mxu0 %v3078
    %3493 = vmatpush1.bf16.msra.mxu0 %v3077
    %3494 = vmatprep.subr.bf16.mxu0 %v3082
    %3495 = vmatpush1.bf16.msra.mxu0 %v3081
    %3496 = vmatprep.mubr.bf16.mxu0 %v1782
    %3497 = vmatmul.mubr.bf16.gmra.mrb[0].mxu0 %v1781
    %v3498 = vpop.f32.mrb[0].mxu0
    %v3499 = vadd.f32 %v3458, %v3498
    %v3500 = vpop.f32.mrb[0].mxu0
    %v3501 = vadd.f32 %v3460, %v3500
    %v3502 = vpop.f32.mrb[0].mxu0
    %v3503 = vpop.f32.mrb[0].mxu0
    %3504 = vdwg.mxu0
    %3505 = vmatprep.subr.bf16.mxu0 %v2832
    %3506 = vmatpush1.bf16.msra.mxu0 %v2831
    %3507 = vmatprep.subr.bf16.mxu0 %v2836
    %3508 = vmatpush1.bf16.msra.mxu0 %v2835
    %3509 = vmatprep.subr.bf16.mxu0 %v2840
    %3510 = vmatpush1.bf16.msra.mxu0 %v2839
    %3511 = vmatprep.subr.bf16.mxu0 %v2844
    %3512 = vmatpush1.bf16.msra.mxu0 %v2843
    %3513 = vmatprep.subr.bf16.mxu0 %v2848
    %3514 = vmatpush1.bf16.msra.mxu0 %v2847
    %3515 = vmatprep.subr.bf16.mxu0 %v2852
    %3516 = vmatpush1.bf16.msra.mxu0 %v2851
    %3517 = vmatprep.subr.bf16.mxu0 %v2856
    %3518 = vmatpush1.bf16.msra.mxu0 %v2855
    %3519 = vmatprep.subr.bf16.mxu0 %v2860
    %3520 = vmatpush1.bf16.msra.mxu0 %v2859
    %3521 = vmatprep.subr.bf16.mxu0 %v2864
    %3522 = vmatpush1.bf16.msra.mxu0 %v2863
    %3523 = vmatprep.subr.bf16.mxu0 %v2868
    %3524 = vmatpush1.bf16.msra.mxu0 %v2867
    %3525 = vmatprep.subr.bf16.mxu0 %v2872
    %3526 = vmatpush1.bf16.msra.mxu0 %v2871
    %3527 = vmatprep.subr.bf16.mxu0 %v2876
    %3528 = vmatpush1.bf16.msra.mxu0 %v2875
    %3529 = vmatprep.subr.bf16.mxu0 %v2880
    %3530 = vmatpush1.bf16.msra.mxu0 %v2879
    %3531 = vmatprep.subr.bf16.mxu0 %v2884
    %3532 = vmatpush1.bf16.msra.mxu0 %v2883
    %3533 = vmatprep.subr.bf16.mxu0 %v2888
    %3534 = vmatpush1.bf16.msra.mxu0 %v2887
    %3535 = vmatprep.subr.bf16.mxu0 %v2892
    %3536 = vmatpush1.bf16.msra.mxu0 %v2891
    %3537 = vmatprep.mubr.bf16.mxu0 %v1776
    %3538 = vmatmul.mubr.bf16.gmra.mrb[0].mxu0 %v1775
    %v3539 = vpop.f32.mrb[0].mxu0
    %v3540 = vadd.f32 %v2052, %v3539
    %v3541 = vpop.f32.mrb[0].mxu0
    %v3542 = vadd.f32 %v2056, %v3541
    %v3543 = vpop.f32.mrb[0].mxu0
    %v3544 = vpop.f32.mrb[0].mxu0
    %3545 = vdwg.mxu0
    %3546 = vmatprep.subr.bf16.mxu0 %v2896
    %3547 = vmatpush1.bf16.msra.mxu0 %v2895
    %3548 = vmatprep.subr.bf16.mxu0 %v2900
    %3549 = vmatpush1.bf16.msra.mxu0 %v2899
    %3550 = vmatprep.subr.bf16.mxu0 %v2904
    %3551 = vmatpush1.bf16.msra.mxu0 %v2903
    %3552 = vmatprep.subr.bf16.mxu0 %v2908
    %3553 = vmatpush1.bf16.msra.mxu0 %v2907
    %3554 = vmatprep.subr.bf16.mxu0 %v2912
    %3555 = vmatpush1.bf16.msra.mxu0 %v2911
    %3556 = vmatprep.subr.bf16.mxu0 %v2916
    %3557 = vmatpush1.bf16.msra.mxu0 %v2915
    %3558 = vmatprep.subr.bf16.mxu0 %v2920
    %3559 = vmatpush1.bf16.msra.mxu0 %v2919
    %3560 = vmatprep.subr.bf16.mxu0 %v2924
    %3561 = vmatpush1.bf16.msra.mxu0 %v2923
    %3562 = vmatprep.subr.bf16.mxu0 %v2928
    %3563 = vmatpush1.bf16.msra.mxu0 %v2927
    %3564 = vmatprep.subr.bf16.mxu0 %v2932
    %3565 = vmatpush1.bf16.msra.mxu0 %v2931
    %3566 = vmatprep.subr.bf16.mxu0 %v2936
    %3567 = vmatpush1.bf16.msra.mxu0 %v2935
    %3568 = vmatprep.subr.bf16.mxu0 %v2940
    %3569 = vmatpush1.bf16.msra.mxu0 %v2939
    %3570 = vmatprep.subr.bf16.mxu0 %v2944
    %3571 = vmatpush1.bf16.msra.mxu0 %v2943
    %3572 = vmatprep.subr.bf16.mxu0 %v2948
    %3573 = vmatpush1.bf16.msra.mxu0 %v2947
    %3574 = vmatprep.subr.bf16.mxu0 %v2952
    %3575 = vmatpush1.bf16.msra.mxu0 %v2951
    %3576 = vmatprep.subr.bf16.mxu0 %v2956
    %3577 = vmatpush1.bf16.msra.mxu0 %v2955
    %3578 = vmatprep.mubr.bf16.mxu0 %v1778
    %3579 = vmatmul.mubr.bf16.gmra.mrb[0].mxu0 %v1777
    %v3580 = vpop.f32.mrb[0].mxu0
    %v3581 = vadd.f32 %v3540, %v3580
    %v3582 = vpop.f32.mrb[0].mxu0
    %v3583 = vadd.f32 %v3542, %v3582
    %v3584 = vpop.f32.mrb[0].mxu0
    %v3585 = vpop.f32.mrb[0].mxu0
    %3586 = vdwg.mxu0
    %3587 = vmatprep.subr.bf16.mxu0 %v2960
    %3588 = vmatpush1.bf16.msra.mxu0 %v2959
    %3589 = vmatprep.subr.bf16.mxu0 %v2964
    %3590 = vmatpush1.bf16.msra.mxu0 %v2963
    %3591 = vmatprep.subr.bf16.mxu0 %v2968
    %3592 = vmatpush1.bf16.msra.mxu0 %v2967
    %3593 = vmatprep.subr.bf16.mxu0 %v2972
    %3594 = vmatpush1.bf16.msra.mxu0 %v2971
    %3595 = vmatprep.subr.bf16.mxu0 %v2976
    %3596 = vmatpush1.bf16.msra.mxu0 %v2975
    %3597 = vmatprep.subr.bf16.mxu0 %v2980
    %3598 = vmatpush1.bf16.msra.mxu0 %v2979
    %3599 = vmatprep.subr.bf16.mxu0 %v2984
    %3600 = vmatpush1.bf16.msra.mxu0 %v2983
    %3601 = vmatprep.subr.bf16.mxu0 %v2988
    %3602 = vmatpush1.bf16.msra.mxu0 %v2987
    %3603 = vmatprep.subr.bf16.mxu0 %v2992
    %3604 = vmatpush1.bf16.msra.mxu0 %v2991
    %3605 = vmatprep.subr.bf16.mxu0 %v2996
    %3606 = vmatpush1.bf16.msra.mxu0 %v2995
    %3607 = vmatprep.subr.bf16.mxu0 %v3000
    %3608 = vmatpush1.bf16.msra.mxu0 %v2999
    %3609 = vmatprep.subr.bf16.mxu0 %v3004
    %3610 = vmatpush1.bf16.msra.mxu0 %v3003
    %3611 = vmatprep.subr.bf16.mxu0 %v3008
    %3612 = vmatpush1.bf16.msra.mxu0 %v3007
    %3613 = vmatprep.subr.bf16.mxu0 %v3012
    %3614 = vmatpush1.bf16.msra.mxu0 %v3011
    %3615 = vmatprep.subr.bf16.mxu0 %v3016
    %3616 = vmatpush1.bf16.msra.mxu0 %v3015
    %3617 = vmatprep.subr.bf16.mxu0 %v3020
    %3618 = vmatpush1.bf16.msra.mxu0 %v3019
    %3619 = vmatprep.mubr.bf16.mxu0 %v1780
    %3620 = vmatmul.mubr.bf16.gmra.mrb[0].mxu0 %v1779
    %v3621 = vpop.f32.mrb[0].mxu0
    %v3622 = vadd.f32 %v3581, %v3621
    %v3623 = vpop.f32.mrb[0].mxu0
    %v3624 = vadd.f32 %v3583, %v3623
    %v3625 = vpop.f32.mrb[0].mxu0
    %v3626 = vpop.f32.mrb[0].mxu0
    %3627 = vdwg.mxu0
    %3628 = vmatprep.subr.bf16.mxu0 %v3024
    %3629 = vmatpush1.bf16.msra.mxu0 %v3023
    %3630 = vmatprep.subr.bf16.mxu0 %v3028
    %3631 = vmatpush1.bf16.msra.mxu0 %v3027
    %3632 = vmatprep.subr.bf16.mxu0 %v3032
    %3633 = vmatpush1.bf16.msra.mxu0 %v3031
    %3634 = vmatprep.subr.bf16.mxu0 %v3036
    %3635 = vmatpush1.bf16.msra.mxu0 %v3035
    %3636 = vmatprep.subr.bf16.mxu0 %v3040
    %3637 = vmatpush1.bf16.msra.mxu0 %v3039
    %3638 = vmatprep.subr.bf16.mxu0 %v3044
    %3639 = vmatpush1.bf16.msra.mxu0 %v3043
    %3640 = vmatprep.subr.bf16.mxu0 %v3048
    %3641 = vmatpush1.bf16.msra.mxu0 %v3047
    %3642 = vmatprep.subr.bf16.mxu0 %v3052
    %3643 = vmatpush1.bf16.msra.mxu0 %v3051
    %3644 = vmatprep.subr.bf16.mxu0 %v3056
    %3645 = vmatpush1.bf16.msra.mxu0 %v3055
    %3646 = vmatprep.subr.bf16.mxu0 %v3060
    %3647 = vmatpush1.bf16.msra.mxu0 %v3059
    %3648 = vmatprep.subr.bf16.mxu0 %v3064
    %3649 = vmatpush1.bf16.msra.mxu0 %v3063
    %3650 = vmatprep.subr.bf16.mxu0 %v3068
    %3651 = vmatpush1.bf16.msra.mxu0 %v3067
    %3652 = vmatprep.subr.bf16.mxu0 %v3072
    %3653 = vmatpush1.bf16.msra.mxu0 %v3071
    %3654 = vmatprep.subr.bf16.mxu0 %v3076
    %3655 = vmatpush1.bf16.msra.mxu0 %v3075
    %3656 = vmatprep.subr.bf16.mxu0 %v3080
    %3657 = vmatpush1.bf16.msra.mxu0 %v3079
    %3658 = vmatprep.subr.bf16.mxu0 %v3084
    %3659 = vmatpush1.bf16.msra.mxu0 %v3083
    %3660 = vmatprep.mubr.bf16.mxu0 %v1782
    %3661 = vmatmul.mubr.bf16.gmra.mrb[0].mxu0 %v1781
    %v3662 = vpop.f32.mrb[0].mxu0
    %v3663 = vadd.f32 %v3622, %v3662
    %v3664 = vpop.f32.mrb[0].mxu0
    %v3665 = vadd.f32 %v3624, %v3664
    %v3666 = vpop.f32.mrb[0].mxu0
    %v3667 = vpop.f32.mrb[0].mxu0
    %3668 = vdwg.mxu0
    %v3669 = vmax.f32 %v3499, 0.0
    %v3670 = vmax.f32 %v3501, 0.0
    %v3671 = vmax.f32 %v3663, 0.0
    %v3672 = vmax.f32 %v3665, 0.0
    %v3673 = vpack.c.bf16 %v3669, %v3669
    %v3674 = vpack.c.bf16 %v3670, %v3670
    %v3675 = vpack.c.bf16 %v3671, %v3671
    %v3676 = vpack.c.bf16 %v3672, %v3672
    %v3677 = vld [vmem:[#allocation4] sm:$0xf]
    %v3678 = vld [vmem:[#allocation4 + $0x4] sm:$0xf]
    %v3679 = vld [vmem:[#allocation4 + $0x8] sm:$0xf]
    %v3680 = vld [vmem:[#allocation4 + $0xc] sm:$0xf]
    %v3681 = vld [vmem:[#allocation4 + $0x10] sm:$0xf]
    %v3682 = vld [vmem:[#allocation4 + $0x14] sm:$0xf]
    %v3683 = vld [vmem:[#allocation4 + $0x18] sm:$0xf]
    %v3684 = vld [vmem:[#allocation4 + $0x1c] sm:$0xf]
    %v3685 = vld [vmem:[#allocation4 + $0x20] sm:$0xf]
    %v3686 = vld [vmem:[#allocation4 + $0x24] sm:$0xf]
    %v3687 = vld [vmem:[#allocation4 + $0x28] sm:$0xf]
    %v3688 = vld [vmem:[#allocation4 + $0x2c] sm:$0xf]
    %v3689 = vld [vmem:[#allocation4 + $0x30] sm:$0xf]
    %v3690 = vld [vmem:[#allocation4 + $0x34] sm:$0xf]
    %v3691 = vld [vmem:[#allocation4 + $0x38] sm:$0xf]
    %v3692 = vld [vmem:[#allocation4 + $0x3c] sm:$0xf]
    %v3693 = vld [vmem:[#allocation4 + $0x40] sm:$0xf]
    %v3694 = vld [vmem:[#allocation4 + $0x44] sm:$0xf]
    %v3695 = vld [vmem:[#allocation4 + $0x48] sm:$0xf]
    %v3696 = vld [vmem:[#allocation4 + $0x4c] sm:$0xf]
    %v3697 = vld [vmem:[#allocation4 + $0x50] sm:$0xf]
    %v3698 = vld [vmem:[#allocation4 + $0x54] sm:$0xf]
    %v3699 = vld [vmem:[#allocation4 + $0x58] sm:$0xf]
    %v3700 = vld [vmem:[#allocation4 + $0x5c] sm:$0xf]
    %v3701 = vld [vmem:[#allocation4 + $0x60] sm:$0xf]
    %v3702 = vld [vmem:[#allocation4 + $0x64] sm:$0xf]
    %v3703 = vld [vmem:[#allocation4 + $0x68] sm:$0xf]
    %v3704 = vld [vmem:[#allocation4 + $0x6c] sm:$0xf]
    %v3705 = vld [vmem:[#allocation4 + $0x70] sm:$0xf]
    %v3706 = vld [vmem:[#allocation4 + $0x74] sm:$0xf]
    %v3707 = vld [vmem:[#allocation4 + $0x78] sm:$0xf]
    %v3708 = vld [vmem:[#allocation4 + $0x7c] sm:$0xf]
    %v3709 = vld [vmem:[#allocation4 + $0x80] sm:$0xf]
    %v3710 = vld [vmem:[#allocation4 + $0x84] sm:$0xf]
    %v3711 = vld [vmem:[#allocation4 + $0x88] sm:$0xf]
    %v3712 = vld [vmem:[#allocation4 + $0x8c] sm:$0xf]
    %v3713 = vld [vmem:[#allocation4 + $0x90] sm:$0xf]
    %v3714 = vld [vmem:[#allocation4 + $0x94] sm:$0xf]
    %v3715 = vld [vmem:[#allocation4 + $0x98] sm:$0xf]
    %v3716 = vld [vmem:[#allocation4 + $0x9c] sm:$0xf]
    %v3717 = vld [vmem:[#allocation4 + $0xa0] sm:$0xf]
    %v3718 = vld [vmem:[#allocation4 + $0xa4] sm:$0xf]
    %v3719 = vld [vmem:[#allocation4 + $0xa8] sm:$0xf]
    %v3720 = vld [vmem:[#allocation4 + $0xac] sm:$0xf]
    %v3721 = vld [vmem:[#allocation4 + $0xb0] sm:$0xf]
    %v3722 = vld [vmem:[#allocation4 + $0xb4] sm:$0xf]
    %v3723 = vld [vmem:[#allocation4 + $0xb8] sm:$0xf]
    %v3724 = vld [vmem:[#allocation4 + $0xbc] sm:$0xf]
    %v3725 = vld [vmem:[#allocation4 + $0xc0] sm:$0xf]
    %v3726 = vld [vmem:[#allocation4 + $0xc4] sm:$0xf]
    %v3727 = vld [vmem:[#allocation4 + $0xc8] sm:$0xf]
    %v3728 = vld [vmem:[#allocation4 + $0xcc] sm:$0xf]
    %v3729 = vld [vmem:[#allocation4 + $0xd0] sm:$0xf]
    %v3730 = vld [vmem:[#allocation4 + $0xd4] sm:$0xf]
    %v3731 = vld [vmem:[#allocation4 + $0xd8] sm:$0xf]
    %v3732 = vld [vmem:[#allocation4 + $0xdc] sm:$0xf]
    %v3733 = vld [vmem:[#allocation4 + $0xe0] sm:$0xf]
    %v3734 = vld [vmem:[#allocation4 + $0xe4] sm:$0xf]
    %v3735 = vld [vmem:[#allocation4 + $0xe8] sm:$0xf]
    %v3736 = vld [vmem:[#allocation4 + $0xec] sm:$0xf]
    %v3737 = vld [vmem:[#allocation4 + $0xf0] sm:$0xf]
    %v3738 = vld [vmem:[#allocation4 + $0xf4] sm:$0xf]
    %v3739 = vld [vmem:[#allocation4 + $0xf8] sm:$0xf]
    %v3740 = vld [vmem:[#allocation4 + $0xfc] sm:$0xf]
    %v3741 = vld [vmem:[%s7] sm:$0x1]
    %v3743 = vlaneseq
    %v3744 = vshrl.u32 %v3743, 7
    %v3745 = vsub.s32 0, %v3744
    %v3746 = vrot.slane %v3741, %v3745
    %v3812 = vunpack.c.l.b16 %v3677
    %v3813 = vunpack.c.l.b16 %v3678
    %v3814 = vunpack.c.l.b16 %v3679
    %v3815 = vunpack.c.l.b16 %v3680
    %v3816 = vunpack.c.l.b16 %v3681
    %v3817 = vunpack.c.l.b16 %v3682
    %v3818 = vunpack.c.l.b16 %v3683
    %v3819 = vunpack.c.l.b16 %v3684
    %v3820 = vunpack.c.l.b16 %v3685
    %v3821 = vunpack.c.l.b16 %v3686
    %v3822 = vunpack.c.l.b16 %v3687
    %v3823 = vunpack.c.l.b16 %v3688
    %v3824 = vunpack.c.l.b16 %v3689
    %v3825 = vunpack.c.l.b16 %v3690
    %v3826 = vunpack.c.l.b16 %v3691
    %v3827 = vunpack.c.l.b16 %v3692
    %v3828 = vunpack.c.l.b16 %v3693
    %v3829 = vunpack.c.l.b16 %v3694
    %v3830 = vunpack.c.l.b16 %v3695
    %v3831 = vunpack.c.l.b16 %v3696
    %v3832 = vunpack.c.l.b16 %v3697
    %v3833 = vunpack.c.l.b16 %v3698
    %v3834 = vunpack.c.l.b16 %v3699
    %v3835 = vunpack.c.l.b16 %v3700
    %v3836 = vunpack.c.l.b16 %v3701
    %v3837 = vunpack.c.l.b16 %v3702
    %v3838 = vunpack.c.l.b16 %v3703
    %v3839 = vunpack.c.l.b16 %v3704
    %v3840 = vunpack.c.l.b16 %v3705
    %v3841 = vunpack.c.l.b16 %v3706
    %v3842 = vunpack.c.l.b16 %v3707
    %v3843 = vunpack.c.l.b16 %v3708
    %v3844 = vunpack.c.l.b16 %v3709
    %v3845 = vunpack.c.l.b16 %v3710
    %v3846 = vunpack.c.l.b16 %v3711
    %v3847 = vunpack.c.l.b16 %v3712
    %v3848 = vunpack.c.l.b16 %v3713
    %v3849 = vunpack.c.l.b16 %v3714
    %v3850 = vunpack.c.l.b16 %v3715
    %v3851 = vunpack.c.l.b16 %v3716
    %v3852 = vunpack.c.l.b16 %v3717
    %v3853 = vunpack.c.l.b16 %v3718
    %v3854 = vunpack.c.l.b16 %v3719
    %v3855 = vunpack.c.l.b16 %v3720
    %v3856 = vunpack.c.l.b16 %v3721
    %v3857 = vunpack.c.l.b16 %v3722
    %v3858 = vunpack.c.l.b16 %v3723
    %v3859 = vunpack.c.l.b16 %v3724
    %v3860 = vunpack.c.l.b16 %v3725
    %v3861 = vunpack.c.l.b16 %v3726
    %v3862 = vunpack.c.l.b16 %v3727
    %v3863 = vunpack.c.l.b16 %v3728
    %v3864 = vunpack.c.l.b16 %v3729
    %v3865 = vunpack.c.l.b16 %v3730
    %v3866 = vunpack.c.l.b16 %v3731
    %v3867 = vunpack.c.l.b16 %v3732
    %v3868 = vunpack.c.l.b16 %v3733
    %v3869 = vunpack.c.l.b16 %v3734
    %v3870 = vunpack.c.l.b16 %v3735
    %v3871 = vunpack.c.l.b16 %v3736
    %v3872 = vunpack.c.l.b16 %v3737
    %v3873 = vunpack.c.l.b16 %v3738
    %v3874 = vunpack.c.l.b16 %v3739
    %v3875 = vunpack.c.l.b16 %v3740
    %v3876 = vpack.c.b16 %v3813, %v3812
    %v3877 = vpack.c.b16 %v3815, %v3814
    %v3878 = vpack.c.b16 %v3817, %v3816
    %v3879 = vpack.c.b16 %v3819, %v3818
    %v3880 = vpack.c.b16 %v3821, %v3820
    %v3881 = vpack.c.b16 %v3823, %v3822
    %v3882 = vpack.c.b16 %v3825, %v3824
    %v3883 = vpack.c.b16 %v3827, %v3826
    %v3884 = vpack.c.b16 %v3829, %v3828
    %v3885 = vpack.c.b16 %v3831, %v3830
    %v3886 = vpack.c.b16 %v3833, %v3832
    %v3887 = vpack.c.b16 %v3835, %v3834
    %v3888 = vpack.c.b16 %v3837, %v3836
    %v3889 = vpack.c.b16 %v3839, %v3838
    %v3890 = vpack.c.b16 %v3841, %v3840
    %v3891 = vpack.c.b16 %v3843, %v3842
    %v3892 = vpack.c.b16 %v3845, %v3844
    %v3893 = vpack.c.b16 %v3847, %v3846
    %v3894 = vpack.c.b16 %v3849, %v3848
    %v3895 = vpack.c.b16 %v3851, %v3850
    %v3896 = vpack.c.b16 %v3853, %v3852
    %v3897 = vpack.c.b16 %v3855, %v3854
    %v3898 = vpack.c.b16 %v3857, %v3856
    %v3899 = vpack.c.b16 %v3859, %v3858
    %v3900 = vpack.c.b16 %v3861, %v3860
    %v3901 = vpack.c.b16 %v3863, %v3862
    %v3902 = vpack.c.b16 %v3865, %v3864
    %v3903 = vpack.c.b16 %v3867, %v3866
    %v3904 = vpack.c.b16 %v3869, %v3868
    %v3905 = vpack.c.b16 %v3871, %v3870
    %v3906 = vpack.c.b16 %v3873, %v3872
    %v3907 = vpack.c.b16 %v3875, %v3874
    %3940 = vmatprep.subr.bf16.mxu0 0
    %3941 = vmatpush1.bf16.msra.mxu0 %v3876
    %3942 = vmatprep.subr.bf16.mxu0 0
    %3943 = vmatpush1.bf16.msra.mxu0 %v3877
    %3944 = vmatprep.subr.bf16.mxu0 0
    %3945 = vmatpush1.bf16.msra.mxu0 %v3878
    %3946 = vmatprep.subr.bf16.mxu0 0
    %3947 = vmatpush1.bf16.msra.mxu0 %v3879
    %3948 = vmatprep.subr.bf16.mxu0 0
    %3949 = vmatpush1.bf16.msra.mxu0 %v3880
    %3950 = vmatprep.subr.bf16.mxu0 0
    %3951 = vmatpush1.bf16.msra.mxu0 %v3881
    %3952 = vmatprep.subr.bf16.mxu0 0
    %3953 = vmatpush1.bf16.msra.mxu0 %v3882
    %3954 = vmatprep.subr.bf16.mxu0 0
    %3955 = vmatpush1.bf16.msra.mxu0 %v3883
    %3956 = vmatprep.subr.bf16.mxu0 0
    %3957 = vmatpush1.bf16.msra.mxu0 %v3884
    %3958 = vmatprep.subr.bf16.mxu0 0
    %3959 = vmatpush1.bf16.msra.mxu0 %v3885
    %3960 = vmatprep.subr.bf16.mxu0 0
    %3961 = vmatpush1.bf16.msra.mxu0 %v3886
    %3962 = vmatprep.subr.bf16.mxu0 0
    %3963 = vmatpush1.bf16.msra.mxu0 %v3887
    %3964 = vmatprep.subr.bf16.mxu0 0
    %3965 = vmatpush1.bf16.msra.mxu0 %v3888
    %3966 = vmatprep.subr.bf16.mxu0 0
    %3967 = vmatpush1.bf16.msra.mxu0 %v3889
    %3968 = vmatprep.subr.bf16.mxu0 0
    %3969 = vmatpush1.bf16.msra.mxu0 %v3890
    %3970 = vmatprep.subr.bf16.mxu0 0
    %3971 = vmatpush1.bf16.msra.mxu0 %v3891
    %3972 = vmatprep.mubr.bf16.mxu0 %v3674
    %3973 = vmatmul.mubr.bf16.gmra.mrb[0].mxu0 %v3673
    %v3974 = vpop.f32.mrb[0].mxu0
    %v3975 = vadd.f32 %v3746, %v3974
    %v3976 = vpop.f32.mrb[0].mxu0
    %v3977 = vpop.f32.mrb[0].mxu0
    %v3978 = vpop.f32.mrb[0].mxu0
    %3979 = vdwg.mxu0
    %3980 = vmatprep.subr.bf16.mxu0 0
    %3981 = vmatpush1.bf16.msra.mxu0 %v3892
    %3982 = vmatprep.subr.bf16.mxu0 0
    %3983 = vmatpush1.bf16.msra.mxu0 %v3893
    %3984 = vmatprep.subr.bf16.mxu0 0
    %3985 = vmatpush1.bf16.msra.mxu0 %v3894
    %3986 = vmatprep.subr.bf16.mxu0 0
    %3987 = vmatpush1.bf16.msra.mxu0 %v3895
    %3988 = vmatprep.subr.bf16.mxu0 0
    %3989 = vmatpush1.bf16.msra.mxu0 %v3896
    %3990 = vmatprep.subr.bf16.mxu0 0
    %3991 = vmatpush1.bf16.msra.mxu0 %v3897
    %3992 = vmatprep.subr.bf16.mxu0 0
    %3993 = vmatpush1.bf16.msra.mxu0 %v3898
    %3994 = vmatprep.subr.bf16.mxu0 0
    %3995 = vmatpush1.bf16.msra.mxu0 %v3899
    %3996 = vmatprep.subr.bf16.mxu0 0
    %3997 = vmatpush1.bf16.msra.mxu0 %v3900
    %3998 = vmatprep.subr.bf16.mxu0 0
    %3999 = vmatpush1.bf16.msra.mxu0 %v3901
    %4000 = vmatprep.subr.bf16.mxu0 0
    %4001 = vmatpush1.bf16.msra.mxu0 %v3902
    %4002 = vmatprep.subr.bf16.mxu0 0
    %4003 = vmatpush1.bf16.msra.mxu0 %v3903
    %4004 = vmatprep.subr.bf16.mxu0 0
    %4005 = vmatpush1.bf16.msra.mxu0 %v3904
    %4006 = vmatprep.subr.bf16.mxu0 0
    %4007 = vmatpush1.bf16.msra.mxu0 %v3905
    %4008 = vmatprep.subr.bf16.mxu0 0
    %4009 = vmatpush1.bf16.msra.mxu0 %v3906
    %4010 = vmatprep.subr.bf16.mxu0 0
    %4011 = vmatpush1.bf16.msra.mxu0 %v3907
    %4012 = vmatprep.mubr.bf16.mxu0 %v3676
    %4013 = vmatmul.mubr.bf16.gmra.mrb[0].mxu0 %v3675
    %v4014 = vpop.f32.mrb[0].mxu0
    %v4015 = vadd.f32 %v3975, %v4014
    %v4016 = vpop.f32.mrb[0].mxu0
    %v4017 = vpop.f32.mrb[0].mxu0
    %v4018 = vpop.f32.mrb[0].mxu0
    %4019 = vdwg.mxu0
    %4020 = vst [vmem:[%s8] sm:$0xff] %v4015
    // Predicated region
    $region42: #{model_forward.1} parent=1 // pred_check
      _
    $region43: #{model_forward.1} parent=1 // pred_check_branch
      %4022 = sbr.rel (0) target = $region45
    $region44: #{model_forward.1} parent=1 // pred_region
      _
    $region45: #{model_forward.1} parent=1 // pred_fallthru
      _
    // Predicated region
    $region46: #{model_forward.1} parent=1 // pred_check
      _
    $region47: #{model_forward.1} parent=1 // pred_check_branch
      %4024 = sbr.rel (0) target = $region49
    $region48: #{model_forward.1} parent=1 // pred_region
      _
    $region49: #{model_forward.1} parent=1 // pred_fallthru
      _
    %4025 = vsyncpa [#allocation3], 1
    %4026 = vsyncpa [#allocation5], 1

</llo_original>
